<compile_context>
chip_gen: v7x
topology: tpu7x:2x2x1
jax: 0.10.0
libtpu: 0.0.40
codegen_flags: <defaults>
</compile_context>

<pallas_src>
import jax
import jax.numpy as jnp
import numpy as np
from jax.experimental import pallas as pl
from jax.experimental.pallas import tpu as pltpu


# ----------------------------------------------------------------------------
# Pallas kernel: folded MEAttention forward for one (Bblk, N, C) batch block.
# ----------------------------------------------------------------------------
def mea_kernel(x_ref,      # (Bblk, N, C)  f32 activations
               wpre_ref,   # (C, H*k)      bf16  folded trans_dims -> linear_0
               m_ref,      # (H*k, H)      f32   within-head summation (0/1)
               mt_ref,     # (H, H*k)      f32   broadcast-back (0/1)
               wpost_ref,  # (H*k, C)      bf16  folded linear_1 -> proj
               bpost_ref,  # (1, C)        f32
               o_ref):     # (Bblk, N, C)  f32
    bblk, n_tok, c = x_ref.shape
    hk = wpre_ref.shape[1]
    rows = bblk * n_tok

    # (Bblk, N, C) -> (Bblk*N, C): leading-dim merge, relayout-free (N % 8 == 0).
    x = x_ref[...].reshape(rows, c).astype(jnp.bfloat16)

    # Pre-softmax logits: folded (trans_dims -> per-head linear_0), f32 accumulate.
    # b_pre intentionally omitted: it is constant along the softmax (token) axis,
    # so it cancels exactly in the softmax below.
    logits = jnp.dot(x, wpre_ref[...], preferred_element_type=jnp.float32)

    # Softmax over the token axis N, per batch element and per (head, k) column.
    l3 = logits.reshape(bblk, n_tok, hk)
    l3 = l3 - jnp.max(l3, axis=1, keepdims=True)
    e = jnp.exp(l3)                                                          # EUP
    inv_col = pl.reciprocal(jnp.sum(e, axis=1, keepdims=True), approx=True)  # EUP
    p = (e * inv_col).reshape(rows, hk)            # softmax probabilities, f32

    # attn = p / (1e-9 + sum_k p) within each head.  Kept fully in f32: the 0/1
    # m / mt matrices are exact, and HIGHEST precision avoids rounding p / inv_hs
    # to bf16 on the MXU (cost is negligible at (rows,512)x(512,32)).
    head_sum = jnp.dot(p, m_ref[...],
                       preferred_element_type=jnp.float32,
                       precision=jax.lax.Precision.HIGHEST)          # (rows, H)
    inv_hs = pl.reciprocal(head_sum + 1e-9, approx=True)             # (rows, H)
    inv_den = jnp.dot(inv_hs, mt_ref[...],
                      preferred_element_type=jnp.float32,
                      precision=jax.lax.Precision.HIGHEST)           # (rows, H*k)
    attn = p * inv_den

    # Folded (per-head linear_1 -> proj): (rows, H*k) @ (H*k, C) + b_post.
    out = jnp.dot(attn.astype(jnp.bfloat16), wpost_ref[...],
                  preferred_element_type=jnp.float32) + bpost_ref[...]

    # Note: C (=32) < 128 lanes -> masked stores; at ~4 KB of output per step a
    # lane-dense relayout would cost more than it saves, so keep the natural layout.
    o_ref[...] = out.reshape(bblk, n_tok, c).astype(o_ref.dtype)


# ----------------------------------------------------------------------------
# Host wrapper
# ----------------------------------------------------------------------------
def _pick_batch_block(batch, n_tok, hk, c,
                      target_rows=512, vmem_budget_bytes=12 << 20):
    """Largest divisor of `batch` with bblk*N <= target_rows and a rough per-step
    VMEM footprint under budget.  No forced multi-step grid: small problems run as
    a single grid step (per-step overhead ~0.35 us dominates at tiny sizes); large
    batches split into >=256-row steps, which is also when a v7x megacore split
    starts to pay off."""
    def step_bytes(bblk):
        rows = bblk * n_tok
        # x + out blocks (double buffered) + ~5 live (rows, H*k) f32 intermediates.
        return 2 * 2 * rows * c * 4 + 5 * rows * hk * 4

    cands = [d for d in range(1, batch + 1)
             if batch % d == 0 and d * n_tok <= target_rows
             and step_bytes(d) <= vmem_budget_bytes]
    # If N alone exceeds the caps we fall back to bblk=1 (one batch element/step).
    return max(cands) if cands else 1


def long_td_learn_block(x, params, *, batch_block=None):
    """x: (B, N, C) float32. params: kernel-ready dict from make_params()."""
    B, N, C = x.shape
    hk = params["w_pre"].shape[1]
    bblk = (_pick_batch_block(B, N, hk, C) if batch_block is None else batch_block)
    assert B % bblk == 0, (B, bblk)

    weights = [params[k] for k in ("w_pre", "m", "mt", "w_post", "b_post")]

    def const_spec(w):
        # Grid-invariant 2-D weights.  (Default double-buffering is moot at the
        # shipped shapes since the grid is a single step.)
        return pl.BlockSpec(w.shape, lambda g: (0, 0))

    return pl.pallas_call(
        mea_kernel,
        out_shape=jax.ShapeDtypeStruct((B, N, C), x.dtype),
        grid_spec=pltpu.PrefetchScalarGridSpec(
            num_scalar_prefetch=0,
            grid=(B // bblk,),
            in_specs=[pl.BlockSpec((bblk, N, C), lambda g: (g, 0, 0))]
                     + [const_spec(w) for w in weights],
            out_specs=pl.BlockSpec((bblk, N, C), lambda g: (g, 0, 0)),
        ),
        compiler_params=pltpu.CompilerParams(
            dimension_semantics=("parallel",)),
    )(x, *weights)


# ----------------------------------------------------------------------------
# Deterministic parameter construction (matches MEAttention.__init__ shapes),
# plus exact host-side folding into kernel-ready matrices.
# ----------------------------------------------------------------------------
def make_params(key, dim, s):
    coef = 4
    num_heads = 8 * coef                   # 32
    head_dim = dim * coef // num_heads     # dim // 8
    k = s // coef

    ks = jax.random.split(key, 4)
    std = 0.02
    # raw PyTorch-shaped weights (out_features, in_features); biases init to 0
    Wt = jax.random.normal(ks[0], (dim * coef, dim), jnp.float32) * std   # trans_dims
    bt = jnp.zeros((dim * coef,), jnp.float32)
    W0 = jax.random.normal(ks[1], (k, head_dim), jnp.float32) * std       # linear_0
    b0 = jnp.zeros((k,), jnp.float32)
    W1 = jax.random.normal(ks[2], (head_dim, k), jnp.float32) * std       # linear_1
    b1 = jnp.zeros((head_dim,), jnp.float32)
    Wp = jax.random.normal(ks[3], (dim, dim * coef), jnp.float32) * std   # proj
    bp = jnp.zeros((dim,), jnp.float32)

    raw = dict(Wt=Wt, bt=bt, W0=W0, b0=b0, W1=W1, b1=b1, Wp=Wp, bp=bp,
               H=num_heads, D=head_dim, k=k)

    # Block-diagonal per-head weights (head-major column ordering, D / k minor).
    eye_h = jnp.eye(num_heads, dtype=jnp.float32)
    w0_blk = jnp.kron(eye_h, W0.T)          # (4C, H*k)
    w1_blk = jnp.kron(eye_h, W1.T)          # (H*k, 4C)
    b1_full = jnp.tile(b1, num_heads)       # (4C,)

    # Exact folds of the two nonlinearity-free linear chains (done in f32 on host).
    # b_pre (= bt @ w0_blk + tile(b0)) is NOT materialized: it is constant along
    # the token axis and cancels exactly in the softmax.
    w_pre = Wt.T @ w0_blk                   # (C, H*k)
    w_post = w1_blk @ Wp.T                  # (H*k, C)
    b_post = b1_full @ Wp.T + bp            # (C,)

    m = jnp.kron(eye_h, jnp.ones((k, 1), jnp.float32))    # (H*k, H)
    mt = jnp.kron(eye_h, jnp.ones((1, k), jnp.float32))   # (H, H*k)

    params = dict(
        w_pre=w_pre.astype(jnp.bfloat16),   # bf16 MXU operands (big matmuls)
        m=m,                                # f32 (exact 0/1 selection)
        mt=mt,                              # f32
        w_post=w_post.astype(jnp.bfloat16),
        b_post=b_post[None, :],             # f32
    )
    return params, raw


# ----------------------------------------------------------------------------
# Pure-JAX reference (mirrors the PyTorch forward exactly, f32 throughout)
# ----------------------------------------------------------------------------
def reference_forward(x, raw):
    B, N, C = x.shape
    H, D, k = raw["H"], raw["D"], raw["k"]
    t = x @ raw["Wt"].T + raw["bt"]                          # (B, N, 4C)
    t = t.reshape(B, N, H, D).transpose(0, 2, 1, 3)          # (B, H, N, D)
    attn = t @ raw["W0"].T + raw["b0"]                       # (B, H, N, k)
    attn = jax.nn.softmax(attn, axis=-2)
    attn = attn / (1e-9 + attn.sum(axis=-1, keepdims=True))
    # attn_drop / proj_drop have p=0.0 -> identity
    y = attn @ raw["W1"].T + raw["b1"]                       # (B, H, N, D)
    y = y.transpose(0, 2, 1, 3).reshape(B, N, H * D)         # (B, N, 4C)
    out = y @ raw["Wp"].T + raw["bp"]                        # (B, N, C)
    return out


# ----------------------------------------------------------------------------
if __name__ == "__main__":
    B, N, dim, s = 4, 16, 32, 64   # dim must be divisible by 8; s by 4

    key = jax.random.PRNGKey(0)
    kx, kp = jax.random.split(key)
    x = jax.random.normal(kx, (B, N, dim), jnp.float32)

    params, raw = make_params(kp, dim, s)

    out = long_td_learn_block(x, params)
    out = jax.block_until_ready(out)

    ref = jax.block_until_ready(reference_forward(x, raw))

    assert out.shape == (B, N, dim), out.shape
    # Tolerance covers bf16 MXU operands on the two folded matmuls and the approx
    # EUP reciprocals; the per-head normalization path is now exact f32, allowing
    # rtol to tighten from 3e-2 to 1e-2.
    np.testing.assert_allclose(np.asarray(out), np.asarray(ref),
                               rtol=1e-2, atol=1e-4)
    print("KERNEL_OK")
</pallas_src>

<mosaic_0001>
module attributes {stable_mosaic.version = 11 : i64} {
  func.func @mea_kernel(%arg0: i32, %arg1: memref<4x16x32xf32, #tpu.memory_space<vmem>>, %arg2: memref<32x512xbf16, #tpu.memory_space<vmem>>, %arg3: memref<512x32xf32, #tpu.memory_space<vmem>>, %arg4: memref<32x512xf32, #tpu.memory_space<vmem>>, %arg5: memref<512x32xbf16, #tpu.memory_space<vmem>>, %arg6: memref<1x32xf32, #tpu.memory_space<vmem>>, %arg7: memref<4x16x32xf32, #tpu.memory_space<vmem>>) attributes {dimension_semantics = [#tpu.dimension_semantics<parallel>], iteration_bounds = array<i64: 1>, scalar_prefetch = 0 : i64, scratch_operands = 0 : i64, tpu.core_type = #tpu.core_type<tc>, window_params = [{transform_indices = @transform_0, window_bounds = array<i64: 4, 16, 32>}, {pipeline_mode = #tpu.pipeline_mode<synchronous>, transform_indices = @transform_1, window_bounds = array<i64: 32, 512>}, {pipeline_mode = #tpu.pipeline_mode<synchronous>, transform_indices = @transform_2, window_bounds = array<i64: 512, 32>}, {pipeline_mode = #tpu.pipeline_mode<synchronous>, transform_indices = @transform_3, window_bounds = array<i64: 32, 512>}, {pipeline_mode = #tpu.pipeline_mode<synchronous>, transform_indices = @transform_4, window_bounds = array<i64: 512, 32>}, {pipeline_mode = #tpu.pipeline_mode<synchronous>, transform_indices = @transform_5, window_bounds = array<i64: 1, 32>}, {transform_indices = @transform_6, window_bounds = array<i64: 4, 16, 32>}]} {
    %c0 = arith.constant 0 : index
    %c0_0 = arith.constant 0 : index
    %c0_1 = arith.constant 0 : index
    %0 = vector.load %arg1[%c0, %c0_0, %c0_1] : memref<4x16x32xf32, #tpu.memory_space<vmem>>, vector<4x16x32xf32>
    %1 = vector.shape_cast %0 : vector<4x16x32xf32> to vector<64x32xf32>
    %2 = arith.truncf %1 : vector<64x32xf32> to vector<64x32xbf16>
    %c0_2 = arith.constant 0 : index
    %c0_3 = arith.constant 0 : index
    %3 = vector.load %arg2[%c0_2, %c0_3] : memref<32x512xbf16, #tpu.memory_space<vmem>>, vector<32x512xbf16>
    %cst = arith.constant dense<0.000000e+00> : vector<64x512xf32>
    %4 = tpu.matmul %2, %3, %cst {dimension_numbers = #tpu.dot_dimension_numbers<[1], [0], [0], [1], [0, 0, 1, 1], [], []>} : vector<64x32xbf16>, vector<32x512xbf16>, vector<64x512xf32> -> vector<64x512xf32>
    %5 = vector.shape_cast %4 : vector<64x512xf32> to vector<4x16x512xf32>
    %cst_4 = arith.constant dense<0xFF800000> : vector<4x512xf32>
    %6 = vector.multi_reduction <maximumf>, %5, %cst_4 [1] : vector<4x16x512xf32> to vector<4x512xf32>
    %7 = vector.shape_cast %6 : vector<4x512xf32> to vector<4x1x512xf32>
    %8 = vector.broadcast %7 : vector<4x1x512xf32> to vector<4x16x512xf32>
    %9 = arith.subf %5, %8 : vector<4x16x512xf32>
    %10 = math.exp %9 : vector<4x16x512xf32>
    %cst_5 = arith.constant dense<0.000000e+00> : vector<4x512xf32>
    %11 = vector.multi_reduction <add>, %10, %cst_5 [1] : vector<4x16x512xf32> to vector<4x512xf32>
    %12 = vector.shape_cast %11 : vector<4x512xf32> to vector<4x1x512xf32>
    %13 = tpu.reciprocal %12 {approx = true} : vector<4x1x512xf32> -> vector<4x1x512xf32>
    %14 = vector.broadcast %13 : vector<4x1x512xf32> to vector<4x16x512xf32>
    %15 = arith.mulf %10, %14 : vector<4x16x512xf32>
    %16 = vector.shape_cast %15 : vector<4x16x512xf32> to vector<64x512xf32>
    %c0_6 = arith.constant 0 : index
    %c0_7 = arith.constant 0 : index
    %17 = vector.load %arg3[%c0_6, %c0_7] : memref<512x32xf32, #tpu.memory_space<vmem>>, vector<512x32xf32>
    %cst_8 = arith.constant dense<0.000000e+00> : vector<64x32xf32>
    %18 = tpu.matmul %16, %17, %cst_8 {dimension_numbers = #tpu.dot_dimension_numbers<[1], [0], [0], [1], [0, 0, 1, 1], [], []>, precision = #tpu.contract_precision<fp32>} : vector<64x512xf32>, vector<512x32xf32>, vector<64x32xf32> -> vector<64x32xf32>
    %cst_9 = arith.constant 9.99999971E-10 : f32
    %19 = vector.broadcast %cst_9 : f32 to vector<64x32xf32>
    %20 = arith.addf %18, %19 : vector<64x32xf32>
    %21 = tpu.reciprocal %20 {approx = true} : vector<64x32xf32> -> vector<64x32xf32>
    %c0_10 = arith.constant 0 : index
    %c0_11 = arith.constant 0 : index
    %22 = vector.load %arg4[%c0_10, %c0_11] : memref<32x512xf32, #tpu.memory_space<vmem>>, vector<32x512xf32>
    %cst_12 = arith.constant dense<0.000000e+00> : vector<64x512xf32>
    %23 = tpu.matmul %21, %22, %cst_12 {dimension_numbers = #tpu.dot_dimension_numbers<[1], [0], [0], [1], [0, 0, 1, 1], [], []>, precision = #tpu.contract_precision<fp32>} : vector<64x32xf32>, vector<32x512xf32>, vector<64x512xf32> -> vector<64x512xf32>
    %24 = arith.mulf %16, %23 : vector<64x512xf32>
    %25 = arith.truncf %24 : vector<64x512xf32> to vector<64x512xbf16>
    %c0_13 = arith.constant 0 : index
    %c0_14 = arith.constant 0 : index
    %26 = vector.load %arg5[%c0_13, %c0_14] : memref<512x32xbf16, #tpu.memory_space<vmem>>, vector<512x32xbf16>
    %cst_15 = arith.constant dense<0.000000e+00> : vector<64x32xf32>
    %27 = tpu.matmul %25, %26, %cst_15 {dimension_numbers = #tpu.dot_dimension_numbers<[1], [0], [0], [1], [0, 0, 1, 1], [], []>} : vector<64x512xbf16>, vector<512x32xbf16>, vector<64x32xf32> -> vector<64x32xf32>
    %c0_16 = arith.constant 0 : index
    %c0_17 = arith.constant 0 : index
    %28 = vector.load %arg6[%c0_16, %c0_17] : memref<1x32xf32, #tpu.memory_space<vmem>>, vector<1x32xf32>
    %29 = vector.broadcast %28 : vector<1x32xf32> to vector<64x32xf32>
    %30 = arith.addf %27, %29 : vector<64x32xf32>
    %31 = vector.shape_cast %30 : vector<64x32xf32> to vector<4x16x32xf32>
    %c0_18 = arith.constant 0 : index
    %c0_19 = arith.constant 0 : index
    %c0_20 = arith.constant 0 : index
    %32 = vector.load %arg7[%c0_18, %c0_19, %c0_20] : memref<4x16x32xf32, #tpu.memory_space<vmem>>, vector<4x16x32xf32>
    tpu.vector_store %arg7[%c0_18, %c0_19, %c0_20], %31 {strides = array<i32>} : memref<4x16x32xf32, #tpu.memory_space<vmem>>, vector<4x16x32xf32>,
    return
  }
  func.func @transform_0(%arg0: i32) -> (i32, i32, i32) {
    %c0_i32 = arith.constant 0 : i32
    %c0_i32_0 = arith.constant 0 : i32
    %c0_i32_1 = arith.constant 0 : i32
    return %arg0, %c0_i32, %c0_i32_0 : i32, i32, i32
  }
  func.func @transform_1(%arg0: i32) -> (i32, i32) {
    %c0_i32 = arith.constant 0 : i32
    %c0_i32_0 = arith.constant 0 : i32
    %c0_i32_1 = arith.constant 0 : i32
    return %c0_i32, %c0_i32_0 : i32, i32
  }
  func.func @transform_2(%arg0: i32) -> (i32, i32) {
    %c0_i32 = arith.constant 0 : i32
    %c0_i32_0 = arith.constant 0 : i32
    %c0_i32_1 = arith.constant 0 : i32
    return %c0_i32, %c0_i32_0 : i32, i32
  }
  func.func @transform_3(%arg0: i32) -> (i32, i32) {
    %c0_i32 = arith.constant 0 : i32
    %c0_i32_0 = arith.constant 0 : i32
    %c0_i32_1 = arith.constant 0 : i32
    return %c0_i32, %c0_i32_0 : i32, i32
  }
  func.func @transform_4(%arg0: i32) -> (i32, i32) {
    %c0_i32 = arith.constant 0 : i32
    %c0_i32_0 = arith.constant 0 : i32
    %c0_i32_1 = arith.constant 0 : i32
    return %c0_i32, %c0_i32_0 : i32, i32
  }
  func.func @transform_5(%arg0: i32) -> (i32, i32) {
    %c0_i32 = arith.constant 0 : i32
    %c0_i32_0 = arith.constant 0 : i32
    %c0_i32_1 = arith.constant 0 : i32
    return %c0_i32, %c0_i32_0 : i32, i32
  }
  func.func @transform_6(%arg0: i32) -> (i32, i32, i32) {
    %c0_i32 = arith.constant 0 : i32
    %c0_i32_0 = arith.constant 0 : i32
    %c0_i32_1 = arith.constant 0 : i32
    return %arg0, %c0_i32, %c0_i32_0 : i32, i32, i32
  }
}

</mosaic_0001>

<llo_original>
// kernel: tpu_custom_call.1
$region0: #{tpu_custom_call.1}
  #allocation0 [shape = 'u32[]', space=smem, size = 0x4, offset = 0x4, fixed_abs, tag = 'smem constant byte address 0x4 - core index']
  #allocation1 [shape = 'u32[144,128]{1,0:T(1,128)}', space=vmem, size = 0x12000, scoped, tag = 'internal scratch']
  %s0 = inlined_call_operand.vmem [shape: f32[4,16,32], index: 0, kind: input, shape index: {}]
  %s1 = inlined_call_operand.vmem [shape: bf16[32,512], index: 1, kind: input, shape index: {}]
  %s2 = inlined_call_operand.vmem [shape: f32[512,32], index: 2, kind: input, shape index: {}]
  %s3 = inlined_call_operand.vmem [shape: f32[32,512], index: 3, kind: input, shape index: {}]
  %s4 = inlined_call_operand.vmem [shape: bf16[512,32], index: 4, kind: input, shape index: {}]
  %s5 = inlined_call_operand.vmem [shape: f32[1,32], index: 5, kind: input, shape index: {}]
  %s6 = inlined_call_operand.hbm [shape: f32[4,16,32], index: 6, kind: output, shape index: {}]
  %s7 = sld [smem:[#allocation0]]
  $region34: #{tpu_custom_call.1} parent=0
    _
  %s9 = ssub.s32 1, %s7
  %s10 = scalar_select 0, %s9, %s7
  $region1: #{tpu_custom_call.1} parent=0
    #allocation2 [shape = 'u8[32768]{0}', space=vmem, size = 0x8000, scoped, tag = 'output window, operand 0, single buffered']
    #allocation3 [shape = 's32[1]{0}', space=sflag, size = 0x4, scoped, tag = 'scoped memory for tpu_custom_call.1']
    %11 = vsyncpa [#allocation3], 0
    // Predicated region
    $region2: #{tpu_custom_call.1} parent=1 // pred_check
      _
    $region3: #{tpu_custom_call.1} parent=1 // pred_check_branch
      %13 = sbr.rel (0) target = $region5
    $region4: #{tpu_custom_call.1} parent=1 // pred_region
      _
    $region5: #{tpu_custom_call.1} parent=1 // pred_fallthru
      _
    // Predicated region
    $region6: #{tpu_custom_call.1} parent=1 // pred_check
      _
    $region7: #{tpu_custom_call.1} parent=1 // pred_check_branch
      %15 = sbr.rel (0) target = $region9
    $region8: #{tpu_custom_call.1} parent=1 // pred_region
      _
    $region9: #{tpu_custom_call.1} parent=1 // pred_fallthru
      _
    // Predicated region
    $region10: #{tpu_custom_call.1} parent=1 // pred_check
      _
    $region11: #{tpu_custom_call.1} parent=1 // pred_check_branch
      %17 = sbr.rel (0) target = $region13
    $region12: #{tpu_custom_call.1} parent=1 // pred_region
      _
    $region13: #{tpu_custom_call.1} parent=1 // pred_fallthru
      _
    // Predicated region
    $region14: #{tpu_custom_call.1} parent=1 // pred_check
      _
    $region15: #{tpu_custom_call.1} parent=1 // pred_check_branch
      %19 = sbr.rel (0) target = $region17
    $region16: #{tpu_custom_call.1} parent=1 // pred_region
      _
    $region17: #{tpu_custom_call.1} parent=1 // pred_fallthru
      _
    // Predicated region
    $region18: #{tpu_custom_call.1} parent=1 // pred_check
      _
    $region19: #{tpu_custom_call.1} parent=1 // pred_check_branch
      %21 = sbr.rel (0) target = $region21
    $region20: #{tpu_custom_call.1} parent=1 // pred_region
      _
    $region21: #{tpu_custom_call.1} parent=1 // pred_fallthru
      _
    // Predicated region
    $region22: #{tpu_custom_call.1} parent=1 // pred_check
      _
    $region23: #{tpu_custom_call.1} parent=1 // pred_check_branch
      %23 = sbr.rel (0) target = $region25
    $region24: #{tpu_custom_call.1} parent=1 // pred_region
      _
    $region25: #{tpu_custom_call.1} parent=1 // pred_fallthru
      _
    %v25 = vld [vmem:[%s0] sm:$0xff]
    %v26 = vld [vmem:[%s0 + $0x8] sm:$0xff]
    %v27 = vld [vmem:[%s0 + $0x10] sm:$0xff]
    %v28 = vld [vmem:[%s0 + $0x18] sm:$0xff]
    %v29 = vld [vmem:[%s0 + $0x20] sm:$0xff]
    %v30 = vld [vmem:[%s0 + $0x28] sm:$0xff]
    %v31 = vld [vmem:[%s0 + $0x30] sm:$0xff]
    %v32 = vld [vmem:[%s0 + $0x38] sm:$0xff]
    %v33 = vpack.c.bf16 %v26, %v25
    %v34 = vpack.c.bf16 %v28, %v27
    %v35 = vpack.c.bf16 %v30, %v29
    %v36 = vpack.c.bf16 %v32, %v31
    %v37 = vld [vmem:[%s1] sm:$0xff]
    %v38 = vld [vmem:[%s1 + $0x8] sm:$0xff]
    %v39 = vld [vmem:[%s1 + $0x10] sm:$0xff]
    %v40 = vld [vmem:[%s1 + $0x18] sm:$0xff]
    %v41 = vld [vmem:[%s1 + $0x20] sm:$0xff]
    %v42 = vld [vmem:[%s1 + $0x28] sm:$0xff]
    %v43 = vld [vmem:[%s1 + $0x30] sm:$0xff]
    %v44 = vld [vmem:[%s1 + $0x38] sm:$0xff]
    %v53 = vunpack.c.l.b16 %v37
    %v54 = vunpack.c.h.b16 %v37
    %v55 = vunpack.c.l.b16 %v38
    %v56 = vunpack.c.h.b16 %v38
    %v57 = vunpack.c.l.b16 %v39
    %v58 = vunpack.c.h.b16 %v39
    %v59 = vunpack.c.l.b16 %v40
    %v60 = vunpack.c.h.b16 %v40
    %v61 = vunpack.c.l.b16 %v41
    %v62 = vunpack.c.h.b16 %v41
    %v63 = vunpack.c.l.b16 %v42
    %v64 = vunpack.c.h.b16 %v42
    %v65 = vunpack.c.l.b16 %v43
    %v66 = vunpack.c.h.b16 %v43
    %v67 = vunpack.c.l.b16 %v44
    %v68 = vunpack.c.h.b16 %v44
    %v69 = vpack.c.b16 %v57, %v53
    %v70 = vpack.c.b16 %v58, %v54
    %v71 = vpack.c.b16 %v59, %v55
    %v72 = vpack.c.b16 %v60, %v56
    %v73 = vpack.c.b16 %v65, %v61
    %v74 = vpack.c.b16 %v66, %v62
    %v75 = vpack.c.b16 %v67, %v63
    %v76 = vpack.c.b16 %v68, %v64
    %vm85 = vcmask 261120
    %v87 = vsel %vm85, %v33, 0
    %v90 = vsel %vm85, %v34, 0
    %v93 = vsel %vm85, %v35, 0
    %v96 = vsel %vm85, %v36, 0
    %98 = vmatprep.subr.bf16.mxu0 %v70
    %99 = vmatpush1.bf16.msra.mxu0 %v69
    %100 = vmatprep.subr.bf16.mxu0 %v74
    %101 = vmatpush1.bf16.msra.mxu0 %v73
    %102 = vmatprep.subr.bf16.mxu0 0
    %103 = vmatpush1.bf16.msra.mxu0 0
    %104 = vmatprep.subr.bf16.mxu0 0
    %105 = vmatpush1.bf16.msra.mxu0 0
    %106 = vmatprep.subr.bf16.mxu0 0
    %107 = vmatpush1.bf16.msra.mxu0 0
    %108 = vmatprep.subr.bf16.mxu0 0
    %109 = vmatpush1.bf16.msra.mxu0 0
    %110 = vmatprep.subr.bf16.mxu0 0
    %111 = vmatpush1.bf16.msra.mxu0 0
    %112 = vmatprep.subr.bf16.mxu0 0
    %113 = vmatpush1.bf16.msra.mxu0 0
    %114 = vmatprep.subr.bf16.mxu0 0
    %115 = vmatpush1.bf16.msra.mxu0 0
    %116 = vmatprep.subr.bf16.mxu0 0
    %117 = vmatpush1.bf16.msra.mxu0 0
    %118 = vmatprep.subr.bf16.mxu0 0
    %119 = vmatpush1.bf16.msra.mxu0 0
    %120 = vmatprep.subr.bf16.mxu0 0
    %121 = vmatpush1.bf16.msra.mxu0 0
    %122 = vmatprep.subr.bf16.mxu0 0
    %123 = vmatpush1.bf16.msra.mxu0 0
    %124 = vmatprep.subr.bf16.mxu0 0
    %125 = vmatpush1.bf16.msra.mxu0 0
    %126 = vmatprep.subr.bf16.mxu0 0
    %127 = vmatpush1.bf16.msra.mxu0 0
    %128 = vmatprep.subr.bf16.mxu0 0
    %129 = vmatpush1.bf16.msra.mxu0 0
    %130 = vmatprep.mubr.bf16.mxu0 0
    %131 = vmatmul.mubr.bf16.gmra.mrb[0].mxu0 %v87
    %v132 = vpop.f32.mrb[0].mxu0
    %v133 = vadd.f32 0.0, %v132
    %v134 = vpop.f32.mrb[0].mxu0
    %v135 = vadd.f32 0.0, %v134
    %v136 = vpop.f32.mrb[0].mxu0
    %v137 = vadd.f32 0.0, %v136
    %v138 = vpop.f32.mrb[0].mxu0
    %v139 = vadd.f32 0.0, %v138
    %140 = vmatprep.mubr.bf16.mxu0 0
    %141 = vmatmul.mubr.bf16.gmra.mrb[0].mxu0 %v90
    %v142 = vpop.f32.mrb[0].mxu0
    %v143 = vadd.f32 0.0, %v142
    %v144 = vpop.f32.mrb[0].mxu0
    %v145 = vadd.f32 0.0, %v144
    %v146 = vpop.f32.mrb[0].mxu0
    %v147 = vadd.f32 0.0, %v146
    %v148 = vpop.f32.mrb[0].mxu0
    %v149 = vadd.f32 0.0, %v148
    %150 = vmatprep.mubr.bf16.mxu0 0
    %151 = vmatmul.mubr.bf16.gmra.mrb[0].mxu0 %v93
    %v152 = vpop.f32.mrb[0].mxu0
    %v153 = vadd.f32 0.0, %v152
    %v154 = vpop.f32.mrb[0].mxu0
    %v155 = vadd.f32 0.0, %v154
    %v156 = vpop.f32.mrb[0].mxu0
    %v157 = vadd.f32 0.0, %v156
    %v158 = vpop.f32.mrb[0].mxu0
    %v159 = vadd.f32 0.0, %v158
    %160 = vmatprep.mubr.bf16.mxu0 0
    %161 = vmatmul.mubr.bf16.gmra.mrb[0].mxu0 %v96
    %v162 = vpop.f32.mrb[0].mxu0
    %v163 = vadd.f32 0.0, %v162
    %v164 = vpop.f32.mrb[0].mxu0
    %v165 = vadd.f32 0.0, %v164
    %v166 = vpop.f32.mrb[0].mxu0
    %v167 = vadd.f32 0.0, %v166
    %v168 = vpop.f32.mrb[0].mxu0
    %v169 = vadd.f32 0.0, %v168
    %170 = vdwg.mxu0
    %171 = vmatprep.subr.bf16.mxu0 %v72
    %172 = vmatpush1.bf16.msra.mxu0 %v71
    %173 = vmatprep.subr.bf16.mxu0 %v76
    %174 = vmatpush1.bf16.msra.mxu0 %v75
    %175 = vmatprep.subr.bf16.mxu0 0
    %176 = vmatpush1.bf16.msra.mxu0 0
    %177 = vmatprep.subr.bf16.mxu0 0
    %178 = vmatpush1.bf16.msra.mxu0 0
    %179 = vmatprep.subr.bf16.mxu0 0
    %180 = vmatpush1.bf16.msra.mxu0 0
    %181 = vmatprep.subr.bf16.mxu0 0
    %182 = vmatpush1.bf16.msra.mxu0 0
    %183 = vmatprep.subr.bf16.mxu0 0
    %184 = vmatpush1.bf16.msra.mxu0 0
    %185 = vmatprep.subr.bf16.mxu0 0
    %186 = vmatpush1.bf16.msra.mxu0 0
    %187 = vmatprep.subr.bf16.mxu0 0
    %188 = vmatpush1.bf16.msra.mxu0 0
    %189 = vmatprep.subr.bf16.mxu0 0
    %190 = vmatpush1.bf16.msra.mxu0 0
    %191 = vmatprep.subr.bf16.mxu0 0
    %192 = vmatpush1.bf16.msra.mxu0 0
    %193 = vmatprep.subr.bf16.mxu0 0
    %194 = vmatpush1.bf16.msra.mxu0 0
    %195 = vmatprep.subr.bf16.mxu0 0
    %196 = vmatpush1.bf16.msra.mxu0 0
    %197 = vmatprep.subr.bf16.mxu0 0
    %198 = vmatpush1.bf16.msra.mxu0 0
    %199 = vmatprep.subr.bf16.mxu0 0
    %200 = vmatpush1.bf16.msra.mxu0 0
    %201 = vmatprep.subr.bf16.mxu0 0
    %202 = vmatpush1.bf16.msra.mxu0 0
    %203 = vmatprep.mubr.bf16.mxu0 0
    %204 = vmatmul.mubr.bf16.gmra.mrb[0].mxu0 %v87
    %v205 = vpop.f32.mrb[0].mxu0
    %v206 = vadd.f32 0.0, %v205
    %v207 = vpop.f32.mrb[0].mxu0
    %v208 = vadd.f32 0.0, %v207
    %v209 = vpop.f32.mrb[0].mxu0
    %v210 = vadd.f32 0.0, %v209
    %v211 = vpop.f32.mrb[0].mxu0
    %v212 = vadd.f32 0.0, %v211
    %213 = vmatprep.mubr.bf16.mxu0 0
    %214 = vmatmul.mubr.bf16.gmra.mrb[0].mxu0 %v90
    %v215 = vpop.f32.mrb[0].mxu0
    %v216 = vadd.f32 0.0, %v215
    %v217 = vpop.f32.mrb[0].mxu0
    %v218 = vadd.f32 0.0, %v217
    %v219 = vpop.f32.mrb[0].mxu0
    %v220 = vadd.f32 0.0, %v219
    %v221 = vpop.f32.mrb[0].mxu0
    %v222 = vadd.f32 0.0, %v221
    %223 = vmatprep.mubr.bf16.mxu0 0
    %224 = vmatmul.mubr.bf16.gmra.mrb[0].mxu0 %v93
    %v225 = vpop.f32.mrb[0].mxu0
    %v226 = vadd.f32 0.0, %v225
    %v227 = vpop.f32.mrb[0].mxu0
    %v228 = vadd.f32 0.0, %v227
    %v229 = vpop.f32.mrb[0].mxu0
    %v230 = vadd.f32 0.0, %v229
    %v231 = vpop.f32.mrb[0].mxu0
    %v232 = vadd.f32 0.0, %v231
    %233 = vmatprep.mubr.bf16.mxu0 0
    %234 = vmatmul.mubr.bf16.gmra.mrb[0].mxu0 %v96
    %v235 = vpop.f32.mrb[0].mxu0
    %v236 = vadd.f32 0.0, %v235
    %v237 = vpop.f32.mrb[0].mxu0
    %v238 = vadd.f32 0.0, %v237
    %v239 = vpop.f32.mrb[0].mxu0
    %v240 = vadd.f32 0.0, %v239
    %v241 = vpop.f32.mrb[0].mxu0
    %v242 = vadd.f32 0.0, %v241
    %243 = vdwg.mxu0
    %v244 = vmax.f32 %v133, %v137
    %v245 = vrot.slane %v244, 4
    %v246 = vmax.f32 %v244, %v245
    %v247 = vrot.slane %v246, 2
    %v248 = vmax.f32 %v246, %v247
    %v249 = vrot.slane %v248, 1
    %v250 = vmax.f32 %v248, %v249
    %v251 = vmax.f32 %v135, %v139
    %v252 = vrot.slane %v251, 4
    %v253 = vmax.f32 %v251, %v252
    %v254 = vrot.slane %v253, 2
    %v255 = vmax.f32 %v253, %v254
    %v256 = vrot.slane %v255, 1
    %v257 = vmax.f32 %v255, %v256
    %v258 = vmax.f32 %v206, %v210
    %v259 = vrot.slane %v258, 4
    %v260 = vmax.f32 %v258, %v259
    %v261 = vrot.slane %v260, 2
    %v262 = vmax.f32 %v260, %v261
    %v263 = vrot.slane %v262, 1
    %v264 = vmax.f32 %v262, %v263
    %v265 = vmax.f32 %v208, %v212
    %v266 = vrot.slane %v265, 4
    %v267 = vmax.f32 %v265, %v266
    %v268 = vrot.slane %v267, 2
    %v269 = vmax.f32 %v267, %v268
    %v270 = vrot.slane %v269, 1
    %v271 = vmax.f32 %v269, %v270
    %v272 = vmax.f32 %v143, %v147
    %v273 = vrot.slane %v272, 4
    %v274 = vmax.f32 %v272, %v273
    %v275 = vrot.slane %v274, 2
    %v276 = vmax.f32 %v274, %v275
    %v277 = vrot.slane %v276, 1
    %v278 = vmax.f32 %v276, %v277
    %v279 = vmax.f32 %v145, %v149
    %v280 = vrot.slane %v279, 4
    %v281 = vmax.f32 %v279, %v280
    %v282 = vrot.slane %v281, 2
    %v283 = vmax.f32 %v281, %v282
    %v284 = vrot.slane %v283, 1
    %v285 = vmax.f32 %v283, %v284
    %v286 = vmax.f32 %v216, %v220
    %v287 = vrot.slane %v286, 4
    %v288 = vmax.f32 %v286, %v287
    %v289 = vrot.slane %v288, 2
    %v290 = vmax.f32 %v288, %v289
    %v291 = vrot.slane %v290, 1
    %v292 = vmax.f32 %v290, %v291
    %v293 = vmax.f32 %v218, %v222
    %v294 = vrot.slane %v293, 4
    %v295 = vmax.f32 %v293, %v294
    %v296 = vrot.slane %v295, 2
    %v297 = vmax.f32 %v295, %v296
    %v298 = vrot.slane %v297, 1
    %v299 = vmax.f32 %v297, %v298
    %v300 = vmax.f32 %v153, %v157
    %v301 = vrot.slane %v300, 4
    %v302 = vmax.f32 %v300, %v301
    %v303 = vrot.slane %v302, 2
    %v304 = vmax.f32 %v302, %v303
    %v305 = vrot.slane %v304, 1
    %v306 = vmax.f32 %v304, %v305
    %v307 = vmax.f32 %v155, %v159
    %v308 = vrot.slane %v307, 4
    %v309 = vmax.f32 %v307, %v308
    %v310 = vrot.slane %v309, 2
    %v311 = vmax.f32 %v309, %v310
    %v312 = vrot.slane %v311, 1
    %v313 = vmax.f32 %v311, %v312
    %v314 = vmax.f32 %v226, %v230
    %v315 = vrot.slane %v314, 4
    %v316 = vmax.f32 %v314, %v315
    %v317 = vrot.slane %v316, 2
    %v318 = vmax.f32 %v316, %v317
    %v319 = vrot.slane %v318, 1
    %v320 = vmax.f32 %v318, %v319
    %v321 = vmax.f32 %v228, %v232
    %v322 = vrot.slane %v321, 4
    %v323 = vmax.f32 %v321, %v322
    %v324 = vrot.slane %v323, 2
    %v325 = vmax.f32 %v323, %v324
    %v326 = vrot.slane %v325, 1
    %v327 = vmax.f32 %v325, %v326
    %v328 = vmax.f32 %v163, %v167
    %v329 = vrot.slane %v328, 4
    %v330 = vmax.f32 %v328, %v329
    %v331 = vrot.slane %v330, 2
    %v332 = vmax.f32 %v330, %v331
    %v333 = vrot.slane %v332, 1
    %v334 = vmax.f32 %v332, %v333
    %v335 = vmax.f32 %v165, %v169
    %v336 = vrot.slane %v335, 4
    %v337 = vmax.f32 %v335, %v336
    %v338 = vrot.slane %v337, 2
    %v339 = vmax.f32 %v337, %v338
    %v340 = vrot.slane %v339, 1
    %v341 = vmax.f32 %v339, %v340
    %v342 = vmax.f32 %v236, %v240
    %v343 = vrot.slane %v342, 4
    %v344 = vmax.f32 %v342, %v343
    %v345 = vrot.slane %v344, 2
    %v346 = vmax.f32 %v344, %v345
    %v347 = vrot.slane %v346, 1
    %v348 = vmax.f32 %v346, %v347
    %v349 = vmax.f32 %v238, %v242
    %v350 = vrot.slane %v349, 4
    %v351 = vmax.f32 %v349, %v350
    %v352 = vrot.slane %v351, 2
    %v353 = vmax.f32 %v351, %v352
    %v354 = vrot.slane %v353, 1
    %v355 = vmax.f32 %v353, %v354
    %v356 = vsub.f32 %v133, %v250
    %v357 = vsub.f32 %v135, %v257
    %v358 = vsub.f32 %v206, %v264
    %v359 = vsub.f32 %v208, %v271
    %v360 = vsub.f32 %v137, %v250
    %v361 = vsub.f32 %v139, %v257
    %v362 = vsub.f32 %v210, %v264
    %v363 = vsub.f32 %v212, %v271
    %v364 = vsub.f32 %v143, %v278
    %v365 = vsub.f32 %v145, %v285
    %v366 = vsub.f32 %v216, %v292
    %v367 = vsub.f32 %v218, %v299
    %v368 = vsub.f32 %v147, %v278
    %v369 = vsub.f32 %v149, %v285
    %v370 = vsub.f32 %v220, %v292
    %v371 = vsub.f32 %v222, %v299
    %v372 = vsub.f32 %v153, %v306
    %v373 = vsub.f32 %v155, %v313
    %v374 = vsub.f32 %v226, %v320
    %v375 = vsub.f32 %v228, %v327
    %v376 = vsub.f32 %v157, %v306
    %v377 = vsub.f32 %v159, %v313
    %v378 = vsub.f32 %v230, %v320
    %v379 = vsub.f32 %v232, %v327
    %v380 = vsub.f32 %v163, %v334
    %v381 = vsub.f32 %v165, %v341
    %v382 = vsub.f32 %v236, %v348
    %v383 = vsub.f32 %v238, %v355
    %v384 = vsub.f32 %v167, %v334
    %v385 = vsub.f32 %v169, %v341
    %v386 = vsub.f32 %v240, %v348
    %v387 = vsub.f32 %v242, %v355
    %v388 = vmul.f32 %v356, 1.442695
    %v389 = vpow.pop %v388
    %v390 = vmul.f32 %v357, 1.442695
    %v391 = vpow.pop %v390
    %v392 = vmul.f32 %v358, 1.442695
    %v393 = vpow.pop %v392
    %v394 = vmul.f32 %v359, 1.442695
    %v395 = vpow.pop %v394
    %v396 = vmul.f32 %v360, 1.442695
    %v397 = vpow.pop %v396
    %v398 = vmul.f32 %v361, 1.442695
    %v399 = vpow.pop %v398
    %v400 = vmul.f32 %v362, 1.442695
    %v401 = vpow.pop %v400
    %v402 = vmul.f32 %v363, 1.442695
    %v403 = vpow.pop %v402
    %v404 = vmul.f32 %v364, 1.442695
    %v405 = vpow.pop %v404
    %v406 = vmul.f32 %v365, 1.442695
    %v407 = vpow.pop %v406
    %v408 = vmul.f32 %v366, 1.442695
    %v409 = vpow.pop %v408
    %v410 = vmul.f32 %v367, 1.442695
    %v411 = vpow.pop %v410
    %v412 = vmul.f32 %v368, 1.442695
    %v413 = vpow.pop %v412
    %v414 = vmul.f32 %v369, 1.442695
    %v415 = vpow.pop %v414
    %v416 = vmul.f32 %v370, 1.442695
    %v417 = vpow.pop %v416
    %v418 = vmul.f32 %v371, 1.442695
    %v419 = vpow.pop %v418
    %v420 = vmul.f32 %v372, 1.442695
    %v421 = vpow.pop %v420
    %v422 = vmul.f32 %v373, 1.442695
    %v423 = vpow.pop %v422
    %v424 = vmul.f32 %v374, 1.442695
    %v425 = vpow.pop %v424
    %v426 = vmul.f32 %v375, 1.442695
    %v427 = vpow.pop %v426
    %v428 = vmul.f32 %v376, 1.442695
    %v429 = vpow.pop %v428
    %v430 = vmul.f32 %v377, 1.442695
    %v431 = vpow.pop %v430
    %v432 = vmul.f32 %v378, 1.442695
    %v433 = vpow.pop %v432
    %v434 = vmul.f32 %v379, 1.442695
    %v435 = vpow.pop %v434
    %v436 = vmul.f32 %v380, 1.442695
    %v437 = vpow.pop %v436
    %v438 = vmul.f32 %v381, 1.442695
    %v439 = vpow.pop %v438
    %v440 = vmul.f32 %v382, 1.442695
    %v441 = vpow.pop %v440
    %v442 = vmul.f32 %v383, 1.442695
    %v443 = vpow.pop %v442
    %v444 = vmul.f32 %v384, 1.442695
    %v445 = vpow.pop %v444
    %v446 = vmul.f32 %v385, 1.442695
    %v447 = vpow.pop %v446
    %v448 = vmul.f32 %v386, 1.442695
    %v449 = vpow.pop %v448
    %v450 = vmul.f32 %v387, 1.442695
    %v451 = vpow.pop %v450
    %v452 = vadd.f32 %v389, %v397
    %v453 = vrot.slane %v452, 4
    %v454 = vadd.f32 %v452, %v453
    %v455 = vrot.slane %v454, 2
    %v456 = vadd.f32 %v454, %v455
    %v457 = vrot.slane %v456, 1
    %v458 = vadd.f32 %v456, %v457
    %v459 = vadd.f32 %v391, %v399
    %v460 = vrot.slane %v459, 4
    %v461 = vadd.f32 %v459, %v460
    %v462 = vrot.slane %v461, 2
    %v463 = vadd.f32 %v461, %v462
    %v464 = vrot.slane %v463, 1
    %v465 = vadd.f32 %v463, %v464
    %v466 = vadd.f32 %v393, %v401
    %v467 = vrot.slane %v466, 4
    %v468 = vadd.f32 %v466, %v467
    %v469 = vrot.slane %v468, 2
    %v470 = vadd.f32 %v468, %v469
    %v471 = vrot.slane %v470, 1
    %v472 = vadd.f32 %v470, %v471
    %v473 = vadd.f32 %v395, %v403
    %v474 = vrot.slane %v473, 4
    %v475 = vadd.f32 %v473, %v474
    %v476 = vrot.slane %v475, 2
    %v477 = vadd.f32 %v475, %v476
    %v478 = vrot.slane %v477, 1
    %v479 = vadd.f32 %v477, %v478
    %v480 = vadd.f32 %v405, %v413
    %v481 = vrot.slane %v480, 4
    %v482 = vadd.f32 %v480, %v481
    %v483 = vrot.slane %v482, 2
    %v484 = vadd.f32 %v482, %v483
    %v485 = vrot.slane %v484, 1
    %v486 = vadd.f32 %v484, %v485
    %v487 = vadd.f32 %v407, %v415
    %v488 = vrot.slane %v487, 4
    %v489 = vadd.f32 %v487, %v488
    %v490 = vrot.slane %v489, 2
    %v491 = vadd.f32 %v489, %v490
    %v492 = vrot.slane %v491, 1
    %v493 = vadd.f32 %v491, %v492
    %v494 = vadd.f32 %v409, %v417
    %v495 = vrot.slane %v494, 4
    %v496 = vadd.f32 %v494, %v495
    %v497 = vrot.slane %v496, 2
    %v498 = vadd.f32 %v496, %v497
    %v499 = vrot.slane %v498, 1
    %v500 = vadd.f32 %v498, %v499
    %v501 = vadd.f32 %v411, %v419
    %v502 = vrot.slane %v501, 4
    %v503 = vadd.f32 %v501, %v502
    %v504 = vrot.slane %v503, 2
    %v505 = vadd.f32 %v503, %v504
    %v506 = vrot.slane %v505, 1
    %v507 = vadd.f32 %v505, %v506
    %v508 = vadd.f32 %v421, %v429
    %v509 = vrot.slane %v508, 4
    %v510 = vadd.f32 %v508, %v509
    %v511 = vrot.slane %v510, 2
    %v512 = vadd.f32 %v510, %v511
    %v513 = vrot.slane %v512, 1
    %v514 = vadd.f32 %v512, %v513
    %v515 = vadd.f32 %v423, %v431
    %v516 = vrot.slane %v515, 4
    %v517 = vadd.f32 %v515, %v516
    %v518 = vrot.slane %v517, 2
    %v519 = vadd.f32 %v517, %v518
    %v520 = vrot.slane %v519, 1
    %v521 = vadd.f32 %v519, %v520
    %v522 = vadd.f32 %v425, %v433
    %v523 = vrot.slane %v522, 4
    %v524 = vadd.f32 %v522, %v523
    %v525 = vrot.slane %v524, 2
    %v526 = vadd.f32 %v524, %v525
    %v527 = vrot.slane %v526, 1
    %v528 = vadd.f32 %v526, %v527
    %v529 = vadd.f32 %v427, %v435
    %v530 = vrot.slane %v529, 4
    %v531 = vadd.f32 %v529, %v530
    %v532 = vrot.slane %v531, 2
    %v533 = vadd.f32 %v531, %v532
    %v534 = vrot.slane %v533, 1
    %v535 = vadd.f32 %v533, %v534
    %v536 = vadd.f32 %v437, %v445
    %v537 = vrot.slane %v536, 4
    %v538 = vadd.f32 %v536, %v537
    %v539 = vrot.slane %v538, 2
    %v540 = vadd.f32 %v538, %v539
    %v541 = vrot.slane %v540, 1
    %v542 = vadd.f32 %v540, %v541
    %v543 = vadd.f32 %v439, %v447
    %v544 = vrot.slane %v543, 4
    %v545 = vadd.f32 %v543, %v544
    %v546 = vrot.slane %v545, 2
    %v547 = vadd.f32 %v545, %v546
    %v548 = vrot.slane %v547, 1
    %v549 = vadd.f32 %v547, %v548
    %v550 = vadd.f32 %v441, %v449
    %v551 = vrot.slane %v550, 4
    %v552 = vadd.f32 %v550, %v551
    %v553 = vrot.slane %v552, 2
    %v554 = vadd.f32 %v552, %v553
    %v555 = vrot.slane %v554, 1
    %v556 = vadd.f32 %v554, %v555
    %v557 = vadd.f32 %v443, %v451
    %v558 = vrot.slane %v557, 4
    %v559 = vadd.f32 %v557, %v558
    %v560 = vrot.slane %v559, 2
    %v561 = vadd.f32 %v559, %v560
    %v562 = vrot.slane %v561, 1
    %v563 = vadd.f32 %v561, %v562
    %v564 = vrcp.pop %v458
    %v565 = vrcp.pop %v465
    %v566 = vrcp.pop %v472
    %v567 = vrcp.pop %v479
    %v568 = vrcp.pop %v486
    %v569 = vrcp.pop %v493
    %v570 = vrcp.pop %v500
    %v571 = vrcp.pop %v507
    %v572 = vrcp.pop %v514
    %v573 = vrcp.pop %v521
    %v574 = vrcp.pop %v528
    %v575 = vrcp.pop %v535
    %v576 = vrcp.pop %v542
    %v577 = vrcp.pop %v549
    %v578 = vrcp.pop %v556
    %v579 = vrcp.pop %v563
    %v580 = vmul.f32 %v389, %v564
    %v581 = vmul.f32 %v391, %v565
    %v582 = vmul.f32 %v393, %v566
    %v583 = vmul.f32 %v395, %v567
    %v584 = vmul.f32 %v397, %v564
    %v585 = vmul.f32 %v399, %v565
    %v586 = vmul.f32 %v401, %v566
    %v587 = vmul.f32 %v403, %v567
    %v588 = vmul.f32 %v405, %v568
    %v589 = vmul.f32 %v407, %v569
    %v590 = vmul.f32 %v409, %v570
    %v591 = vmul.f32 %v411, %v571
    %v592 = vmul.f32 %v413, %v568
    %v593 = vmul.f32 %v415, %v569
    %v594 = vmul.f32 %v417, %v570
    %v595 = vmul.f32 %v419, %v571
    %v596 = vmul.f32 %v421, %v572
    %v597 = vmul.f32 %v423, %v573
    %v598 = vmul.f32 %v425, %v574
    %v599 = vmul.f32 %v427, %v575
    %v600 = vmul.f32 %v429, %v572
    %v601 = vmul.f32 %v431, %v573
    %v602 = vmul.f32 %v433, %v574
    %v603 = vmul.f32 %v435, %v575
    %v604 = vmul.f32 %v437, %v576
    %v605 = vmul.f32 %v439, %v577
    %v606 = vmul.f32 %v441, %v578
    %v607 = vmul.f32 %v443, %v579
    %v608 = vmul.f32 %v445, %v576
    %v609 = vmul.f32 %v447, %v577
    %v610 = vmul.f32 %v449, %v578
    %v611 = vmul.f32 %v451, %v579
    %v612 = vld [vmem:[%s2] sm:$0xff]
    %v613 = vld [vmem:[%s2 + $0x8] sm:$0xff]
    %v614 = vld [vmem:[%s2 + $0x10] sm:$0xff]
    %v615 = vld [vmem:[%s2 + $0x18] sm:$0xff]
    %v616 = vld [vmem:[%s2 + $0x20] sm:$0xff]
    %v617 = vld [vmem:[%s2 + $0x28] sm:$0xff]
    %v618 = vld [vmem:[%s2 + $0x30] sm:$0xff]
    %v619 = vld [vmem:[%s2 + $0x38] sm:$0xff]
    %v620 = vld [vmem:[%s2 + $0x40] sm:$0xff]
    %v621 = vld [vmem:[%s2 + $0x48] sm:$0xff]
    %v622 = vld [vmem:[%s2 + $0x50] sm:$0xff]
    %v623 = vld [vmem:[%s2 + $0x58] sm:$0xff]
    %v624 = vld [vmem:[%s2 + $0x60] sm:$0xff]
    %v625 = vld [vmem:[%s2 + $0x68] sm:$0xff]
    %v626 = vld [vmem:[%s2 + $0x70] sm:$0xff]
    %v627 = vld [vmem:[%s2 + $0x78] sm:$0xff]
    %v628 = vld [vmem:[%s2 + $0x80] sm:$0xff]
    %v629 = vld [vmem:[%s2 + $0x88] sm:$0xff]
    %v630 = vld [vmem:[%s2 + $0x90] sm:$0xff]
    %v631 = vld [vmem:[%s2 + $0x98] sm:$0xff]
    %v632 = vld [vmem:[%s2 + $0xa0] sm:$0xff]
    %v633 = vld [vmem:[%s2 + $0xa8] sm:$0xff]
    %v634 = vld [vmem:[%s2 + $0xb0] sm:$0xff]
    %v635 = vld [vmem:[%s2 + $0xb8] sm:$0xff]
    %v636 = vld [vmem:[%s2 + $0xc0] sm:$0xff]
    %v637 = vld [vmem:[%s2 + $0xc8] sm:$0xff]
    %v638 = vld [vmem:[%s2 + $0xd0] sm:$0xff]
    %v639 = vld [vmem:[%s2 + $0xd8] sm:$0xff]
    %v640 = vld [vmem:[%s2 + $0xe0] sm:$0xff]
    %v641 = vld [vmem:[%s2 + $0xe8] sm:$0xff]
    %v642 = vld [vmem:[%s2 + $0xf0] sm:$0xff]
    %v643 = vld [vmem:[%s2 + $0xf8] sm:$0xff]
    %v644 = vld [vmem:[%s2 + $0x100] sm:$0xff]
    %v645 = vld [vmem:[%s2 + $0x108] sm:$0xff]
    %v646 = vld [vmem:[%s2 + $0x110] sm:$0xff]
    %v647 = vld [vmem:[%s2 + $0x118] sm:$0xff]
    %v648 = vld [vmem:[%s2 + $0x120] sm:$0xff]
    %v649 = vld [vmem:[%s2 + $0x128] sm:$0xff]
    %v650 = vld [vmem:[%s2 + $0x130] sm:$0xff]
    %v651 = vld [vmem:[%s2 + $0x138] sm:$0xff]
    %v652 = vld [vmem:[%s2 + $0x140] sm:$0xff]
    %v653 = vld [vmem:[%s2 + $0x148] sm:$0xff]
    %v654 = vld [vmem:[%s2 + $0x150] sm:$0xff]
    %v655 = vld [vmem:[%s2 + $0x158] sm:$0xff]
    %v656 = vld [vmem:[%s2 + $0x160] sm:$0xff]
    %v657 = vld [vmem:[%s2 + $0x168] sm:$0xff]
    %v658 = vld [vmem:[%s2 + $0x170] sm:$0xff]
    %v659 = vld [vmem:[%s2 + $0x178] sm:$0xff]
    %v660 = vld [vmem:[%s2 + $0x180] sm:$0xff]
    %v661 = vld [vmem:[%s2 + $0x188] sm:$0xff]
    %v662 = vld [vmem:[%s2 + $0x190] sm:$0xff]
    %v663 = vld [vmem:[%s2 + $0x198] sm:$0xff]
    %v664 = vld [vmem:[%s2 + $0x1a0] sm:$0xff]
    %v665 = vld [vmem:[%s2 + $0x1a8] sm:$0xff]
    %v666 = vld [vmem:[%s2 + $0x1b0] sm:$0xff]
    %v667 = vld [vmem:[%s2 + $0x1b8] sm:$0xff]
    %v668 = vld [vmem:[%s2 + $0x1c0] sm:$0xff]
    %v669 = vld [vmem:[%s2 + $0x1c8] sm:$0xff]
    %v670 = vld [vmem:[%s2 + $0x1d0] sm:$0xff]
    %v671 = vld [vmem:[%s2 + $0x1d8] sm:$0xff]
    %v672 = vld [vmem:[%s2 + $0x1e0] sm:$0xff]
    %v673 = vld [vmem:[%s2 + $0x1e8] sm:$0xff]
    %v674 = vld [vmem:[%s2 + $0x1f0] sm:$0xff]
    %v675 = vld [vmem:[%s2 + $0x1f8] sm:$0xff]
    %676 = vmatprep.subr.mxu0 0.0
    %v677 = vand.u32 %v612, 4294901760
    %678 = vmatpush1.msra.mxu0 %v677
    %679 = vmatprep.subr.mxu0 0.0
    %v680 = vand.u32 %v613, 4294901760
    %681 = vmatpush1.msra.mxu0 %v680
    %682 = vmatprep.subr.mxu0 0.0
    %v683 = vand.u32 %v614, 4294901760
    %684 = vmatpush1.msra.mxu0 %v683
    %685 = vmatprep.subr.mxu0 0.0
    %v686 = vand.u32 %v615, 4294901760
    %687 = vmatpush1.msra.mxu0 %v686
    %688 = vmatprep.subr.mxu0 0.0
    %v689 = vand.u32 %v616, 4294901760
    %690 = vmatpush1.msra.mxu0 %v689
    %691 = vmatprep.subr.mxu0 0.0
    %v692 = vand.u32 %v617, 4294901760
    %693 = vmatpush1.msra.mxu0 %v692
    %694 = vmatprep.subr.mxu0 0.0
    %v695 = vand.u32 %v618, 4294901760
    %696 = vmatpush1.msra.mxu0 %v695
    %697 = vmatprep.subr.mxu0 0.0
    %v698 = vand.u32 %v619, 4294901760
    %699 = vmatpush1.msra.mxu0 %v698
    %700 = vmatprep.subr.mxu0 0.0
    %v701 = vand.u32 %v620, 4294901760
    %702 = vmatpush1.msra.mxu0 %v701
    %703 = vmatprep.subr.mxu0 0.0
    %v704 = vand.u32 %v621, 4294901760
    %705 = vmatpush1.msra.mxu0 %v704
    %706 = vmatprep.subr.mxu0 0.0
    %v707 = vand.u32 %v622, 4294901760
    %708 = vmatpush1.msra.mxu0 %v707
    %709 = vmatprep.subr.mxu0 0.0
    %v710 = vand.u32 %v623, 4294901760
    %711 = vmatpush1.msra.mxu0 %v710
    %712 = vmatprep.subr.mxu0 0.0
    %v713 = vand.u32 %v624, 4294901760
    %714 = vmatpush1.msra.mxu0 %v713
    %715 = vmatprep.subr.mxu0 0.0
    %v716 = vand.u32 %v625, 4294901760
    %717 = vmatpush1.msra.mxu0 %v716
    %718 = vmatprep.subr.mxu0 0.0
    %v719 = vand.u32 %v626, 4294901760
    %720 = vmatpush1.msra.mxu0 %v719
    %721 = vmatprep.subr.mxu0 0.0
    %v722 = vand.u32 %v627, 4294901760
    %723 = vmatpush1.msra.mxu0 %v722
    %724 = vmatprep.subr.mxu0 0.0
    %v725 = vand.u32 %v628, 4294901760
    %726 = vmatpush1.msra.mxu0 %v725
    %727 = vmatprep.subr.mxu0 0.0
    %v728 = vand.u32 %v629, 4294901760
    %729 = vmatpush1.msra.mxu0 %v728
    %730 = vmatprep.subr.mxu0 0.0
    %v731 = vand.u32 %v630, 4294901760
    %732 = vmatpush1.msra.mxu0 %v731
    %733 = vmatprep.subr.mxu0 0.0
    %v734 = vand.u32 %v631, 4294901760
    %735 = vmatpush1.msra.mxu0 %v734
    %736 = vmatprep.subr.mxu0 0.0
    %v737 = vand.u32 %v632, 4294901760
    %738 = vmatpush1.msra.mxu0 %v737
    %739 = vmatprep.subr.mxu0 0.0
    %v740 = vand.u32 %v633, 4294901760
    %741 = vmatpush1.msra.mxu0 %v740
    %742 = vmatprep.subr.mxu0 0.0
    %v743 = vand.u32 %v634, 4294901760
    %744 = vmatpush1.msra.mxu0 %v743
    %745 = vmatprep.subr.mxu0 0.0
    %v746 = vand.u32 %v635, 4294901760
    %747 = vmatpush1.msra.mxu0 %v746
    %748 = vmatprep.subr.mxu0 0.0
    %v749 = vand.u32 %v636, 4294901760
    %750 = vmatpush1.msra.mxu0 %v749
    %751 = vmatprep.subr.mxu0 0.0
    %v752 = vand.u32 %v637, 4294901760
    %753 = vmatpush1.msra.mxu0 %v752
    %754 = vmatprep.subr.mxu0 0.0
    %v755 = vand.u32 %v638, 4294901760
    %756 = vmatpush1.msra.mxu0 %v755
    %757 = vmatprep.subr.mxu0 0.0
    %v758 = vand.u32 %v639, 4294901760
    %759 = vmatpush1.msra.mxu0 %v758
    %760 = vmatprep.subr.mxu0 0.0
    %v761 = vand.u32 %v640, 4294901760
    %762 = vmatpush1.msra.mxu0 %v761
    %763 = vmatprep.subr.mxu0 0.0
    %v764 = vand.u32 %v641, 4294901760
    %765 = vmatpush1.msra.mxu0 %v764
    %766 = vmatprep.subr.mxu0 0.0
    %v767 = vand.u32 %v642, 4294901760
    %768 = vmatpush1.msra.mxu0 %v767
    %769 = vmatprep.subr.mxu0 0.0
    %v770 = vand.u32 %v643, 4294901760
    %771 = vmatpush1.msra.mxu0 %v770
    %v772 = vand.u32 %v581, 4294901760
    %v773 = vsub.f32 %v581, %v772
    %v774 = vand.u32 %v773, 4294901760
    %v775 = vsub.f32 %v773, %v774
    %v776 = vand.u32 %v775, 4294901760
    %777 = vmatprep.mubr.f32.mxu0 %v776
    %v778 = vand.u32 %v580, 4294901760
    %v779 = vsub.f32 %v580, %v778
    %v780 = vand.u32 %v779, 4294901760
    %v781 = vsub.f32 %v779, %v780
    %v782 = vand.u32 %v781, 4294901760
    %783 = vmatmul.mubr.f32.gmra.mrb[0].mxu0 %v782
    %v784 = vpop.f32.mrb[0].mxu0
    %v785 = vadd.f32 1e-09, %v784
    %v786 = vpop.f32.mrb[0].mxu0
    %v787 = vand.u32 %v585, 4294901760
    %v788 = vsub.f32 %v585, %v787
    %v789 = vand.u32 %v788, 4294901760
    %v790 = vsub.f32 %v788, %v789
    %v791 = vand.u32 %v790, 4294901760
    %792 = vmatprep.mubr.f32.mxu0 %v791
    %v793 = vand.u32 %v584, 4294901760
    %v794 = vsub.f32 %v584, %v793
    %v795 = vand.u32 %v794, 4294901760
    %v796 = vsub.f32 %v794, %v795
    %v797 = vand.u32 %v796, 4294901760
    %798 = vmatmul.mubr.f32.gmra.mrb[0].mxu0 %v797
    %v799 = vpop.f32.mrb[0].mxu0
    %v800 = vadd.f32 1e-09, %v799
    %v801 = vpop.f32.mrb[0].mxu0
    %v802 = vand.u32 %v589, 4294901760
    %v803 = vsub.f32 %v589, %v802
    %v804 = vand.u32 %v803, 4294901760
    %v805 = vsub.f32 %v803, %v804
    %v806 = vand.u32 %v805, 4294901760
    %807 = vmatprep.mubr.f32.mxu0 %v806
    %v808 = vand.u32 %v588, 4294901760
    %v809 = vsub.f32 %v588, %v808
    %v810 = vand.u32 %v809, 4294901760
    %v811 = vsub.f32 %v809, %v810
    %v812 = vand.u32 %v811, 4294901760
    %813 = vmatmul.mubr.f32.gmra.mrb[0].mxu0 %v812
    %v814 = vpop.f32.mrb[0].mxu0
    %v815 = vadd.f32 1e-09, %v814
    %v816 = vpop.f32.mrb[0].mxu0
    %v817 = vand.u32 %v593, 4294901760
    %v818 = vsub.f32 %v593, %v817
    %v819 = vand.u32 %v818, 4294901760
    %v820 = vsub.f32 %v818, %v819
    %v821 = vand.u32 %v820, 4294901760
    %822 = vmatprep.mubr.f32.mxu0 %v821
    %v823 = vand.u32 %v592, 4294901760
    %v824 = vsub.f32 %v592, %v823
    %v825 = vand.u32 %v824, 4294901760
    %v826 = vsub.f32 %v824, %v825
    %v827 = vand.u32 %v826, 4294901760
    %828 = vmatmul.mubr.f32.gmra.mrb[0].mxu0 %v827
    %v829 = vpop.f32.mrb[0].mxu0
    %v830 = vadd.f32 1e-09, %v829
    %v831 = vpop.f32.mrb[0].mxu0
    %v832 = vand.u32 %v597, 4294901760
    %v833 = vsub.f32 %v597, %v832
    %v834 = vand.u32 %v833, 4294901760
    %v835 = vsub.f32 %v833, %v834
    %v836 = vand.u32 %v835, 4294901760
    %837 = vmatprep.mubr.f32.mxu0 %v836
    %v838 = vand.u32 %v596, 4294901760
    %v839 = vsub.f32 %v596, %v838
    %v840 = vand.u32 %v839, 4294901760
    %v841 = vsub.f32 %v839, %v840
    %v842 = vand.u32 %v841, 4294901760
    %843 = vmatmul.mubr.f32.gmra.mrb[0].mxu0 %v842
    %v844 = vpop.f32.mrb[0].mxu0
    %v845 = vadd.f32 1e-09, %v844
    %v846 = vpop.f32.mrb[0].mxu0
    %v847 = vand.u32 %v601, 4294901760
    %v848 = vsub.f32 %v601, %v847
    %v849 = vand.u32 %v848, 4294901760
    %v850 = vsub.f32 %v848, %v849
    %v851 = vand.u32 %v850, 4294901760
    %852 = vmatprep.mubr.f32.mxu0 %v851
    %v853 = vand.u32 %v600, 4294901760
    %v854 = vsub.f32 %v600, %v853
    %v855 = vand.u32 %v854, 4294901760
    %v856 = vsub.f32 %v854, %v855
    %v857 = vand.u32 %v856, 4294901760
    %858 = vmatmul.mubr.f32.gmra.mrb[0].mxu0 %v857
    %v859 = vpop.f32.mrb[0].mxu0
    %v860 = vadd.f32 1e-09, %v859
    %v861 = vpop.f32.mrb[0].mxu0
    %v862 = vand.u32 %v605, 4294901760
    %v863 = vsub.f32 %v605, %v862
    %v864 = vand.u32 %v863, 4294901760
    %v865 = vsub.f32 %v863, %v864
    %v866 = vand.u32 %v865, 4294901760
    %867 = vmatprep.mubr.f32.mxu0 %v866
    %v868 = vand.u32 %v604, 4294901760
    %v869 = vsub.f32 %v604, %v868
    %v870 = vand.u32 %v869, 4294901760
    %v871 = vsub.f32 %v869, %v870
    %v872 = vand.u32 %v871, 4294901760
    %873 = vmatmul.mubr.f32.gmra.mrb[0].mxu0 %v872
    %v874 = vpop.f32.mrb[0].mxu0
    %v875 = vadd.f32 1e-09, %v874
    %v876 = vpop.f32.mrb[0].mxu0
    %v877 = vand.u32 %v609, 4294901760
    %v878 = vsub.f32 %v609, %v877
    %v879 = vand.u32 %v878, 4294901760
    %v880 = vsub.f32 %v878, %v879
    %v881 = vand.u32 %v880, 4294901760
    %882 = vmatprep.mubr.f32.mxu0 %v881
    %v883 = vand.u32 %v608, 4294901760
    %v884 = vsub.f32 %v608, %v883
    %v885 = vand.u32 %v884, 4294901760
    %v886 = vsub.f32 %v884, %v885
    %v887 = vand.u32 %v886, 4294901760
    %888 = vmatmul.mubr.f32.gmra.mrb[0].mxu0 %v887
    %v889 = vpop.f32.mrb[0].mxu0
    %v890 = vadd.f32 1e-09, %v889
    %v891 = vpop.f32.mrb[0].mxu0
    %892 = vdwg.mxu0
    %893 = vmatprep.subr.mxu0 0.0
    %v894 = vand.u32 %v612, 4294901760
    %v895 = vsub.f32 %v612, %v894
    %v896 = vand.u32 %v895, 4294901760
    %v897 = vsub.f32 %v895, %v896
    %v898 = vand.u32 %v897, 4294901760
    %899 = vmatpush1.msra.mxu0 %v898
    %900 = vmatprep.subr.mxu0 0.0
    %v901 = vand.u32 %v613, 4294901760
    %v902 = vsub.f32 %v613, %v901
    %v903 = vand.u32 %v902, 4294901760
    %v904 = vsub.f32 %v902, %v903
    %v905 = vand.u32 %v904, 4294901760
    %906 = vmatpush1.msra.mxu0 %v905
    %907 = vmatprep.subr.mxu0 0.0
    %v908 = vand.u32 %v614, 4294901760
    %v909 = vsub.f32 %v614, %v908
    %v910 = vand.u32 %v909, 4294901760
    %v911 = vsub.f32 %v909, %v910
    %v912 = vand.u32 %v911, 4294901760
    %913 = vmatpush1.msra.mxu0 %v912
    %914 = vmatprep.subr.mxu0 0.0
    %v915 = vand.u32 %v615, 4294901760
    %v916 = vsub.f32 %v615, %v915
    %v917 = vand.u32 %v916, 4294901760
    %v918 = vsub.f32 %v916, %v917
    %v919 = vand.u32 %v918, 4294901760
    %920 = vmatpush1.msra.mxu0 %v919
    %921 = vmatprep.subr.mxu0 0.0
    %v922 = vand.u32 %v616, 4294901760
    %v923 = vsub.f32 %v616, %v922
    %v924 = vand.u32 %v923, 4294901760
    %v925 = vsub.f32 %v923, %v924
    %v926 = vand.u32 %v925, 4294901760
    %927 = vmatpush1.msra.mxu0 %v926
    %928 = vmatprep.subr.mxu0 0.0
    %v929 = vand.u32 %v617, 4294901760
    %v930 = vsub.f32 %v617, %v929
    %v931 = vand.u32 %v930, 4294901760
    %v932 = vsub.f32 %v930, %v931
    %v933 = vand.u32 %v932, 4294901760
    %934 = vmatpush1.msra.mxu0 %v933
    %935 = vmatprep.subr.mxu0 0.0
    %v936 = vand.u32 %v618, 4294901760
    %v937 = vsub.f32 %v618, %v936
    %v938 = vand.u32 %v937, 4294901760
    %v939 = vsub.f32 %v937, %v938
    %v940 = vand.u32 %v939, 4294901760
    %941 = vmatpush1.msra.mxu0 %v940
    %942 = vmatprep.subr.mxu0 0.0
    %v943 = vand.u32 %v619, 4294901760
    %v944 = vsub.f32 %v619, %v943
    %v945 = vand.u32 %v944, 4294901760
    %v946 = vsub.f32 %v944, %v945
    %v947 = vand.u32 %v946, 4294901760
    %948 = vmatpush1.msra.mxu0 %v947
    %949 = vmatprep.subr.mxu0 0.0
    %v950 = vand.u32 %v620, 4294901760
    %v951 = vsub.f32 %v620, %v950
    %v952 = vand.u32 %v951, 4294901760
    %v953 = vsub.f32 %v951, %v952
    %v954 = vand.u32 %v953, 4294901760
    %955 = vmatpush1.msra.mxu0 %v954
    %956 = vmatprep.subr.mxu0 0.0
    %v957 = vand.u32 %v621, 4294901760
    %v958 = vsub.f32 %v621, %v957
    %v959 = vand.u32 %v958, 4294901760
    %v960 = vsub.f32 %v958, %v959
    %v961 = vand.u32 %v960, 4294901760
    %962 = vmatpush1.msra.mxu0 %v961
    %963 = vmatprep.subr.mxu0 0.0
    %v964 = vand.u32 %v622, 4294901760
    %v965 = vsub.f32 %v622, %v964
    %v966 = vand.u32 %v965, 4294901760
    %v967 = vsub.f32 %v965, %v966
    %v968 = vand.u32 %v967, 4294901760
    %969 = vmatpush1.msra.mxu0 %v968
    %970 = vmatprep.subr.mxu0 0.0
    %v971 = vand.u32 %v623, 4294901760
    %v972 = vsub.f32 %v623, %v971
    %v973 = vand.u32 %v972, 4294901760
    %v974 = vsub.f32 %v972, %v973
    %v975 = vand.u32 %v974, 4294901760
    %976 = vmatpush1.msra.mxu0 %v975
    %977 = vmatprep.subr.mxu0 0.0
    %v978 = vand.u32 %v624, 4294901760
    %v979 = vsub.f32 %v624, %v978
    %v980 = vand.u32 %v979, 4294901760
    %v981 = vsub.f32 %v979, %v980
    %v982 = vand.u32 %v981, 4294901760
    %983 = vmatpush1.msra.mxu0 %v982
    %984 = vmatprep.subr.mxu0 0.0
    %v985 = vand.u32 %v625, 4294901760
    %v986 = vsub.f32 %v625, %v985
    %v987 = vand.u32 %v986, 4294901760
    %v988 = vsub.f32 %v986, %v987
    %v989 = vand.u32 %v988, 4294901760
    %990 = vmatpush1.msra.mxu0 %v989
    %991 = vmatprep.subr.mxu0 0.0
    %v992 = vand.u32 %v626, 4294901760
    %v993 = vsub.f32 %v626, %v992
    %v994 = vand.u32 %v993, 4294901760
    %v995 = vsub.f32 %v993, %v994
    %v996 = vand.u32 %v995, 4294901760
    %997 = vmatpush1.msra.mxu0 %v996
    %998 = vmatprep.subr.mxu0 0.0
    %v999 = vand.u32 %v627, 4294901760
    %v1000 = vsub.f32 %v627, %v999
    %v1001 = vand.u32 %v1000, 4294901760
    %v1002 = vsub.f32 %v1000, %v1001
    %v1003 = vand.u32 %v1002, 4294901760
    %1004 = vmatpush1.msra.mxu0 %v1003
    %1005 = vmatprep.subr.mxu0 0.0
    %v1006 = vand.u32 %v628, 4294901760
    %v1007 = vsub.f32 %v628, %v1006
    %v1008 = vand.u32 %v1007, 4294901760
    %v1009 = vsub.f32 %v1007, %v1008
    %v1010 = vand.u32 %v1009, 4294901760
    %1011 = vmatpush1.msra.mxu0 %v1010
    %1012 = vmatprep.subr.mxu0 0.0
    %v1013 = vand.u32 %v629, 4294901760
    %v1014 = vsub.f32 %v629, %v1013
    %v1015 = vand.u32 %v1014, 4294901760
    %v1016 = vsub.f32 %v1014, %v1015
    %v1017 = vand.u32 %v1016, 4294901760
    %1018 = vmatpush1.msra.mxu0 %v1017
    %1019 = vmatprep.subr.mxu0 0.0
    %v1020 = vand.u32 %v630, 4294901760
    %v1021 = vsub.f32 %v630, %v1020
    %v1022 = vand.u32 %v1021, 4294901760
    %v1023 = vsub.f32 %v1021, %v1022
    %v1024 = vand.u32 %v1023, 4294901760
    %1025 = vmatpush1.msra.mxu0 %v1024
    %1026 = vmatprep.subr.mxu0 0.0
    %v1027 = vand.u32 %v631, 4294901760
    %v1028 = vsub.f32 %v631, %v1027
    %v1029 = vand.u32 %v1028, 4294901760
    %v1030 = vsub.f32 %v1028, %v1029
    %v1031 = vand.u32 %v1030, 4294901760
    %1032 = vmatpush1.msra.mxu0 %v1031
    %1033 = vmatprep.subr.mxu0 0.0
    %v1034 = vand.u32 %v632, 4294901760
    %v1035 = vsub.f32 %v632, %v1034
    %v1036 = vand.u32 %v1035, 4294901760
    %v1037 = vsub.f32 %v1035, %v1036
    %v1038 = vand.u32 %v1037, 4294901760
    %1039 = vmatpush1.msra.mxu0 %v1038
    %1040 = vmatprep.subr.mxu0 0.0
    %v1041 = vand.u32 %v633, 4294901760
    %v1042 = vsub.f32 %v633, %v1041
    %v1043 = vand.u32 %v1042, 4294901760
    %v1044 = vsub.f32 %v1042, %v1043
    %v1045 = vand.u32 %v1044, 4294901760
    %1046 = vmatpush1.msra.mxu0 %v1045
    %1047 = vmatprep.subr.mxu0 0.0
    %v1048 = vand.u32 %v634, 4294901760
    %v1049 = vsub.f32 %v634, %v1048
    %v1050 = vand.u32 %v1049, 4294901760
    %v1051 = vsub.f32 %v1049, %v1050
    %v1052 = vand.u32 %v1051, 4294901760
    %1053 = vmatpush1.msra.mxu0 %v1052
    %1054 = vmatprep.subr.mxu0 0.0
    %v1055 = vand.u32 %v635, 4294901760
    %v1056 = vsub.f32 %v635, %v1055
    %v1057 = vand.u32 %v1056, 4294901760
    %v1058 = vsub.f32 %v1056, %v1057
    %v1059 = vand.u32 %v1058, 4294901760
    %1060 = vmatpush1.msra.mxu0 %v1059
    %1061 = vmatprep.subr.mxu0 0.0
    %v1062 = vand.u32 %v636, 4294901760
    %v1063 = vsub.f32 %v636, %v1062
    %v1064 = vand.u32 %v1063, 4294901760
    %v1065 = vsub.f32 %v1063, %v1064
    %v1066 = vand.u32 %v1065, 4294901760
    %1067 = vmatpush1.msra.mxu0 %v1066
    %1068 = vmatprep.subr.mxu0 0.0
    %v1069 = vand.u32 %v637, 4294901760
    %v1070 = vsub.f32 %v637, %v1069
    %v1071 = vand.u32 %v1070, 4294901760
    %v1072 = vsub.f32 %v1070, %v1071
    %v1073 = vand.u32 %v1072, 4294901760
    %1074 = vmatpush1.msra.mxu0 %v1073
    %1075 = vmatprep.subr.mxu0 0.0
    %v1076 = vand.u32 %v638, 4294901760
    %v1077 = vsub.f32 %v638, %v1076
    %v1078 = vand.u32 %v1077, 4294901760
    %v1079 = vsub.f32 %v1077, %v1078
    %v1080 = vand.u32 %v1079, 4294901760
    %1081 = vmatpush1.msra.mxu0 %v1080
    %1082 = vmatprep.subr.mxu0 0.0
    %v1083 = vand.u32 %v639, 4294901760
    %v1084 = vsub.f32 %v639, %v1083
    %v1085 = vand.u32 %v1084, 4294901760
    %v1086 = vsub.f32 %v1084, %v1085
    %v1087 = vand.u32 %v1086, 4294901760
    %1088 = vmatpush1.msra.mxu0 %v1087
    %1089 = vmatprep.subr.mxu0 0.0
    %v1090 = vand.u32 %v640, 4294901760
    %v1091 = vsub.f32 %v640, %v1090
    %v1092 = vand.u32 %v1091, 4294901760
    %v1093 = vsub.f32 %v1091, %v1092
    %v1094 = vand.u32 %v1093, 4294901760
    %1095 = vmatpush1.msra.mxu0 %v1094
    %1096 = vmatprep.subr.mxu0 0.0
    %v1097 = vand.u32 %v641, 4294901760
    %v1098 = vsub.f32 %v641, %v1097
    %v1099 = vand.u32 %v1098, 4294901760
    %v1100 = vsub.f32 %v1098, %v1099
    %v1101 = vand.u32 %v1100, 4294901760
    %1102 = vmatpush1.msra.mxu0 %v1101
    %1103 = vmatprep.subr.mxu0 0.0
    %v1104 = vand.u32 %v642, 4294901760
    %v1105 = vsub.f32 %v642, %v1104
    %v1106 = vand.u32 %v1105, 4294901760
    %v1107 = vsub.f32 %v1105, %v1106
    %v1108 = vand.u32 %v1107, 4294901760
    %1109 = vmatpush1.msra.mxu0 %v1108
    %1110 = vmatprep.subr.mxu0 0.0
    %v1111 = vand.u32 %v643, 4294901760
    %v1112 = vsub.f32 %v643, %v1111
    %v1113 = vand.u32 %v1112, 4294901760
    %v1114 = vsub.f32 %v1112, %v1113
    %v1115 = vand.u32 %v1114, 4294901760
    %1116 = vmatpush1.msra.mxu0 %v1115
    %v1117 = vand.u32 %v581, 4294901760
    %1118 = vmatprep.mubr.f32.mxu0 %v1117
    %v1119 = vand.u32 %v580, 4294901760
    %1120 = vmatmul.mubr.f32.gmra.mrb[0].mxu0 %v1119
    %v1121 = vpop.f32.mrb[0].mxu0
    %v1122 = vadd.f32 %v785, %v1121
    %v1123 = vpop.f32.mrb[0].mxu0
    %v1124 = vand.u32 %v585, 4294901760
    %1125 = vmatprep.mubr.f32.mxu0 %v1124
    %v1126 = vand.u32 %v584, 4294901760
    %1127 = vmatmul.mubr.f32.gmra.mrb[0].mxu0 %v1126
    %v1128 = vpop.f32.mrb[0].mxu0
    %v1129 = vadd.f32 %v800, %v1128
    %v1130 = vpop.f32.mrb[0].mxu0
    %v1131 = vand.u32 %v589, 4294901760
    %1132 = vmatprep.mubr.f32.mxu0 %v1131
    %v1133 = vand.u32 %v588, 4294901760
    %1134 = vmatmul.mubr.f32.gmra.mrb[0].mxu0 %v1133
    %v1135 = vpop.f32.mrb[0].mxu0
    %v1136 = vadd.f32 %v815, %v1135
    %v1137 = vpop.f32.mrb[0].mxu0
    %v1138 = vand.u32 %v593, 4294901760
    %1139 = vmatprep.mubr.f32.mxu0 %v1138
    %v1140 = vand.u32 %v592, 4294901760
    %1141 = vmatmul.mubr.f32.gmra.mrb[0].mxu0 %v1140
    %v1142 = vpop.f32.mrb[0].mxu0
    %v1143 = vadd.f32 %v830, %v1142
    %v1144 = vpop.f32.mrb[0].mxu0
    %v1145 = vand.u32 %v597, 4294901760
    %1146 = vmatprep.mubr.f32.mxu0 %v1145
    %v1147 = vand.u32 %v596, 4294901760
    %1148 = vmatmul.mubr.f32.gmra.mrb[0].mxu0 %v1147
    %v1149 = vpop.f32.mrb[0].mxu0
    %v1150 = vadd.f32 %v845, %v1149
    %v1151 = vpop.f32.mrb[0].mxu0
    %v1152 = vand.u32 %v601, 4294901760
    %1153 = vmatprep.mubr.f32.mxu0 %v1152
    %v1154 = vand.u32 %v600, 4294901760
    %1155 = vmatmul.mubr.f32.gmra.mrb[0].mxu0 %v1154
    %v1156 = vpop.f32.mrb[0].mxu0
    %v1157 = vadd.f32 %v860, %v1156
    %v1158 = vpop.f32.mrb[0].mxu0
    %v1159 = vand.u32 %v605, 4294901760
    %1160 = vmatprep.mubr.f32.mxu0 %v1159
    %v1161 = vand.u32 %v604, 4294901760
    %1162 = vmatmul.mubr.f32.gmra.mrb[0].mxu0 %v1161
    %v1163 = vpop.f32.mrb[0].mxu0
    %v1164 = vadd.f32 %v875, %v1163
    %v1165 = vpop.f32.mrb[0].mxu0
    %v1166 = vand.u32 %v609, 4294901760
    %1167 = vmatprep.mubr.f32.mxu0 %v1166
    %v1168 = vand.u32 %v608, 4294901760
    %1169 = vmatmul.mubr.f32.gmra.mrb[0].mxu0 %v1168
    %v1170 = vpop.f32.mrb[0].mxu0
    %v1171 = vadd.f32 %v890, %v1170
    %v1172 = vpop.f32.mrb[0].mxu0
    %1173 = vdwg.mxu0
    %1174 = vmatprep.subr.mxu0 0.0
    %v1175 = vand.u32 %v612, 4294901760
    %v1176 = vsub.f32 %v612, %v1175
    %1177 = vmatpush1.msra.mxu0 %v1176
    %1178 = vmatprep.subr.mxu0 0.0
    %v1179 = vand.u32 %v613, 4294901760
    %v1180 = vsub.f32 %v613, %v1179
    %1181 = vmatpush1.msra.mxu0 %v1180
    %1182 = vmatprep.subr.mxu0 0.0
    %v1183 = vand.u32 %v614, 4294901760
    %v1184 = vsub.f32 %v614, %v1183
    %1185 = vmatpush1.msra.mxu0 %v1184
    %1186 = vmatprep.subr.mxu0 0.0
    %v1187 = vand.u32 %v615, 4294901760
    %v1188 = vsub.f32 %v615, %v1187
    %1189 = vmatpush1.msra.mxu0 %v1188
    %1190 = vmatprep.subr.mxu0 0.0
    %v1191 = vand.u32 %v616, 4294901760
    %v1192 = vsub.f32 %v616, %v1191
    %1193 = vmatpush1.msra.mxu0 %v1192
    %1194 = vmatprep.subr.mxu0 0.0
    %v1195 = vand.u32 %v617, 4294901760
    %v1196 = vsub.f32 %v617, %v1195
    %1197 = vmatpush1.msra.mxu0 %v1196
    %1198 = vmatprep.subr.mxu0 0.0
    %v1199 = vand.u32 %v618, 4294901760
    %v1200 = vsub.f32 %v618, %v1199
    %1201 = vmatpush1.msra.mxu0 %v1200
    %1202 = vmatprep.subr.mxu0 0.0
    %v1203 = vand.u32 %v619, 4294901760
    %v1204 = vsub.f32 %v619, %v1203
    %1205 = vmatpush1.msra.mxu0 %v1204
    %1206 = vmatprep.subr.mxu0 0.0
    %v1207 = vand.u32 %v620, 4294901760
    %v1208 = vsub.f32 %v620, %v1207
    %1209 = vmatpush1.msra.mxu0 %v1208
    %1210 = vmatprep.subr.mxu0 0.0
    %v1211 = vand.u32 %v621, 4294901760
    %v1212 = vsub.f32 %v621, %v1211
    %1213 = vmatpush1.msra.mxu0 %v1212
    %1214 = vmatprep.subr.mxu0 0.0
    %v1215 = vand.u32 %v622, 4294901760
    %v1216 = vsub.f32 %v622, %v1215
    %1217 = vmatpush1.msra.mxu0 %v1216
    %1218 = vmatprep.subr.mxu0 0.0
    %v1219 = vand.u32 %v623, 4294901760
    %v1220 = vsub.f32 %v623, %v1219
    %1221 = vmatpush1.msra.mxu0 %v1220
    %1222 = vmatprep.subr.mxu0 0.0
    %v1223 = vand.u32 %v624, 4294901760
    %v1224 = vsub.f32 %v624, %v1223
    %1225 = vmatpush1.msra.mxu0 %v1224
    %1226 = vmatprep.subr.mxu0 0.0
    %v1227 = vand.u32 %v625, 4294901760
    %v1228 = vsub.f32 %v625, %v1227
    %1229 = vmatpush1.msra.mxu0 %v1228
    %1230 = vmatprep.subr.mxu0 0.0
    %v1231 = vand.u32 %v626, 4294901760
    %v1232 = vsub.f32 %v626, %v1231
    %1233 = vmatpush1.msra.mxu0 %v1232
    %1234 = vmatprep.subr.mxu0 0.0
    %v1235 = vand.u32 %v627, 4294901760
    %v1236 = vsub.f32 %v627, %v1235
    %1237 = vmatpush1.msra.mxu0 %v1236
    %1238 = vmatprep.subr.mxu0 0.0
    %v1239 = vand.u32 %v628, 4294901760
    %v1240 = vsub.f32 %v628, %v1239
    %1241 = vmatpush1.msra.mxu0 %v1240
    %1242 = vmatprep.subr.mxu0 0.0
    %v1243 = vand.u32 %v629, 4294901760
    %v1244 = vsub.f32 %v629, %v1243
    %1245 = vmatpush1.msra.mxu0 %v1244
    %1246 = vmatprep.subr.mxu0 0.0
    %v1247 = vand.u32 %v630, 4294901760
    %v1248 = vsub.f32 %v630, %v1247
    %1249 = vmatpush1.msra.mxu0 %v1248
    %1250 = vmatprep.subr.mxu0 0.0
    %v1251 = vand.u32 %v631, 4294901760
    %v1252 = vsub.f32 %v631, %v1251
    %1253 = vmatpush1.msra.mxu0 %v1252
    %1254 = vmatprep.subr.mxu0 0.0
    %v1255 = vand.u32 %v632, 4294901760
    %v1256 = vsub.f32 %v632, %v1255
    %1257 = vmatpush1.msra.mxu0 %v1256
    %1258 = vmatprep.subr.mxu0 0.0
    %v1259 = vand.u32 %v633, 4294901760
    %v1260 = vsub.f32 %v633, %v1259
    %1261 = vmatpush1.msra.mxu0 %v1260
    %1262 = vmatprep.subr.mxu0 0.0
    %v1263 = vand.u32 %v634, 4294901760
    %v1264 = vsub.f32 %v634, %v1263
    %1265 = vmatpush1.msra.mxu0 %v1264
    %1266 = vmatprep.subr.mxu0 0.0
    %v1267 = vand.u32 %v635, 4294901760
    %v1268 = vsub.f32 %v635, %v1267
    %1269 = vmatpush1.msra.mxu0 %v1268
    %1270 = vmatprep.subr.mxu0 0.0
    %v1271 = vand.u32 %v636, 4294901760
    %v1272 = vsub.f32 %v636, %v1271
    %1273 = vmatpush1.msra.mxu0 %v1272
    %1274 = vmatprep.subr.mxu0 0.0
    %v1275 = vand.u32 %v637, 4294901760
    %v1276 = vsub.f32 %v637, %v1275
    %1277 = vmatpush1.msra.mxu0 %v1276
    %1278 = vmatprep.subr.mxu0 0.0
    %v1279 = vand.u32 %v638, 4294901760
    %v1280 = vsub.f32 %v638, %v1279
    %1281 = vmatpush1.msra.mxu0 %v1280
    %1282 = vmatprep.subr.mxu0 0.0
    %v1283 = vand.u32 %v639, 4294901760
    %v1284 = vsub.f32 %v639, %v1283
    %1285 = vmatpush1.msra.mxu0 %v1284
    %1286 = vmatprep.subr.mxu0 0.0
    %v1287 = vand.u32 %v640, 4294901760
    %v1288 = vsub.f32 %v640, %v1287
    %1289 = vmatpush1.msra.mxu0 %v1288
    %1290 = vmatprep.subr.mxu0 0.0
    %v1291 = vand.u32 %v641, 4294901760
    %v1292 = vsub.f32 %v641, %v1291
    %1293 = vmatpush1.msra.mxu0 %v1292
    %1294 = vmatprep.subr.mxu0 0.0
    %v1295 = vand.u32 %v642, 4294901760
    %v1296 = vsub.f32 %v642, %v1295
    %1297 = vmatpush1.msra.mxu0 %v1296
    %1298 = vmatprep.subr.mxu0 0.0
    %v1299 = vand.u32 %v643, 4294901760
    %v1300 = vsub.f32 %v643, %v1299
    %1301 = vmatpush1.msra.mxu0 %v1300
    %v1302 = vand.u32 %v581, 4294901760
    %v1303 = vsub.f32 %v581, %v1302
    %1304 = vmatprep.mubr.f32.mxu0 %v1303
    %v1305 = vand.u32 %v580, 4294901760
    %v1306 = vsub.f32 %v580, %v1305
    %1307 = vmatmul.mubr.f32.gmra.mrb[0].mxu0 %v1306
    %v1308 = vpop.f32.mrb[0].mxu0
    %v1309 = vadd.f32 %v1122, %v1308
    %v1310 = vpop.f32.mrb[0].mxu0
    %v1311 = vand.u32 %v585, 4294901760
    %v1312 = vsub.f32 %v585, %v1311
    %1313 = vmatprep.mubr.f32.mxu0 %v1312
    %v1314 = vand.u32 %v584, 4294901760
    %v1315 = vsub.f32 %v584, %v1314
    %1316 = vmatmul.mubr.f32.gmra.mrb[0].mxu0 %v1315
    %v1317 = vpop.f32.mrb[0].mxu0
    %v1318 = vadd.f32 %v1129, %v1317
    %v1319 = vpop.f32.mrb[0].mxu0
    %v1320 = vand.u32 %v589, 4294901760
    %v1321 = vsub.f32 %v589, %v1320
    %1322 = vmatprep.mubr.f32.mxu0 %v1321
    %v1323 = vand.u32 %v588, 4294901760
    %v1324 = vsub.f32 %v588, %v1323
    %1325 = vmatmul.mubr.f32.gmra.mrb[0].mxu0 %v1324
    %v1326 = vpop.f32.mrb[0].mxu0
    %v1327 = vadd.f32 %v1136, %v1326
    %v1328 = vpop.f32.mrb[0].mxu0
    %v1329 = vand.u32 %v593, 4294901760
    %v1330 = vsub.f32 %v593, %v1329
    %1331 = vmatprep.mubr.f32.mxu0 %v1330
    %v1332 = vand.u32 %v592, 4294901760
    %v1333 = vsub.f32 %v592, %v1332
    %1334 = vmatmul.mubr.f32.gmra.mrb[0].mxu0 %v1333
    %v1335 = vpop.f32.mrb[0].mxu0
    %v1336 = vadd.f32 %v1143, %v1335
    %v1337 = vpop.f32.mrb[0].mxu0
    %v1338 = vand.u32 %v597, 4294901760
    %v1339 = vsub.f32 %v597, %v1338
    %1340 = vmatprep.mubr.f32.mxu0 %v1339
    %v1341 = vand.u32 %v596, 4294901760
    %v1342 = vsub.f32 %v596, %v1341
    %1343 = vmatmul.mubr.f32.gmra.mrb[0].mxu0 %v1342
    %v1344 = vpop.f32.mrb[0].mxu0
    %v1345 = vadd.f32 %v1150, %v1344
    %v1346 = vpop.f32.mrb[0].mxu0
    %v1347 = vand.u32 %v601, 4294901760
    %v1348 = vsub.f32 %v601, %v1347
    %1349 = vmatprep.mubr.f32.mxu0 %v1348
    %v1350 = vand.u32 %v600, 4294901760
    %v1351 = vsub.f32 %v600, %v1350
    %1352 = vmatmul.mubr.f32.gmra.mrb[0].mxu0 %v1351
    %v1353 = vpop.f32.mrb[0].mxu0
    %v1354 = vadd.f32 %v1157, %v1353
    %v1355 = vpop.f32.mrb[0].mxu0
    %v1356 = vand.u32 %v605, 4294901760
    %v1357 = vsub.f32 %v605, %v1356
    %1358 = vmatprep.mubr.f32.mxu0 %v1357
    %v1359 = vand.u32 %v604, 4294901760
    %v1360 = vsub.f32 %v604, %v1359
    %1361 = vmatmul.mubr.f32.gmra.mrb[0].mxu0 %v1360
    %v1362 = vpop.f32.mrb[0].mxu0
    %v1363 = vadd.f32 %v1164, %v1362
    %v1364 = vpop.f32.mrb[0].mxu0
    %v1365 = vand.u32 %v609, 4294901760
    %v1366 = vsub.f32 %v609, %v1365
    %1367 = vmatprep.mubr.f32.mxu0 %v1366
    %v1368 = vand.u32 %v608, 4294901760
    %v1369 = vsub.f32 %v608, %v1368
    %1370 = vmatmul.mubr.f32.gmra.mrb[0].mxu0 %v1369
    %v1371 = vpop.f32.mrb[0].mxu0
    %v1372 = vadd.f32 %v1171, %v1371
    %v1373 = vpop.f32.mrb[0].mxu0
    %1374 = vdwg.mxu0
    %1375 = vmatprep.subr.mxu0 0.0
    %v1376 = vand.u32 %v612, 4294901760
    %1377 = vmatpush1.msra.mxu0 %v1376
    %1378 = vmatprep.subr.mxu0 0.0
    %v1379 = vand.u32 %v613, 4294901760
    %1380 = vmatpush1.msra.mxu0 %v1379
    %1381 = vmatprep.subr.mxu0 0.0
    %v1382 = vand.u32 %v614, 4294901760
    %1383 = vmatpush1.msra.mxu0 %v1382
    %1384 = vmatprep.subr.mxu0 0.0
    %v1385 = vand.u32 %v615, 4294901760
    %1386 = vmatpush1.msra.mxu0 %v1385
    %1387 = vmatprep.subr.mxu0 0.0
    %v1388 = vand.u32 %v616, 4294901760
    %1389 = vmatpush1.msra.mxu0 %v1388
    %1390 = vmatprep.subr.mxu0 0.0
    %v1391 = vand.u32 %v617, 4294901760
    %1392 = vmatpush1.msra.mxu0 %v1391
    %1393 = vmatprep.subr.mxu0 0.0
    %v1394 = vand.u32 %v618, 4294901760
    %1395 = vmatpush1.msra.mxu0 %v1394
    %1396 = vmatprep.subr.mxu0 0.0
    %v1397 = vand.u32 %v619, 4294901760
    %1398 = vmatpush1.msra.mxu0 %v1397
    %1399 = vmatprep.subr.mxu0 0.0
    %v1400 = vand.u32 %v620, 4294901760
    %1401 = vmatpush1.msra.mxu0 %v1400
    %1402 = vmatprep.subr.mxu0 0.0
    %v1403 = vand.u32 %v621, 4294901760
    %1404 = vmatpush1.msra.mxu0 %v1403
    %1405 = vmatprep.subr.mxu0 0.0
    %v1406 = vand.u32 %v622, 4294901760
    %1407 = vmatpush1.msra.mxu0 %v1406
    %1408 = vmatprep.subr.mxu0 0.0
    %v1409 = vand.u32 %v623, 4294901760
    %1410 = vmatpush1.msra.mxu0 %v1409
    %1411 = vmatprep.subr.mxu0 0.0
    %v1412 = vand.u32 %v624, 4294901760
    %1413 = vmatpush1.msra.mxu0 %v1412
    %1414 = vmatprep.subr.mxu0 0.0
    %v1415 = vand.u32 %v625, 4294901760
    %1416 = vmatpush1.msra.mxu0 %v1415
    %1417 = vmatprep.subr.mxu0 0.0
    %v1418 = vand.u32 %v626, 4294901760
    %1419 = vmatpush1.msra.mxu0 %v1418
    %1420 = vmatprep.subr.mxu0 0.0
    %v1421 = vand.u32 %v627, 4294901760
    %1422 = vmatpush1.msra.mxu0 %v1421
    %1423 = vmatprep.subr.mxu0 0.0
    %v1424 = vand.u32 %v628, 4294901760
    %1425 = vmatpush1.msra.mxu0 %v1424
    %1426 = vmatprep.subr.mxu0 0.0
    %v1427 = vand.u32 %v629, 4294901760
    %1428 = vmatpush1.msra.mxu0 %v1427
    %1429 = vmatprep.subr.mxu0 0.0
    %v1430 = vand.u32 %v630, 4294901760
    %1431 = vmatpush1.msra.mxu0 %v1430
    %1432 = vmatprep.subr.mxu0 0.0
    %v1433 = vand.u32 %v631, 4294901760
    %1434 = vmatpush1.msra.mxu0 %v1433
    %1435 = vmatprep.subr.mxu0 0.0
    %v1436 = vand.u32 %v632, 4294901760
    %1437 = vmatpush1.msra.mxu0 %v1436
    %1438 = vmatprep.subr.mxu0 0.0
    %v1439 = vand.u32 %v633, 4294901760
    %1440 = vmatpush1.msra.mxu0 %v1439
    %1441 = vmatprep.subr.mxu0 0.0
    %v1442 = vand.u32 %v634, 4294901760
    %1443 = vmatpush1.msra.mxu0 %v1442
    %1444 = vmatprep.subr.mxu0 0.0
    %v1445 = vand.u32 %v635, 4294901760
    %1446 = vmatpush1.msra.mxu0 %v1445
    %1447 = vmatprep.subr.mxu0 0.0
    %v1448 = vand.u32 %v636, 4294901760
    %1449 = vmatpush1.msra.mxu0 %v1448
    %1450 = vmatprep.subr.mxu0 0.0
    %v1451 = vand.u32 %v637, 4294901760
    %1452 = vmatpush1.msra.mxu0 %v1451
    %1453 = vmatprep.subr.mxu0 0.0
    %v1454 = vand.u32 %v638, 4294901760
    %1455 = vmatpush1.msra.mxu0 %v1454
    %1456 = vmatprep.subr.mxu0 0.0
    %v1457 = vand.u32 %v639, 4294901760
    %1458 = vmatpush1.msra.mxu0 %v1457
    %1459 = vmatprep.subr.mxu0 0.0
    %v1460 = vand.u32 %v640, 4294901760
    %1461 = vmatpush1.msra.mxu0 %v1460
    %1462 = vmatprep.subr.mxu0 0.0
    %v1463 = vand.u32 %v641, 4294901760
    %1464 = vmatpush1.msra.mxu0 %v1463
    %1465 = vmatprep.subr.mxu0 0.0
    %v1466 = vand.u32 %v642, 4294901760
    %1467 = vmatpush1.msra.mxu0 %v1466
    %1468 = vmatprep.subr.mxu0 0.0
    %v1469 = vand.u32 %v643, 4294901760
    %1470 = vmatpush1.msra.mxu0 %v1469
    %v1471 = vand.u32 %v581, 4294901760
    %v1472 = vsub.f32 %v581, %v1471
    %v1473 = vand.u32 %v1472, 4294901760
    %1474 = vmatprep.mubr.f32.mxu0 %v1473
    %v1475 = vand.u32 %v580, 4294901760
    %v1476 = vsub.f32 %v580, %v1475
    %v1477 = vand.u32 %v1476, 4294901760
    %1478 = vmatmul.mubr.f32.gmra.mrb[0].mxu0 %v1477
    %v1479 = vpop.f32.mrb[0].mxu0
    %v1480 = vadd.f32 %v1309, %v1479
    %v1481 = vpop.f32.mrb[0].mxu0
    %v1482 = vand.u32 %v585, 4294901760
    %v1483 = vsub.f32 %v585, %v1482
    %v1484 = vand.u32 %v1483, 4294901760
    %1485 = vmatprep.mubr.f32.mxu0 %v1484
    %v1486 = vand.u32 %v584, 4294901760
    %v1487 = vsub.f32 %v584, %v1486
    %v1488 = vand.u32 %v1487, 4294901760
    %1489 = vmatmul.mubr.f32.gmra.mrb[0].mxu0 %v1488
    %v1490 = vpop.f32.mrb[0].mxu0
    %v1491 = vadd.f32 %v1318, %v1490
    %v1492 = vpop.f32.mrb[0].mxu0
    %v1493 = vand.u32 %v589, 4294901760
    %v1494 = vsub.f32 %v589, %v1493
    %v1495 = vand.u32 %v1494, 4294901760
    %1496 = vmatprep.mubr.f32.mxu0 %v1495
    %v1497 = vand.u32 %v588, 4294901760
    %v1498 = vsub.f32 %v588, %v1497
    %v1499 = vand.u32 %v1498, 4294901760
    %1500 = vmatmul.mubr.f32.gmra.mrb[0].mxu0 %v1499
    %v1501 = vpop.f32.mrb[0].mxu0
    %v1502 = vadd.f32 %v1327, %v1501
    %v1503 = vpop.f32.mrb[0].mxu0
    %v1504 = vand.u32 %v593, 4294901760
    %v1505 = vsub.f32 %v593, %v1504
    %v1506 = vand.u32 %v1505, 4294901760
    %1507 = vmatprep.mubr.f32.mxu0 %v1506
    %v1508 = vand.u32 %v592, 4294901760
    %v1509 = vsub.f32 %v592, %v1508
    %v1510 = vand.u32 %v1509, 4294901760
    %1511 = vmatmul.mubr.f32.gmra.mrb[0].mxu0 %v1510
    %v1512 = vpop.f32.mrb[0].mxu0
    %v1513 = vadd.f32 %v1336, %v1512
    %v1514 = vpop.f32.mrb[0].mxu0
    %v1515 = vand.u32 %v597, 4294901760
    %v1516 = vsub.f32 %v597, %v1515
    %v1517 = vand.u32 %v1516, 4294901760
    %1518 = vmatprep.mubr.f32.mxu0 %v1517
    %v1519 = vand.u32 %v596, 4294901760
    %v1520 = vsub.f32 %v596, %v1519
    %v1521 = vand.u32 %v1520, 4294901760
    %1522 = vmatmul.mubr.f32.gmra.mrb[0].mxu0 %v1521
    %v1523 = vpop.f32.mrb[0].mxu0
    %v1524 = vadd.f32 %v1345, %v1523
    %v1525 = vpop.f32.mrb[0].mxu0
    %v1526 = vand.u32 %v601, 4294901760
    %v1527 = vsub.f32 %v601, %v1526
    %v1528 = vand.u32 %v1527, 4294901760
    %1529 = vmatprep.mubr.f32.mxu0 %v1528
    %v1530 = vand.u32 %v600, 4294901760
    %v1531 = vsub.f32 %v600, %v1530
    %v1532 = vand.u32 %v1531, 4294901760
    %1533 = vmatmul.mubr.f32.gmra.mrb[0].mxu0 %v1532
    %v1534 = vpop.f32.mrb[0].mxu0
    %v1535 = vadd.f32 %v1354, %v1534
    %v1536 = vpop.f32.mrb[0].mxu0
    %v1537 = vand.u32 %v605, 4294901760
    %v1538 = vsub.f32 %v605, %v1537
    %v1539 = vand.u32 %v1538, 4294901760
    %1540 = vmatprep.mubr.f32.mxu0 %v1539
    %v1541 = vand.u32 %v604, 4294901760
    %v1542 = vsub.f32 %v604, %v1541
    %v1543 = vand.u32 %v1542, 4294901760
    %1544 = vmatmul.mubr.f32.gmra.mrb[0].mxu0 %v1543
    %v1545 = vpop.f32.mrb[0].mxu0
    %v1546 = vadd.f32 %v1363, %v1545
    %v1547 = vpop.f32.mrb[0].mxu0
    %v1548 = vand.u32 %v609, 4294901760
    %v1549 = vsub.f32 %v609, %v1548
    %v1550 = vand.u32 %v1549, 4294901760
    %1551 = vmatprep.mubr.f32.mxu0 %v1550
    %v1552 = vand.u32 %v608, 4294901760
    %v1553 = vsub.f32 %v608, %v1552
    %v1554 = vand.u32 %v1553, 4294901760
    %1555 = vmatmul.mubr.f32.gmra.mrb[0].mxu0 %v1554
    %v1556 = vpop.f32.mrb[0].mxu0
    %v1557 = vadd.f32 %v1372, %v1556
    %v1558 = vpop.f32.mrb[0].mxu0
    %1559 = vdwg.mxu0
    %1560 = vmatprep.subr.mxu0 0.0
    %v1561 = vand.u32 %v612, 4294901760
    %v1562 = vsub.f32 %v612, %v1561
    %v1563 = vand.u32 %v1562, 4294901760
    %1564 = vmatpush1.msra.mxu0 %v1563
    %1565 = vmatprep.subr.mxu0 0.0
    %v1566 = vand.u32 %v613, 4294901760
    %v1567 = vsub.f32 %v613, %v1566
    %v1568 = vand.u32 %v1567, 4294901760
    %1569 = vmatpush1.msra.mxu0 %v1568
    %1570 = vmatprep.subr.mxu0 0.0
    %v1571 = vand.u32 %v614, 4294901760
    %v1572 = vsub.f32 %v614, %v1571
    %v1573 = vand.u32 %v1572, 4294901760
    %1574 = vmatpush1.msra.mxu0 %v1573
    %1575 = vmatprep.subr.mxu0 0.0
    %v1576 = vand.u32 %v615, 4294901760
    %v1577 = vsub.f32 %v615, %v1576
    %v1578 = vand.u32 %v1577, 4294901760
    %1579 = vmatpush1.msra.mxu0 %v1578
    %1580 = vmatprep.subr.mxu0 0.0
    %v1581 = vand.u32 %v616, 4294901760
    %v1582 = vsub.f32 %v616, %v1581
    %v1583 = vand.u32 %v1582, 4294901760
    %1584 = vmatpush1.msra.mxu0 %v1583
    %1585 = vmatprep.subr.mxu0 0.0
    %v1586 = vand.u32 %v617, 4294901760
    %v1587 = vsub.f32 %v617, %v1586
    %v1588 = vand.u32 %v1587, 4294901760
    %1589 = vmatpush1.msra.mxu0 %v1588
    %1590 = vmatprep.subr.mxu0 0.0
    %v1591 = vand.u32 %v618, 4294901760
    %v1592 = vsub.f32 %v618, %v1591
    %v1593 = vand.u32 %v1592, 4294901760
    %1594 = vmatpush1.msra.mxu0 %v1593
    %1595 = vmatprep.subr.mxu0 0.0
    %v1596 = vand.u32 %v619, 4294901760
    %v1597 = vsub.f32 %v619, %v1596
    %v1598 = vand.u32 %v1597, 4294901760
    %1599 = vmatpush1.msra.mxu0 %v1598
    %1600 = vmatprep.subr.mxu0 0.0
    %v1601 = vand.u32 %v620, 4294901760
    %v1602 = vsub.f32 %v620, %v1601
    %v1603 = vand.u32 %v1602, 4294901760
    %1604 = vmatpush1.msra.mxu0 %v1603
    %1605 = vmatprep.subr.mxu0 0.0
    %v1606 = vand.u32 %v621, 4294901760
    %v1607 = vsub.f32 %v621, %v1606
    %v1608 = vand.u32 %v1607, 4294901760
    %1609 = vmatpush1.msra.mxu0 %v1608
    %1610 = vmatprep.subr.mxu0 0.0
    %v1611 = vand.u32 %v622, 4294901760
    %v1612 = vsub.f32 %v622, %v1611
    %v1613 = vand.u32 %v1612, 4294901760
    %1614 = vmatpush1.msra.mxu0 %v1613
    %1615 = vmatprep.subr.mxu0 0.0
    %v1616 = vand.u32 %v623, 4294901760
    %v1617 = vsub.f32 %v623, %v1616
    %v1618 = vand.u32 %v1617, 4294901760
    %1619 = vmatpush1.msra.mxu0 %v1618
    %1620 = vmatprep.subr.mxu0 0.0
    %v1621 = vand.u32 %v624, 4294901760
    %v1622 = vsub.f32 %v624, %v1621
    %v1623 = vand.u32 %v1622, 4294901760
    %1624 = vmatpush1.msra.mxu0 %v1623
    %1625 = vmatprep.subr.mxu0 0.0
    %v1626 = vand.u32 %v625, 4294901760
    %v1627 = vsub.f32 %v625, %v1626
    %v1628 = vand.u32 %v1627, 4294901760
    %1629 = vmatpush1.msra.mxu0 %v1628
    %1630 = vmatprep.subr.mxu0 0.0
    %v1631 = vand.u32 %v626, 4294901760
    %v1632 = vsub.f32 %v626, %v1631
    %v1633 = vand.u32 %v1632, 4294901760
    %1634 = vmatpush1.msra.mxu0 %v1633
    %1635 = vmatprep.subr.mxu0 0.0
    %v1636 = vand.u32 %v627, 4294901760
    %v1637 = vsub.f32 %v627, %v1636
    %v1638 = vand.u32 %v1637, 4294901760
    %1639 = vmatpush1.msra.mxu0 %v1638
    %1640 = vmatprep.subr.mxu0 0.0
    %v1641 = vand.u32 %v628, 4294901760
    %v1642 = vsub.f32 %v628, %v1641
    %v1643 = vand.u32 %v1642, 4294901760
    %1644 = vmatpush1.msra.mxu0 %v1643
    %1645 = vmatprep.subr.mxu0 0.0
    %v1646 = vand.u32 %v629, 4294901760
    %v1647 = vsub.f32 %v629, %v1646
    %v1648 = vand.u32 %v1647, 4294901760
    %1649 = vmatpush1.msra.mxu0 %v1648
    %1650 = vmatprep.subr.mxu0 0.0
    %v1651 = vand.u32 %v630, 4294901760
    %v1652 = vsub.f32 %v630, %v1651
    %v1653 = vand.u32 %v1652, 4294901760
    %1654 = vmatpush1.msra.mxu0 %v1653
    %1655 = vmatprep.subr.mxu0 0.0
    %v1656 = vand.u32 %v631, 4294901760
    %v1657 = vsub.f32 %v631, %v1656
    %v1658 = vand.u32 %v1657, 4294901760
    %1659 = vmatpush1.msra.mxu0 %v1658
    %1660 = vmatprep.subr.mxu0 0.0
    %v1661 = vand.u32 %v632, 4294901760
    %v1662 = vsub.f32 %v632, %v1661
    %v1663 = vand.u32 %v1662, 4294901760
    %1664 = vmatpush1.msra.mxu0 %v1663
    %1665 = vmatprep.subr.mxu0 0.0
    %v1666 = vand.u32 %v633, 4294901760
    %v1667 = vsub.f32 %v633, %v1666
    %v1668 = vand.u32 %v1667, 4294901760
    %1669 = vmatpush1.msra.mxu0 %v1668
    %1670 = vmatprep.subr.mxu0 0.0
    %v1671 = vand.u32 %v634, 4294901760
    %v1672 = vsub.f32 %v634, %v1671
    %v1673 = vand.u32 %v1672, 4294901760
    %1674 = vmatpush1.msra.mxu0 %v1673
    %1675 = vmatprep.subr.mxu0 0.0
    %v1676 = vand.u32 %v635, 4294901760
    %v1677 = vsub.f32 %v635, %v1676
    %v1678 = vand.u32 %v1677, 4294901760
    %1679 = vmatpush1.msra.mxu0 %v1678
    %1680 = vmatprep.subr.mxu0 0.0
    %v1681 = vand.u32 %v636, 4294901760
    %v1682 = vsub.f32 %v636, %v1681
    %v1683 = vand.u32 %v1682, 4294901760
    %1684 = vmatpush1.msra.mxu0 %v1683
    %1685 = vmatprep.subr.mxu0 0.0
    %v1686 = vand.u32 %v637, 4294901760
    %v1687 = vsub.f32 %v637, %v1686
    %v1688 = vand.u32 %v1687, 4294901760
    %1689 = vmatpush1.msra.mxu0 %v1688
    %1690 = vmatprep.subr.mxu0 0.0
    %v1691 = vand.u32 %v638, 4294901760
    %v1692 = vsub.f32 %v638, %v1691
    %v1693 = vand.u32 %v1692, 4294901760
    %1694 = vmatpush1.msra.mxu0 %v1693
    %1695 = vmatprep.subr.mxu0 0.0
    %v1696 = vand.u32 %v639, 4294901760
    %v1697 = vsub.f32 %v639, %v1696
    %v1698 = vand.u32 %v1697, 4294901760
    %1699 = vmatpush1.msra.mxu0 %v1698
    %1700 = vmatprep.subr.mxu0 0.0
    %v1701 = vand.u32 %v640, 4294901760
    %v1702 = vsub.f32 %v640, %v1701
    %v1703 = vand.u32 %v1702, 4294901760
    %1704 = vmatpush1.msra.mxu0 %v1703
    %1705 = vmatprep.subr.mxu0 0.0
    %v1706 = vand.u32 %v641, 4294901760
    %v1707 = vsub.f32 %v641, %v1706
    %v1708 = vand.u32 %v1707, 4294901760
    %1709 = vmatpush1.msra.mxu0 %v1708
    %1710 = vmatprep.subr.mxu0 0.0
    %v1711 = vand.u32 %v642, 4294901760
    %v1712 = vsub.f32 %v642, %v1711
    %v1713 = vand.u32 %v1712, 4294901760
    %1714 = vmatpush1.msra.mxu0 %v1713
    %1715 = vmatprep.subr.mxu0 0.0
    %v1716 = vand.u32 %v643, 4294901760
    %v1717 = vsub.f32 %v643, %v1716
    %v1718 = vand.u32 %v1717, 4294901760
    %1719 = vmatpush1.msra.mxu0 %v1718
    %v1720 = vand.u32 %v581, 4294901760
    %1721 = vmatprep.mubr.f32.mxu0 %v1720
    %v1722 = vand.u32 %v580, 4294901760
    %1723 = vmatmul.mubr.f32.gmra.mrb[0].mxu0 %v1722
    %v1724 = vpop.f32.mrb[0].mxu0
    %v1725 = vadd.f32 %v1480, %v1724
    %v1726 = vpop.f32.mrb[0].mxu0
    %v1727 = vand.u32 %v585, 4294901760
    %1728 = vmatprep.mubr.f32.mxu0 %v1727
    %v1729 = vand.u32 %v584, 4294901760
    %1730 = vmatmul.mubr.f32.gmra.mrb[0].mxu0 %v1729
    %v1731 = vpop.f32.mrb[0].mxu0
    %v1732 = vadd.f32 %v1491, %v1731
    %v1733 = vpop.f32.mrb[0].mxu0
    %v1734 = vand.u32 %v589, 4294901760
    %1735 = vmatprep.mubr.f32.mxu0 %v1734
    %v1736 = vand.u32 %v588, 4294901760
    %1737 = vmatmul.mubr.f32.gmra.mrb[0].mxu0 %v1736
    %v1738 = vpop.f32.mrb[0].mxu0
    %v1739 = vadd.f32 %v1502, %v1738
    %v1740 = vpop.f32.mrb[0].mxu0
    %v1741 = vand.u32 %v593, 4294901760
    %1742 = vmatprep.mubr.f32.mxu0 %v1741
    %v1743 = vand.u32 %v592, 4294901760
    %1744 = vmatmul.mubr.f32.gmra.mrb[0].mxu0 %v1743
    %v1745 = vpop.f32.mrb[0].mxu0
    %v1746 = vadd.f32 %v1513, %v1745
    %v1747 = vpop.f32.mrb[0].mxu0
    %v1748 = vand.u32 %v597, 4294901760
    %1749 = vmatprep.mubr.f32.mxu0 %v1748
    %v1750 = vand.u32 %v596, 4294901760
    %1751 = vmatmul.mubr.f32.gmra.mrb[0].mxu0 %v1750
    %v1752 = vpop.f32.mrb[0].mxu0
    %v1753 = vadd.f32 %v1524, %v1752
    %v1754 = vpop.f32.mrb[0].mxu0
    %v1755 = vand.u32 %v601, 4294901760
    %1756 = vmatprep.mubr.f32.mxu0 %v1755
    %v1757 = vand.u32 %v600, 4294901760
    %1758 = vmatmul.mubr.f32.gmra.mrb[0].mxu0 %v1757
    %v1759 = vpop.f32.mrb[0].mxu0
    %v1760 = vadd.f32 %v1535, %v1759
    %v1761 = vpop.f32.mrb[0].mxu0
    %v1762 = vand.u32 %v605, 4294901760
    %1763 = vmatprep.mubr.f32.mxu0 %v1762
    %v1764 = vand.u32 %v604, 4294901760
    %1765 = vmatmul.mubr.f32.gmra.mrb[0].mxu0 %v1764
    %v1766 = vpop.f32.mrb[0].mxu0
    %v1767 = vadd.f32 %v1546, %v1766
    %v1768 = vpop.f32.mrb[0].mxu0
    %v1769 = vand.u32 %v609, 4294901760
    %1770 = vmatprep.mubr.f32.mxu0 %v1769
    %v1771 = vand.u32 %v608, 4294901760
    %1772 = vmatmul.mubr.f32.gmra.mrb[0].mxu0 %v1771
    %v1773 = vpop.f32.mrb[0].mxu0
    %v1774 = vadd.f32 %v1557, %v1773
    %v1775 = vpop.f32.mrb[0].mxu0
    %1776 = vdwg.mxu0
    %1777 = vmatprep.subr.mxu0 0.0
    %v1778 = vand.u32 %v612, 4294901760
    %1779 = vmatpush1.msra.mxu0 %v1778
    %1780 = vmatprep.subr.mxu0 0.0
    %v1781 = vand.u32 %v613, 4294901760
    %1782 = vmatpush1.msra.mxu0 %v1781
    %1783 = vmatprep.subr.mxu0 0.0
    %v1784 = vand.u32 %v614, 4294901760
    %1785 = vmatpush1.msra.mxu0 %v1784
    %1786 = vmatprep.subr.mxu0 0.0
    %v1787 = vand.u32 %v615, 4294901760
    %1788 = vmatpush1.msra.mxu0 %v1787
    %1789 = vmatprep.subr.mxu0 0.0
    %v1790 = vand.u32 %v616, 4294901760
    %1791 = vmatpush1.msra.mxu0 %v1790
    %1792 = vmatprep.subr.mxu0 0.0
    %v1793 = vand.u32 %v617, 4294901760
    %1794 = vmatpush1.msra.mxu0 %v1793
    %1795 = vmatprep.subr.mxu0 0.0
    %v1796 = vand.u32 %v618, 4294901760
    %1797 = vmatpush1.msra.mxu0 %v1796
    %1798 = vmatprep.subr.mxu0 0.0
    %v1799 = vand.u32 %v619, 4294901760
    %1800 = vmatpush1.msra.mxu0 %v1799
    %1801 = vmatprep.subr.mxu0 0.0
    %v1802 = vand.u32 %v620, 4294901760
    %1803 = vmatpush1.msra.mxu0 %v1802
    %1804 = vmatprep.subr.mxu0 0.0
    %v1805 = vand.u32 %v621, 4294901760
    %1806 = vmatpush1.msra.mxu0 %v1805
    %1807 = vmatprep.subr.mxu0 0.0
    %v1808 = vand.u32 %v622, 4294901760
    %1809 = vmatpush1.msra.mxu0 %v1808
    %1810 = vmatprep.subr.mxu0 0.0
    %v1811 = vand.u32 %v623, 4294901760
    %1812 = vmatpush1.msra.mxu0 %v1811
    %1813 = vmatprep.subr.mxu0 0.0
    %v1814 = vand.u32 %v624, 4294901760
    %1815 = vmatpush1.msra.mxu0 %v1814
    %1816 = vmatprep.subr.mxu0 0.0
    %v1817 = vand.u32 %v625, 4294901760
    %1818 = vmatpush1.msra.mxu0 %v1817
    %1819 = vmatprep.subr.mxu0 0.0
    %v1820 = vand.u32 %v626, 4294901760
    %1821 = vmatpush1.msra.mxu0 %v1820
    %1822 = vmatprep.subr.mxu0 0.0
    %v1823 = vand.u32 %v627, 4294901760
    %1824 = vmatpush1.msra.mxu0 %v1823
    %1825 = vmatprep.subr.mxu0 0.0
    %v1826 = vand.u32 %v628, 4294901760
    %1827 = vmatpush1.msra.mxu0 %v1826
    %1828 = vmatprep.subr.mxu0 0.0
    %v1829 = vand.u32 %v629, 4294901760
    %1830 = vmatpush1.msra.mxu0 %v1829
    %1831 = vmatprep.subr.mxu0 0.0
    %v1832 = vand.u32 %v630, 4294901760
    %1833 = vmatpush1.msra.mxu0 %v1832
    %1834 = vmatprep.subr.mxu0 0.0
    %v1835 = vand.u32 %v631, 4294901760
    %1836 = vmatpush1.msra.mxu0 %v1835
    %1837 = vmatprep.subr.mxu0 0.0
    %v1838 = vand.u32 %v632, 4294901760
    %1839 = vmatpush1.msra.mxu0 %v1838
    %1840 = vmatprep.subr.mxu0 0.0
    %v1841 = vand.u32 %v633, 4294901760
    %1842 = vmatpush1.msra.mxu0 %v1841
    %1843 = vmatprep.subr.mxu0 0.0
    %v1844 = vand.u32 %v634, 4294901760
    %1845 = vmatpush1.msra.mxu0 %v1844
    %1846 = vmatprep.subr.mxu0 0.0
    %v1847 = vand.u32 %v635, 4294901760
    %1848 = vmatpush1.msra.mxu0 %v1847
    %1849 = vmatprep.subr.mxu0 0.0
    %v1850 = vand.u32 %v636, 4294901760
    %1851 = vmatpush1.msra.mxu0 %v1850
    %1852 = vmatprep.subr.mxu0 0.0
    %v1853 = vand.u32 %v637, 4294901760
    %1854 = vmatpush1.msra.mxu0 %v1853
    %1855 = vmatprep.subr.mxu0 0.0
    %v1856 = vand.u32 %v638, 4294901760
    %1857 = vmatpush1.msra.mxu0 %v1856
    %1858 = vmatprep.subr.mxu0 0.0
    %v1859 = vand.u32 %v639, 4294901760
    %1860 = vmatpush1.msra.mxu0 %v1859
    %1861 = vmatprep.subr.mxu0 0.0
    %v1862 = vand.u32 %v640, 4294901760
    %1863 = vmatpush1.msra.mxu0 %v1862
    %1864 = vmatprep.subr.mxu0 0.0
    %v1865 = vand.u32 %v641, 4294901760
    %1866 = vmatpush1.msra.mxu0 %v1865
    %1867 = vmatprep.subr.mxu0 0.0
    %v1868 = vand.u32 %v642, 4294901760
    %1869 = vmatpush1.msra.mxu0 %v1868
    %1870 = vmatprep.subr.mxu0 0.0
    %v1871 = vand.u32 %v643, 4294901760
    %1872 = vmatpush1.msra.mxu0 %v1871
    %v1873 = vand.u32 %v581, 4294901760
    %1874 = vmatprep.mubr.f32.mxu0 %v1873
    %v1875 = vand.u32 %v580, 4294901760
    %1876 = vmatmul.mubr.f32.gmra.mrb[0].mxu0 %v1875
    %v1877 = vpop.f32.mrb[0].mxu0
    %v1878 = vadd.f32 %v1725, %v1877
    %v1879 = vpop.f32.mrb[0].mxu0
    %v1880 = vand.u32 %v585, 4294901760
    %1881 = vmatprep.mubr.f32.mxu0 %v1880
    %v1882 = vand.u32 %v584, 4294901760
    %1883 = vmatmul.mubr.f32.gmra.mrb[0].mxu0 %v1882
    %v1884 = vpop.f32.mrb[0].mxu0
    %v1885 = vadd.f32 %v1732, %v1884
    %v1886 = vpop.f32.mrb[0].mxu0
    %v1887 = vand.u32 %v589, 4294901760
    %1888 = vmatprep.mubr.f32.mxu0 %v1887
    %v1889 = vand.u32 %v588, 4294901760
    %1890 = vmatmul.mubr.f32.gmra.mrb[0].mxu0 %v1889
    %v1891 = vpop.f32.mrb[0].mxu0
    %v1892 = vadd.f32 %v1739, %v1891
    %v1893 = vpop.f32.mrb[0].mxu0
    %v1894 = vand.u32 %v593, 4294901760
    %1895 = vmatprep.mubr.f32.mxu0 %v1894
    %v1896 = vand.u32 %v592, 4294901760
    %1897 = vmatmul.mubr.f32.gmra.mrb[0].mxu0 %v1896
    %v1898 = vpop.f32.mrb[0].mxu0
    %v1899 = vadd.f32 %v1746, %v1898
    %v1900 = vpop.f32.mrb[0].mxu0
    %v1901 = vand.u32 %v597, 4294901760
    %1902 = vmatprep.mubr.f32.mxu0 %v1901
    %v1903 = vand.u32 %v596, 4294901760
    %1904 = vmatmul.mubr.f32.gmra.mrb[0].mxu0 %v1903
    %v1905 = vpop.f32.mrb[0].mxu0
    %v1906 = vadd.f32 %v1753, %v1905
    %v1907 = vpop.f32.mrb[0].mxu0
    %v1908 = vand.u32 %v601, 4294901760
    %1909 = vmatprep.mubr.f32.mxu0 %v1908
    %v1910 = vand.u32 %v600, 4294901760
    %1911 = vmatmul.mubr.f32.gmra.mrb[0].mxu0 %v1910
    %v1912 = vpop.f32.mrb[0].mxu0
    %v1913 = vadd.f32 %v1760, %v1912
    %v1914 = vpop.f32.mrb[0].mxu0
    %v1915 = vand.u32 %v605, 4294901760
    %1916 = vmatprep.mubr.f32.mxu0 %v1915
    %v1917 = vand.u32 %v604, 4294901760
    %1918 = vmatmul.mubr.f32.gmra.mrb[0].mxu0 %v1917
    %v1919 = vpop.f32.mrb[0].mxu0
    %v1920 = vadd.f32 %v1767, %v1919
    %v1921 = vpop.f32.mrb[0].mxu0
    %v1922 = vand.u32 %v609, 4294901760
    %1923 = vmatprep.mubr.f32.mxu0 %v1922
    %v1924 = vand.u32 %v608, 4294901760
    %1925 = vmatmul.mubr.f32.gmra.mrb[0].mxu0 %v1924
    %v1926 = vpop.f32.mrb[0].mxu0
    %v1927 = vadd.f32 %v1774, %v1926
    %v1928 = vpop.f32.mrb[0].mxu0
    %1929 = vdwg.mxu0
    %1930 = vmatprep.subr.mxu0 0.0
    %v1931 = vand.u32 %v644, 4294901760
    %1932 = vmatpush1.msra.mxu0 %v1931
    %1933 = vmatprep.subr.mxu0 0.0
    %v1934 = vand.u32 %v645, 4294901760
    %1935 = vmatpush1.msra.mxu0 %v1934
    %1936 = vmatprep.subr.mxu0 0.0
    %v1937 = vand.u32 %v646, 4294901760
    %1938 = vmatpush1.msra.mxu0 %v1937
    %1939 = vmatprep.subr.mxu0 0.0
    %v1940 = vand.u32 %v647, 4294901760
    %1941 = vmatpush1.msra.mxu0 %v1940
    %1942 = vmatprep.subr.mxu0 0.0
    %v1943 = vand.u32 %v648, 4294901760
    %1944 = vmatpush1.msra.mxu0 %v1943
    %1945 = vmatprep.subr.mxu0 0.0
    %v1946 = vand.u32 %v649, 4294901760
    %1947 = vmatpush1.msra.mxu0 %v1946
    %1948 = vmatprep.subr.mxu0 0.0
    %v1949 = vand.u32 %v650, 4294901760
    %1950 = vmatpush1.msra.mxu0 %v1949
    %1951 = vmatprep.subr.mxu0 0.0
    %v1952 = vand.u32 %v651, 4294901760
    %1953 = vmatpush1.msra.mxu0 %v1952
    %1954 = vmatprep.subr.mxu0 0.0
    %v1955 = vand.u32 %v652, 4294901760
    %1956 = vmatpush1.msra.mxu0 %v1955
    %1957 = vmatprep.subr.mxu0 0.0
    %v1958 = vand.u32 %v653, 4294901760
    %1959 = vmatpush1.msra.mxu0 %v1958
    %1960 = vmatprep.subr.mxu0 0.0
    %v1961 = vand.u32 %v654, 4294901760
    %1962 = vmatpush1.msra.mxu0 %v1961
    %1963 = vmatprep.subr.mxu0 0.0
    %v1964 = vand.u32 %v655, 4294901760
    %1965 = vmatpush1.msra.mxu0 %v1964
    %1966 = vmatprep.subr.mxu0 0.0
    %v1967 = vand.u32 %v656, 4294901760
    %1968 = vmatpush1.msra.mxu0 %v1967
    %1969 = vmatprep.subr.mxu0 0.0
    %v1970 = vand.u32 %v657, 4294901760
    %1971 = vmatpush1.msra.mxu0 %v1970
    %1972 = vmatprep.subr.mxu0 0.0
    %v1973 = vand.u32 %v658, 4294901760
    %1974 = vmatpush1.msra.mxu0 %v1973
    %1975 = vmatprep.subr.mxu0 0.0
    %v1976 = vand.u32 %v659, 4294901760
    %1977 = vmatpush1.msra.mxu0 %v1976
    %1978 = vmatprep.subr.mxu0 0.0
    %v1979 = vand.u32 %v660, 4294901760
    %1980 = vmatpush1.msra.mxu0 %v1979
    %1981 = vmatprep.subr.mxu0 0.0
    %v1982 = vand.u32 %v661, 4294901760
    %1983 = vmatpush1.msra.mxu0 %v1982
    %1984 = vmatprep.subr.mxu0 0.0
    %v1985 = vand.u32 %v662, 4294901760
    %1986 = vmatpush1.msra.mxu0 %v1985
    %1987 = vmatprep.subr.mxu0 0.0
    %v1988 = vand.u32 %v663, 4294901760
    %1989 = vmatpush1.msra.mxu0 %v1988
    %1990 = vmatprep.subr.mxu0 0.0
    %v1991 = vand.u32 %v664, 4294901760
    %1992 = vmatpush1.msra.mxu0 %v1991
    %1993 = vmatprep.subr.mxu0 0.0
    %v1994 = vand.u32 %v665, 4294901760
    %1995 = vmatpush1.msra.mxu0 %v1994
    %1996 = vmatprep.subr.mxu0 0.0
    %v1997 = vand.u32 %v666, 4294901760
    %1998 = vmatpush1.msra.mxu0 %v1997
    %1999 = vmatprep.subr.mxu0 0.0
    %v2000 = vand.u32 %v667, 4294901760
    %2001 = vmatpush1.msra.mxu0 %v2000
    %2002 = vmatprep.subr.mxu0 0.0
    %v2003 = vand.u32 %v668, 4294901760
    %2004 = vmatpush1.msra.mxu0 %v2003
    %2005 = vmatprep.subr.mxu0 0.0
    %v2006 = vand.u32 %v669, 4294901760
    %2007 = vmatpush1.msra.mxu0 %v2006
    %2008 = vmatprep.subr.mxu0 0.0
    %v2009 = vand.u32 %v670, 4294901760
    %2010 = vmatpush1.msra.mxu0 %v2009
    %2011 = vmatprep.subr.mxu0 0.0
    %v2012 = vand.u32 %v671, 4294901760
    %2013 = vmatpush1.msra.mxu0 %v2012
    %2014 = vmatprep.subr.mxu0 0.0
    %v2015 = vand.u32 %v672, 4294901760
    %2016 = vmatpush1.msra.mxu0 %v2015
    %2017 = vmatprep.subr.mxu0 0.0
    %v2018 = vand.u32 %v673, 4294901760
    %2019 = vmatpush1.msra.mxu0 %v2018
    %2020 = vmatprep.subr.mxu0 0.0
    %v2021 = vand.u32 %v674, 4294901760
    %2022 = vmatpush1.msra.mxu0 %v2021
    %2023 = vmatprep.subr.mxu0 0.0
    %v2024 = vand.u32 %v675, 4294901760
    %2025 = vmatpush1.msra.mxu0 %v2024
    %v2026 = vand.u32 %v583, 4294901760
    %v2027 = vsub.f32 %v583, %v2026
    %v2028 = vand.u32 %v2027, 4294901760
    %v2029 = vsub.f32 %v2027, %v2028
    %v2030 = vand.u32 %v2029, 4294901760
    %2031 = vmatprep.mubr.f32.mxu0 %v2030
    %v2032 = vand.u32 %v582, 4294901760
    %v2033 = vsub.f32 %v582, %v2032
    %v2034 = vand.u32 %v2033, 4294901760
    %v2035 = vsub.f32 %v2033, %v2034
    %v2036 = vand.u32 %v2035, 4294901760
    %2037 = vmatmul.mubr.f32.gmra.mrb[0].mxu0 %v2036
    %v2038 = vpop.f32.mrb[0].mxu0
    %v2039 = vadd.f32 %v1878, %v2038
    %v2040 = vpop.f32.mrb[0].mxu0
    %v2041 = vand.u32 %v587, 4294901760
    %v2042 = vsub.f32 %v587, %v2041
    %v2043 = vand.u32 %v2042, 4294901760
    %v2044 = vsub.f32 %v2042, %v2043
    %v2045 = vand.u32 %v2044, 4294901760
    %2046 = vmatprep.mubr.f32.mxu0 %v2045
    %v2047 = vand.u32 %v586, 4294901760
    %v2048 = vsub.f32 %v586, %v2047
    %v2049 = vand.u32 %v2048, 4294901760
    %v2050 = vsub.f32 %v2048, %v2049
    %v2051 = vand.u32 %v2050, 4294901760
    %2052 = vmatmul.mubr.f32.gmra.mrb[0].mxu0 %v2051
    %v2053 = vpop.f32.mrb[0].mxu0
    %v2054 = vadd.f32 %v1885, %v2053
    %v2055 = vpop.f32.mrb[0].mxu0
    %v2056 = vand.u32 %v591, 4294901760
    %v2057 = vsub.f32 %v591, %v2056
    %v2058 = vand.u32 %v2057, 4294901760
    %v2059 = vsub.f32 %v2057, %v2058
    %v2060 = vand.u32 %v2059, 4294901760
    %2061 = vmatprep.mubr.f32.mxu0 %v2060
    %v2062 = vand.u32 %v590, 4294901760
    %v2063 = vsub.f32 %v590, %v2062
    %v2064 = vand.u32 %v2063, 4294901760
    %v2065 = vsub.f32 %v2063, %v2064
    %v2066 = vand.u32 %v2065, 4294901760
    %2067 = vmatmul.mubr.f32.gmra.mrb[0].mxu0 %v2066
    %v2068 = vpop.f32.mrb[0].mxu0
    %v2069 = vadd.f32 %v1892, %v2068
    %v2070 = vpop.f32.mrb[0].mxu0
    %v2071 = vand.u32 %v595, 4294901760
    %v2072 = vsub.f32 %v595, %v2071
    %v2073 = vand.u32 %v2072, 4294901760
    %v2074 = vsub.f32 %v2072, %v2073
    %v2075 = vand.u32 %v2074, 4294901760
    %2076 = vmatprep.mubr.f32.mxu0 %v2075
    %v2077 = vand.u32 %v594, 4294901760
    %v2078 = vsub.f32 %v594, %v2077
    %v2079 = vand.u32 %v2078, 4294901760
    %v2080 = vsub.f32 %v2078, %v2079
    %v2081 = vand.u32 %v2080, 4294901760
    %2082 = vmatmul.mubr.f32.gmra.mrb[0].mxu0 %v2081
    %v2083 = vpop.f32.mrb[0].mxu0
    %v2084 = vadd.f32 %v1899, %v2083
    %v2085 = vpop.f32.mrb[0].mxu0
    %v2086 = vand.u32 %v599, 4294901760
    %v2087 = vsub.f32 %v599, %v2086
    %v2088 = vand.u32 %v2087, 4294901760
    %v2089 = vsub.f32 %v2087, %v2088
    %v2090 = vand.u32 %v2089, 4294901760
    %2091 = vmatprep.mubr.f32.mxu0 %v2090
    %v2092 = vand.u32 %v598, 4294901760
    %v2093 = vsub.f32 %v598, %v2092
    %v2094 = vand.u32 %v2093, 4294901760
    %v2095 = vsub.f32 %v2093, %v2094
    %v2096 = vand.u32 %v2095, 4294901760
    %2097 = vmatmul.mubr.f32.gmra.mrb[0].mxu0 %v2096
    %v2098 = vpop.f32.mrb[0].mxu0
    %v2099 = vadd.f32 %v1906, %v2098
    %v2100 = vpop.f32.mrb[0].mxu0
    %v2101 = vand.u32 %v603, 4294901760
    %v2102 = vsub.f32 %v603, %v2101
    %v2103 = vand.u32 %v2102, 4294901760
    %v2104 = vsub.f32 %v2102, %v2103
    %v2105 = vand.u32 %v2104, 4294901760
    %2106 = vmatprep.mubr.f32.mxu0 %v2105
    %v2107 = vand.u32 %v602, 4294901760
    %v2108 = vsub.f32 %v602, %v2107
    %v2109 = vand.u32 %v2108, 4294901760
    %v2110 = vsub.f32 %v2108, %v2109
    %v2111 = vand.u32 %v2110, 4294901760
    %2112 = vmatmul.mubr.f32.gmra.mrb[0].mxu0 %v2111
    %v2113 = vpop.f32.mrb[0].mxu0
    %v2114 = vadd.f32 %v1913, %v2113
    %v2115 = vpop.f32.mrb[0].mxu0
    %v2116 = vand.u32 %v607, 4294901760
    %v2117 = vsub.f32 %v607, %v2116
    %v2118 = vand.u32 %v2117, 4294901760
    %v2119 = vsub.f32 %v2117, %v2118
    %v2120 = vand.u32 %v2119, 4294901760
    %2121 = vmatprep.mubr.f32.mxu0 %v2120
    %v2122 = vand.u32 %v606, 4294901760
    %v2123 = vsub.f32 %v606, %v2122
    %v2124 = vand.u32 %v2123, 4294901760
    %v2125 = vsub.f32 %v2123, %v2124
    %v2126 = vand.u32 %v2125, 4294901760
    %2127 = vmatmul.mubr.f32.gmra.mrb[0].mxu0 %v2126
    %v2128 = vpop.f32.mrb[0].mxu0
    %v2129 = vadd.f32 %v1920, %v2128
    %v2130 = vpop.f32.mrb[0].mxu0
    %v2131 = vand.u32 %v611, 4294901760
    %v2132 = vsub.f32 %v611, %v2131
    %v2133 = vand.u32 %v2132, 4294901760
    %v2134 = vsub.f32 %v2132, %v2133
    %v2135 = vand.u32 %v2134, 4294901760
    %2136 = vmatprep.mubr.f32.mxu0 %v2135
    %v2137 = vand.u32 %v610, 4294901760
    %v2138 = vsub.f32 %v610, %v2137
    %v2139 = vand.u32 %v2138, 4294901760
    %v2140 = vsub.f32 %v2138, %v2139
    %v2141 = vand.u32 %v2140, 4294901760
    %2142 = vmatmul.mubr.f32.gmra.mrb[0].mxu0 %v2141
    %v2143 = vpop.f32.mrb[0].mxu0
    %v2144 = vadd.f32 %v1927, %v2143
    %v2145 = vpop.f32.mrb[0].mxu0
    %2146 = vdwg.mxu0
    %2147 = vmatprep.subr.mxu0 0.0
    %v2148 = vand.u32 %v644, 4294901760
    %v2149 = vsub.f32 %v644, %v2148
    %v2150 = vand.u32 %v2149, 4294901760
    %v2151 = vsub.f32 %v2149, %v2150
    %v2152 = vand.u32 %v2151, 4294901760
    %2153 = vmatpush1.msra.mxu0 %v2152
    %2154 = vmatprep.subr.mxu0 0.0
    %v2155 = vand.u32 %v645, 4294901760
    %v2156 = vsub.f32 %v645, %v2155
    %v2157 = vand.u32 %v2156, 4294901760
    %v2158 = vsub.f32 %v2156, %v2157
    %v2159 = vand.u32 %v2158, 4294901760
    %2160 = vmatpush1.msra.mxu0 %v2159
    %2161 = vmatprep.subr.mxu0 0.0
    %v2162 = vand.u32 %v646, 4294901760
    %v2163 = vsub.f32 %v646, %v2162
    %v2164 = vand.u32 %v2163, 4294901760
    %v2165 = vsub.f32 %v2163, %v2164
    %v2166 = vand.u32 %v2165, 4294901760
    %2167 = vmatpush1.msra.mxu0 %v2166
    %2168 = vmatprep.subr.mxu0 0.0
    %v2169 = vand.u32 %v647, 4294901760
    %v2170 = vsub.f32 %v647, %v2169
    %v2171 = vand.u32 %v2170, 4294901760
    %v2172 = vsub.f32 %v2170, %v2171
    %v2173 = vand.u32 %v2172, 4294901760
    %2174 = vmatpush1.msra.mxu0 %v2173
    %2175 = vmatprep.subr.mxu0 0.0
    %v2176 = vand.u32 %v648, 4294901760
    %v2177 = vsub.f32 %v648, %v2176
    %v2178 = vand.u32 %v2177, 4294901760
    %v2179 = vsub.f32 %v2177, %v2178
    %v2180 = vand.u32 %v2179, 4294901760
    %2181 = vmatpush1.msra.mxu0 %v2180
    %2182 = vmatprep.subr.mxu0 0.0
    %v2183 = vand.u32 %v649, 4294901760
    %v2184 = vsub.f32 %v649, %v2183
    %v2185 = vand.u32 %v2184, 4294901760
    %v2186 = vsub.f32 %v2184, %v2185
    %v2187 = vand.u32 %v2186, 4294901760
    %2188 = vmatpush1.msra.mxu0 %v2187
    %2189 = vmatprep.subr.mxu0 0.0
    %v2190 = vand.u32 %v650, 4294901760
    %v2191 = vsub.f32 %v650, %v2190
    %v2192 = vand.u32 %v2191, 4294901760
    %v2193 = vsub.f32 %v2191, %v2192
    %v2194 = vand.u32 %v2193, 4294901760
    %2195 = vmatpush1.msra.mxu0 %v2194
    %2196 = vmatprep.subr.mxu0 0.0
    %v2197 = vand.u32 %v651, 4294901760
    %v2198 = vsub.f32 %v651, %v2197
    %v2199 = vand.u32 %v2198, 4294901760
    %v2200 = vsub.f32 %v2198, %v2199
    %v2201 = vand.u32 %v2200, 4294901760
    %2202 = vmatpush1.msra.mxu0 %v2201
    %2203 = vmatprep.subr.mxu0 0.0
    %v2204 = vand.u32 %v652, 4294901760
    %v2205 = vsub.f32 %v652, %v2204
    %v2206 = vand.u32 %v2205, 4294901760
    %v2207 = vsub.f32 %v2205, %v2206
    %v2208 = vand.u32 %v2207, 4294901760
    %2209 = vmatpush1.msra.mxu0 %v2208
    %2210 = vmatprep.subr.mxu0 0.0
    %v2211 = vand.u32 %v653, 4294901760
    %v2212 = vsub.f32 %v653, %v2211
    %v2213 = vand.u32 %v2212, 4294901760
    %v2214 = vsub.f32 %v2212, %v2213
    %v2215 = vand.u32 %v2214, 4294901760
    %2216 = vmatpush1.msra.mxu0 %v2215
    %2217 = vmatprep.subr.mxu0 0.0
    %v2218 = vand.u32 %v654, 4294901760
    %v2219 = vsub.f32 %v654, %v2218
    %v2220 = vand.u32 %v2219, 4294901760
    %v2221 = vsub.f32 %v2219, %v2220
    %v2222 = vand.u32 %v2221, 4294901760
    %2223 = vmatpush1.msra.mxu0 %v2222
    %2224 = vmatprep.subr.mxu0 0.0
    %v2225 = vand.u32 %v655, 4294901760
    %v2226 = vsub.f32 %v655, %v2225
    %v2227 = vand.u32 %v2226, 4294901760
    %v2228 = vsub.f32 %v2226, %v2227
    %v2229 = vand.u32 %v2228, 4294901760
    %2230 = vmatpush1.msra.mxu0 %v2229
    %2231 = vmatprep.subr.mxu0 0.0
    %v2232 = vand.u32 %v656, 4294901760
    %v2233 = vsub.f32 %v656, %v2232
    %v2234 = vand.u32 %v2233, 4294901760
    %v2235 = vsub.f32 %v2233, %v2234
    %v2236 = vand.u32 %v2235, 4294901760
    %2237 = vmatpush1.msra.mxu0 %v2236
    %2238 = vmatprep.subr.mxu0 0.0
    %v2239 = vand.u32 %v657, 4294901760
    %v2240 = vsub.f32 %v657, %v2239
    %v2241 = vand.u32 %v2240, 4294901760
    %v2242 = vsub.f32 %v2240, %v2241
    %v2243 = vand.u32 %v2242, 4294901760
    %2244 = vmatpush1.msra.mxu0 %v2243
    %2245 = vmatprep.subr.mxu0 0.0
    %v2246 = vand.u32 %v658, 4294901760
    %v2247 = vsub.f32 %v658, %v2246
    %v2248 = vand.u32 %v2247, 4294901760
    %v2249 = vsub.f32 %v2247, %v2248
    %v2250 = vand.u32 %v2249, 4294901760
    %2251 = vmatpush1.msra.mxu0 %v2250
    %2252 = vmatprep.subr.mxu0 0.0
    %v2253 = vand.u32 %v659, 4294901760
    %v2254 = vsub.f32 %v659, %v2253
    %v2255 = vand.u32 %v2254, 4294901760
    %v2256 = vsub.f32 %v2254, %v2255
    %v2257 = vand.u32 %v2256, 4294901760
    %2258 = vmatpush1.msra.mxu0 %v2257
    %2259 = vmatprep.subr.mxu0 0.0
    %v2260 = vand.u32 %v660, 4294901760
    %v2261 = vsub.f32 %v660, %v2260
    %v2262 = vand.u32 %v2261, 4294901760
    %v2263 = vsub.f32 %v2261, %v2262
    %v2264 = vand.u32 %v2263, 4294901760
    %2265 = vmatpush1.msra.mxu0 %v2264
    %2266 = vmatprep.subr.mxu0 0.0
    %v2267 = vand.u32 %v661, 4294901760
    %v2268 = vsub.f32 %v661, %v2267
    %v2269 = vand.u32 %v2268, 4294901760
    %v2270 = vsub.f32 %v2268, %v2269
    %v2271 = vand.u32 %v2270, 4294901760
    %2272 = vmatpush1.msra.mxu0 %v2271
    %2273 = vmatprep.subr.mxu0 0.0
    %v2274 = vand.u32 %v662, 4294901760
    %v2275 = vsub.f32 %v662, %v2274
    %v2276 = vand.u32 %v2275, 4294901760
    %v2277 = vsub.f32 %v2275, %v2276
    %v2278 = vand.u32 %v2277, 4294901760
    %2279 = vmatpush1.msra.mxu0 %v2278
    %2280 = vmatprep.subr.mxu0 0.0
    %v2281 = vand.u32 %v663, 4294901760
    %v2282 = vsub.f32 %v663, %v2281
    %v2283 = vand.u32 %v2282, 4294901760
    %v2284 = vsub.f32 %v2282, %v2283
    %v2285 = vand.u32 %v2284, 4294901760
    %2286 = vmatpush1.msra.mxu0 %v2285
    %2287 = vmatprep.subr.mxu0 0.0
    %v2288 = vand.u32 %v664, 4294901760
    %v2289 = vsub.f32 %v664, %v2288
    %v2290 = vand.u32 %v2289, 4294901760
    %v2291 = vsub.f32 %v2289, %v2290
    %v2292 = vand.u32 %v2291, 4294901760
    %2293 = vmatpush1.msra.mxu0 %v2292
    %2294 = vmatprep.subr.mxu0 0.0
    %v2295 = vand.u32 %v665, 4294901760
    %v2296 = vsub.f32 %v665, %v2295
    %v2297 = vand.u32 %v2296, 4294901760
    %v2298 = vsub.f32 %v2296, %v2297
    %v2299 = vand.u32 %v2298, 4294901760
    %2300 = vmatpush1.msra.mxu0 %v2299
    %2301 = vmatprep.subr.mxu0 0.0
    %v2302 = vand.u32 %v666, 4294901760
    %v2303 = vsub.f32 %v666, %v2302
    %v2304 = vand.u32 %v2303, 4294901760
    %v2305 = vsub.f32 %v2303, %v2304
    %v2306 = vand.u32 %v2305, 4294901760
    %2307 = vmatpush1.msra.mxu0 %v2306
    %2308 = vmatprep.subr.mxu0 0.0
    %v2309 = vand.u32 %v667, 4294901760
    %v2310 = vsub.f32 %v667, %v2309
    %v2311 = vand.u32 %v2310, 4294901760
    %v2312 = vsub.f32 %v2310, %v2311
    %v2313 = vand.u32 %v2312, 4294901760
    %2314 = vmatpush1.msra.mxu0 %v2313
    %2315 = vmatprep.subr.mxu0 0.0
    %v2316 = vand.u32 %v668, 4294901760
    %v2317 = vsub.f32 %v668, %v2316
    %v2318 = vand.u32 %v2317, 4294901760
    %v2319 = vsub.f32 %v2317, %v2318
    %v2320 = vand.u32 %v2319, 4294901760
    %2321 = vmatpush1.msra.mxu0 %v2320
    %2322 = vmatprep.subr.mxu0 0.0
    %v2323 = vand.u32 %v669, 4294901760
    %v2324 = vsub.f32 %v669, %v2323
    %v2325 = vand.u32 %v2324, 4294901760
    %v2326 = vsub.f32 %v2324, %v2325
    %v2327 = vand.u32 %v2326, 4294901760
    %2328 = vmatpush1.msra.mxu0 %v2327
    %2329 = vmatprep.subr.mxu0 0.0
    %v2330 = vand.u32 %v670, 4294901760
    %v2331 = vsub.f32 %v670, %v2330
    %v2332 = vand.u32 %v2331, 4294901760
    %v2333 = vsub.f32 %v2331, %v2332
    %v2334 = vand.u32 %v2333, 4294901760
    %2335 = vmatpush1.msra.mxu0 %v2334
    %2336 = vmatprep.subr.mxu0 0.0
    %v2337 = vand.u32 %v671, 4294901760
    %v2338 = vsub.f32 %v671, %v2337
    %v2339 = vand.u32 %v2338, 4294901760
    %v2340 = vsub.f32 %v2338, %v2339
    %v2341 = vand.u32 %v2340, 4294901760
    %2342 = vmatpush1.msra.mxu0 %v2341
    %2343 = vmatprep.subr.mxu0 0.0
    %v2344 = vand.u32 %v672, 4294901760
    %v2345 = vsub.f32 %v672, %v2344
    %v2346 = vand.u32 %v2345, 4294901760
    %v2347 = vsub.f32 %v2345, %v2346
    %v2348 = vand.u32 %v2347, 4294901760
    %2349 = vmatpush1.msra.mxu0 %v2348
    %2350 = vmatprep.subr.mxu0 0.0
    %v2351 = vand.u32 %v673, 4294901760
    %v2352 = vsub.f32 %v673, %v2351
    %v2353 = vand.u32 %v2352, 4294901760
    %v2354 = vsub.f32 %v2352, %v2353
    %v2355 = vand.u32 %v2354, 4294901760
    %2356 = vmatpush1.msra.mxu0 %v2355
    %2357 = vmatprep.subr.mxu0 0.0
    %v2358 = vand.u32 %v674, 4294901760
    %v2359 = vsub.f32 %v674, %v2358
    %v2360 = vand.u32 %v2359, 4294901760
    %v2361 = vsub.f32 %v2359, %v2360
    %v2362 = vand.u32 %v2361, 4294901760
    %2363 = vmatpush1.msra.mxu0 %v2362
    %2364 = vmatprep.subr.mxu0 0.0
    %v2365 = vand.u32 %v675, 4294901760
    %v2366 = vsub.f32 %v675, %v2365
    %v2367 = vand.u32 %v2366, 4294901760
    %v2368 = vsub.f32 %v2366, %v2367
    %v2369 = vand.u32 %v2368, 4294901760
    %2370 = vmatpush1.msra.mxu0 %v2369
    %v2371 = vand.u32 %v583, 4294901760
    %2372 = vmatprep.mubr.f32.mxu0 %v2371
    %v2373 = vand.u32 %v582, 4294901760
    %2374 = vmatmul.mubr.f32.gmra.mrb[0].mxu0 %v2373
    %v2375 = vpop.f32.mrb[0].mxu0
    %v2376 = vadd.f32 %v2039, %v2375
    %v2377 = vpop.f32.mrb[0].mxu0
    %v2378 = vand.u32 %v587, 4294901760
    %2379 = vmatprep.mubr.f32.mxu0 %v2378
    %v2380 = vand.u32 %v586, 4294901760
    %2381 = vmatmul.mubr.f32.gmra.mrb[0].mxu0 %v2380
    %v2382 = vpop.f32.mrb[0].mxu0
    %v2383 = vadd.f32 %v2054, %v2382
    %v2384 = vpop.f32.mrb[0].mxu0
    %v2385 = vand.u32 %v591, 4294901760
    %2386 = vmatprep.mubr.f32.mxu0 %v2385
    %v2387 = vand.u32 %v590, 4294901760
    %2388 = vmatmul.mubr.f32.gmra.mrb[0].mxu0 %v2387
    %v2389 = vpop.f32.mrb[0].mxu0
    %v2390 = vadd.f32 %v2069, %v2389
    %v2391 = vpop.f32.mrb[0].mxu0
    %v2392 = vand.u32 %v595, 4294901760
    %2393 = vmatprep.mubr.f32.mxu0 %v2392
    %v2394 = vand.u32 %v594, 4294901760
    %2395 = vmatmul.mubr.f32.gmra.mrb[0].mxu0 %v2394
    %v2396 = vpop.f32.mrb[0].mxu0
    %v2397 = vadd.f32 %v2084, %v2396
    %v2398 = vpop.f32.mrb[0].mxu0
    %v2399 = vand.u32 %v599, 4294901760
    %2400 = vmatprep.mubr.f32.mxu0 %v2399
    %v2401 = vand.u32 %v598, 4294901760
    %2402 = vmatmul.mubr.f32.gmra.mrb[0].mxu0 %v2401
    %v2403 = vpop.f32.mrb[0].mxu0
    %v2404 = vadd.f32 %v2099, %v2403
    %v2405 = vpop.f32.mrb[0].mxu0
    %v2406 = vand.u32 %v603, 4294901760
    %2407 = vmatprep.mubr.f32.mxu0 %v2406
    %v2408 = vand.u32 %v602, 4294901760
    %2409 = vmatmul.mubr.f32.gmra.mrb[0].mxu0 %v2408
    %v2410 = vpop.f32.mrb[0].mxu0
    %v2411 = vadd.f32 %v2114, %v2410
    %v2412 = vpop.f32.mrb[0].mxu0
    %v2413 = vand.u32 %v607, 4294901760
    %2414 = vmatprep.mubr.f32.mxu0 %v2413
    %v2415 = vand.u32 %v606, 4294901760
    %2416 = vmatmul.mubr.f32.gmra.mrb[0].mxu0 %v2415
    %v2417 = vpop.f32.mrb[0].mxu0
    %v2418 = vadd.f32 %v2129, %v2417
    %v2419 = vpop.f32.mrb[0].mxu0
    %v2420 = vand.u32 %v611, 4294901760
    %2421 = vmatprep.mubr.f32.mxu0 %v2420
    %v2422 = vand.u32 %v610, 4294901760
    %2423 = vmatmul.mubr.f32.gmra.mrb[0].mxu0 %v2422
    %v2424 = vpop.f32.mrb[0].mxu0
    %v2425 = vadd.f32 %v2144, %v2424
    %v2426 = vpop.f32.mrb[0].mxu0
    %2427 = vdwg.mxu0
    %2428 = vmatprep.subr.mxu0 0.0
    %v2429 = vand.u32 %v644, 4294901760
    %v2430 = vsub.f32 %v644, %v2429
    %2431 = vmatpush1.msra.mxu0 %v2430
    %2432 = vmatprep.subr.mxu0 0.0
    %v2433 = vand.u32 %v645, 4294901760
    %v2434 = vsub.f32 %v645, %v2433
    %2435 = vmatpush1.msra.mxu0 %v2434
    %2436 = vmatprep.subr.mxu0 0.0
    %v2437 = vand.u32 %v646, 4294901760
    %v2438 = vsub.f32 %v646, %v2437
    %2439 = vmatpush1.msra.mxu0 %v2438
    %2440 = vmatprep.subr.mxu0 0.0
    %v2441 = vand.u32 %v647, 4294901760
    %v2442 = vsub.f32 %v647, %v2441
    %2443 = vmatpush1.msra.mxu0 %v2442
    %2444 = vmatprep.subr.mxu0 0.0
    %v2445 = vand.u32 %v648, 4294901760
    %v2446 = vsub.f32 %v648, %v2445
    %2447 = vmatpush1.msra.mxu0 %v2446
    %2448 = vmatprep.subr.mxu0 0.0
    %v2449 = vand.u32 %v649, 4294901760
    %v2450 = vsub.f32 %v649, %v2449
    %2451 = vmatpush1.msra.mxu0 %v2450
    %2452 = vmatprep.subr.mxu0 0.0
    %v2453 = vand.u32 %v650, 4294901760
    %v2454 = vsub.f32 %v650, %v2453
    %2455 = vmatpush1.msra.mxu0 %v2454
    %2456 = vmatprep.subr.mxu0 0.0
    %v2457 = vand.u32 %v651, 4294901760
    %v2458 = vsub.f32 %v651, %v2457
    %2459 = vmatpush1.msra.mxu0 %v2458
    %2460 = vmatprep.subr.mxu0 0.0
    %v2461 = vand.u32 %v652, 4294901760
    %v2462 = vsub.f32 %v652, %v2461
    %2463 = vmatpush1.msra.mxu0 %v2462
    %2464 = vmatprep.subr.mxu0 0.0
    %v2465 = vand.u32 %v653, 4294901760
    %v2466 = vsub.f32 %v653, %v2465
    %2467 = vmatpush1.msra.mxu0 %v2466
    %2468 = vmatprep.subr.mxu0 0.0
    %v2469 = vand.u32 %v654, 4294901760
    %v2470 = vsub.f32 %v654, %v2469
    %2471 = vmatpush1.msra.mxu0 %v2470
    %2472 = vmatprep.subr.mxu0 0.0
    %v2473 = vand.u32 %v655, 4294901760
    %v2474 = vsub.f32 %v655, %v2473
    %2475 = vmatpush1.msra.mxu0 %v2474
    %2476 = vmatprep.subr.mxu0 0.0
    %v2477 = vand.u32 %v656, 4294901760
    %v2478 = vsub.f32 %v656, %v2477
    %2479 = vmatpush1.msra.mxu0 %v2478
    %2480 = vmatprep.subr.mxu0 0.0
    %v2481 = vand.u32 %v657, 4294901760
    %v2482 = vsub.f32 %v657, %v2481
    %2483 = vmatpush1.msra.mxu0 %v2482
    %2484 = vmatprep.subr.mxu0 0.0
    %v2485 = vand.u32 %v658, 4294901760
    %v2486 = vsub.f32 %v658, %v2485
    %2487 = vmatpush1.msra.mxu0 %v2486
    %2488 = vmatprep.subr.mxu0 0.0
    %v2489 = vand.u32 %v659, 4294901760
    %v2490 = vsub.f32 %v659, %v2489
    %2491 = vmatpush1.msra.mxu0 %v2490
    %2492 = vmatprep.subr.mxu0 0.0
    %v2493 = vand.u32 %v660, 4294901760
    %v2494 = vsub.f32 %v660, %v2493
    %2495 = vmatpush1.msra.mxu0 %v2494
    %2496 = vmatprep.subr.mxu0 0.0
    %v2497 = vand.u32 %v661, 4294901760
    %v2498 = vsub.f32 %v661, %v2497
    %2499 = vmatpush1.msra.mxu0 %v2498
    %2500 = vmatprep.subr.mxu0 0.0
    %v2501 = vand.u32 %v662, 4294901760
    %v2502 = vsub.f32 %v662, %v2501
    %2503 = vmatpush1.msra.mxu0 %v2502
    %2504 = vmatprep.subr.mxu0 0.0
    %v2505 = vand.u32 %v663, 4294901760
    %v2506 = vsub.f32 %v663, %v2505
    %2507 = vmatpush1.msra.mxu0 %v2506
    %2508 = vmatprep.subr.mxu0 0.0
    %v2509 = vand.u32 %v664, 4294901760
    %v2510 = vsub.f32 %v664, %v2509
    %2511 = vmatpush1.msra.mxu0 %v2510
    %2512 = vmatprep.subr.mxu0 0.0
    %v2513 = vand.u32 %v665, 4294901760
    %v2514 = vsub.f32 %v665, %v2513
    %2515 = vmatpush1.msra.mxu0 %v2514
    %2516 = vmatprep.subr.mxu0 0.0
    %v2517 = vand.u32 %v666, 4294901760
    %v2518 = vsub.f32 %v666, %v2517
    %2519 = vmatpush1.msra.mxu0 %v2518
    %2520 = vmatprep.subr.mxu0 0.0
    %v2521 = vand.u32 %v667, 4294901760
    %v2522 = vsub.f32 %v667, %v2521
    %2523 = vmatpush1.msra.mxu0 %v2522
    %2524 = vmatprep.subr.mxu0 0.0
    %v2525 = vand.u32 %v668, 4294901760
    %v2526 = vsub.f32 %v668, %v2525
    %2527 = vmatpush1.msra.mxu0 %v2526
    %2528 = vmatprep.subr.mxu0 0.0
    %v2529 = vand.u32 %v669, 4294901760
    %v2530 = vsub.f32 %v669, %v2529
    %2531 = vmatpush1.msra.mxu0 %v2530
    %2532 = vmatprep.subr.mxu0 0.0
    %v2533 = vand.u32 %v670, 4294901760
    %v2534 = vsub.f32 %v670, %v2533
    %2535 = vmatpush1.msra.mxu0 %v2534
    %2536 = vmatprep.subr.mxu0 0.0
    %v2537 = vand.u32 %v671, 4294901760
    %v2538 = vsub.f32 %v671, %v2537
    %2539 = vmatpush1.msra.mxu0 %v2538
    %2540 = vmatprep.subr.mxu0 0.0
    %v2541 = vand.u32 %v672, 4294901760
    %v2542 = vsub.f32 %v672, %v2541
    %2543 = vmatpush1.msra.mxu0 %v2542
    %2544 = vmatprep.subr.mxu0 0.0
    %v2545 = vand.u32 %v673, 4294901760
    %v2546 = vsub.f32 %v673, %v2545
    %2547 = vmatpush1.msra.mxu0 %v2546
    %2548 = vmatprep.subr.mxu0 0.0
    %v2549 = vand.u32 %v674, 4294901760
    %v2550 = vsub.f32 %v674, %v2549
    %2551 = vmatpush1.msra.mxu0 %v2550
    %2552 = vmatprep.subr.mxu0 0.0
    %v2553 = vand.u32 %v675, 4294901760
    %v2554 = vsub.f32 %v675, %v2553
    %2555 = vmatpush1.msra.mxu0 %v2554
    %v2556 = vand.u32 %v583, 4294901760
    %v2557 = vsub.f32 %v583, %v2556
    %2558 = vmatprep.mubr.f32.mxu0 %v2557
    %v2559 = vand.u32 %v582, 4294901760
    %v2560 = vsub.f32 %v582, %v2559
    %2561 = vmatmul.mubr.f32.gmra.mrb[0].mxu0 %v2560
    %v2562 = vpop.f32.mrb[0].mxu0
    %v2563 = vadd.f32 %v2376, %v2562
    %v2564 = vpop.f32.mrb[0].mxu0
    %v2565 = vand.u32 %v587, 4294901760
    %v2566 = vsub.f32 %v587, %v2565
    %2567 = vmatprep.mubr.f32.mxu0 %v2566
    %v2568 = vand.u32 %v586, 4294901760
    %v2569 = vsub.f32 %v586, %v2568
    %2570 = vmatmul.mubr.f32.gmra.mrb[0].mxu0 %v2569
    %v2571 = vpop.f32.mrb[0].mxu0
    %v2572 = vadd.f32 %v2383, %v2571
    %v2573 = vpop.f32.mrb[0].mxu0
    %v2574 = vand.u32 %v591, 4294901760
    %v2575 = vsub.f32 %v591, %v2574
    %2576 = vmatprep.mubr.f32.mxu0 %v2575
    %v2577 = vand.u32 %v590, 4294901760
    %v2578 = vsub.f32 %v590, %v2577
    %2579 = vmatmul.mubr.f32.gmra.mrb[0].mxu0 %v2578
    %v2580 = vpop.f32.mrb[0].mxu0
    %v2581 = vadd.f32 %v2390, %v2580
    %v2582 = vpop.f32.mrb[0].mxu0
    %v2583 = vand.u32 %v595, 4294901760
    %v2584 = vsub.f32 %v595, %v2583
    %2585 = vmatprep.mubr.f32.mxu0 %v2584
    %v2586 = vand.u32 %v594, 4294901760
    %v2587 = vsub.f32 %v594, %v2586
    %2588 = vmatmul.mubr.f32.gmra.mrb[0].mxu0 %v2587
    %v2589 = vpop.f32.mrb[0].mxu0
    %v2590 = vadd.f32 %v2397, %v2589
    %v2591 = vpop.f32.mrb[0].mxu0
    %v2592 = vand.u32 %v599, 4294901760
    %v2593 = vsub.f32 %v599, %v2592
    %2594 = vmatprep.mubr.f32.mxu0 %v2593
    %v2595 = vand.u32 %v598, 4294901760
    %v2596 = vsub.f32 %v598, %v2595
    %2597 = vmatmul.mubr.f32.gmra.mrb[0].mxu0 %v2596
    %v2598 = vpop.f32.mrb[0].mxu0
    %v2599 = vadd.f32 %v2404, %v2598
    %v2600 = vpop.f32.mrb[0].mxu0
    %v2601 = vand.u32 %v603, 4294901760
    %v2602 = vsub.f32 %v603, %v2601
    %2603 = vmatprep.mubr.f32.mxu0 %v2602
    %v2604 = vand.u32 %v602, 4294901760
    %v2605 = vsub.f32 %v602, %v2604
    %2606 = vmatmul.mubr.f32.gmra.mrb[0].mxu0 %v2605
    %v2607 = vpop.f32.mrb[0].mxu0
    %v2608 = vadd.f32 %v2411, %v2607
    %v2609 = vpop.f32.mrb[0].mxu0
    %v2610 = vand.u32 %v607, 4294901760
    %v2611 = vsub.f32 %v607, %v2610
    %2612 = vmatprep.mubr.f32.mxu0 %v2611
    %v2613 = vand.u32 %v606, 4294901760
    %v2614 = vsub.f32 %v606, %v2613
    %2615 = vmatmul.mubr.f32.gmra.mrb[0].mxu0 %v2614
    %v2616 = vpop.f32.mrb[0].mxu0
    %v2617 = vadd.f32 %v2418, %v2616
    %v2618 = vpop.f32.mrb[0].mxu0
    %v2619 = vand.u32 %v611, 4294901760
    %v2620 = vsub.f32 %v611, %v2619
    %2621 = vmatprep.mubr.f32.mxu0 %v2620
    %v2622 = vand.u32 %v610, 4294901760
    %v2623 = vsub.f32 %v610, %v2622
    %2624 = vmatmul.mubr.f32.gmra.mrb[0].mxu0 %v2623
    %v2625 = vpop.f32.mrb[0].mxu0
    %v2626 = vadd.f32 %v2425, %v2625
    %v2627 = vpop.f32.mrb[0].mxu0
    %2628 = vdwg.mxu0
    %2629 = vmatprep.subr.mxu0 0.0
    %v2630 = vand.u32 %v644, 4294901760
    %2631 = vmatpush1.msra.mxu0 %v2630
    %2632 = vmatprep.subr.mxu0 0.0
    %v2633 = vand.u32 %v645, 4294901760
    %2634 = vmatpush1.msra.mxu0 %v2633
    %2635 = vmatprep.subr.mxu0 0.0
    %v2636 = vand.u32 %v646, 4294901760
    %2637 = vmatpush1.msra.mxu0 %v2636
    %2638 = vmatprep.subr.mxu0 0.0
    %v2639 = vand.u32 %v647, 4294901760
    %2640 = vmatpush1.msra.mxu0 %v2639
    %2641 = vmatprep.subr.mxu0 0.0
    %v2642 = vand.u32 %v648, 4294901760
    %2643 = vmatpush1.msra.mxu0 %v2642
    %2644 = vmatprep.subr.mxu0 0.0
    %v2645 = vand.u32 %v649, 4294901760
    %2646 = vmatpush1.msra.mxu0 %v2645
    %2647 = vmatprep.subr.mxu0 0.0
    %v2648 = vand.u32 %v650, 4294901760
    %2649 = vmatpush1.msra.mxu0 %v2648
    %2650 = vmatprep.subr.mxu0 0.0
    %v2651 = vand.u32 %v651, 4294901760
    %2652 = vmatpush1.msra.mxu0 %v2651
    %2653 = vmatprep.subr.mxu0 0.0
    %v2654 = vand.u32 %v652, 4294901760
    %2655 = vmatpush1.msra.mxu0 %v2654
    %2656 = vmatprep.subr.mxu0 0.0
    %v2657 = vand.u32 %v653, 4294901760
    %2658 = vmatpush1.msra.mxu0 %v2657
    %2659 = vmatprep.subr.mxu0 0.0
    %v2660 = vand.u32 %v654, 4294901760
    %2661 = vmatpush1.msra.mxu0 %v2660
    %2662 = vmatprep.subr.mxu0 0.0
    %v2663 = vand.u32 %v655, 4294901760
    %2664 = vmatpush1.msra.mxu0 %v2663
    %2665 = vmatprep.subr.mxu0 0.0
    %v2666 = vand.u32 %v656, 4294901760
    %2667 = vmatpush1.msra.mxu0 %v2666
    %2668 = vmatprep.subr.mxu0 0.0
    %v2669 = vand.u32 %v657, 4294901760
    %2670 = vmatpush1.msra.mxu0 %v2669
    %2671 = vmatprep.subr.mxu0 0.0
    %v2672 = vand.u32 %v658, 4294901760
    %2673 = vmatpush1.msra.mxu0 %v2672
    %2674 = vmatprep.subr.mxu0 0.0
    %v2675 = vand.u32 %v659, 4294901760
    %2676 = vmatpush1.msra.mxu0 %v2675
    %2677 = vmatprep.subr.mxu0 0.0
    %v2678 = vand.u32 %v660, 4294901760
    %2679 = vmatpush1.msra.mxu0 %v2678
    %2680 = vmatprep.subr.mxu0 0.0
    %v2681 = vand.u32 %v661, 4294901760
    %2682 = vmatpush1.msra.mxu0 %v2681
    %2683 = vmatprep.subr.mxu0 0.0
    %v2684 = vand.u32 %v662, 4294901760
    %2685 = vmatpush1.msra.mxu0 %v2684
    %2686 = vmatprep.subr.mxu0 0.0
    %v2687 = vand.u32 %v663, 4294901760
    %2688 = vmatpush1.msra.mxu0 %v2687
    %2689 = vmatprep.subr.mxu0 0.0
    %v2690 = vand.u32 %v664, 4294901760
    %2691 = vmatpush1.msra.mxu0 %v2690
    %2692 = vmatprep.subr.mxu0 0.0
    %v2693 = vand.u32 %v665, 4294901760
    %2694 = vmatpush1.msra.mxu0 %v2693
    %2695 = vmatprep.subr.mxu0 0.0
    %v2696 = vand.u32 %v666, 4294901760
    %2697 = vmatpush1.msra.mxu0 %v2696
    %2698 = vmatprep.subr.mxu0 0.0
    %v2699 = vand.u32 %v667, 4294901760
    %2700 = vmatpush1.msra.mxu0 %v2699
    %2701 = vmatprep.subr.mxu0 0.0
    %v2702 = vand.u32 %v668, 4294901760
    %2703 = vmatpush1.msra.mxu0 %v2702
    %2704 = vmatprep.subr.mxu0 0.0
    %v2705 = vand.u32 %v669, 4294901760
    %2706 = vmatpush1.msra.mxu0 %v2705
    %2707 = vmatprep.subr.mxu0 0.0
    %v2708 = vand.u32 %v670, 4294901760
    %2709 = vmatpush1.msra.mxu0 %v2708
    %2710 = vmatprep.subr.mxu0 0.0
    %v2711 = vand.u32 %v671, 4294901760
    %2712 = vmatpush1.msra.mxu0 %v2711
    %2713 = vmatprep.subr.mxu0 0.0
    %v2714 = vand.u32 %v672, 4294901760
    %2715 = vmatpush1.msra.mxu0 %v2714
    %2716 = vmatprep.subr.mxu0 0.0
    %v2717 = vand.u32 %v673, 4294901760
    %2718 = vmatpush1.msra.mxu0 %v2717
    %2719 = vmatprep.subr.mxu0 0.0
    %v2720 = vand.u32 %v674, 4294901760
    %2721 = vmatpush1.msra.mxu0 %v2720
    %2722 = vmatprep.subr.mxu0 0.0
    %v2723 = vand.u32 %v675, 4294901760
    %2724 = vmatpush1.msra.mxu0 %v2723
    %v2725 = vand.u32 %v583, 4294901760
    %v2726 = vsub.f32 %v583, %v2725
    %v2727 = vand.u32 %v2726, 4294901760
    %2728 = vmatprep.mubr.f32.mxu0 %v2727
    %v2729 = vand.u32 %v582, 4294901760
    %v2730 = vsub.f32 %v582, %v2729
    %v2731 = vand.u32 %v2730, 4294901760
    %2732 = vmatmul.mubr.f32.gmra.mrb[0].mxu0 %v2731
    %v2733 = vpop.f32.mrb[0].mxu0
    %v2734 = vadd.f32 %v2563, %v2733
    %v2735 = vpop.f32.mrb[0].mxu0
    %v2736 = vand.u32 %v587, 4294901760
    %v2737 = vsub.f32 %v587, %v2736
    %v2738 = vand.u32 %v2737, 4294901760
    %2739 = vmatprep.mubr.f32.mxu0 %v2738
    %v2740 = vand.u32 %v586, 4294901760
    %v2741 = vsub.f32 %v586, %v2740
    %v2742 = vand.u32 %v2741, 4294901760
    %2743 = vmatmul.mubr.f32.gmra.mrb[0].mxu0 %v2742
    %v2744 = vpop.f32.mrb[0].mxu0
    %v2745 = vadd.f32 %v2572, %v2744
    %v2746 = vpop.f32.mrb[0].mxu0
    %v2747 = vand.u32 %v591, 4294901760
    %v2748 = vsub.f32 %v591, %v2747
    %v2749 = vand.u32 %v2748, 4294901760
    %2750 = vmatprep.mubr.f32.mxu0 %v2749
    %v2751 = vand.u32 %v590, 4294901760
    %v2752 = vsub.f32 %v590, %v2751
    %v2753 = vand.u32 %v2752, 4294901760
    %2754 = vmatmul.mubr.f32.gmra.mrb[0].mxu0 %v2753
    %v2755 = vpop.f32.mrb[0].mxu0
    %v2756 = vadd.f32 %v2581, %v2755
    %v2757 = vpop.f32.mrb[0].mxu0
    %v2758 = vand.u32 %v595, 4294901760
    %v2759 = vsub.f32 %v595, %v2758
    %v2760 = vand.u32 %v2759, 4294901760
    %2761 = vmatprep.mubr.f32.mxu0 %v2760
    %v2762 = vand.u32 %v594, 4294901760
    %v2763 = vsub.f32 %v594, %v2762
    %v2764 = vand.u32 %v2763, 4294901760
    %2765 = vmatmul.mubr.f32.gmra.mrb[0].mxu0 %v2764
    %v2766 = vpop.f32.mrb[0].mxu0
    %v2767 = vadd.f32 %v2590, %v2766
    %v2768 = vpop.f32.mrb[0].mxu0
    %v2769 = vand.u32 %v599, 4294901760
    %v2770 = vsub.f32 %v599, %v2769
    %v2771 = vand.u32 %v2770, 4294901760
    %2772 = vmatprep.mubr.f32.mxu0 %v2771
    %v2773 = vand.u32 %v598, 4294901760
    %v2774 = vsub.f32 %v598, %v2773
    %v2775 = vand.u32 %v2774, 4294901760
    %2776 = vmatmul.mubr.f32.gmra.mrb[0].mxu0 %v2775
    %v2777 = vpop.f32.mrb[0].mxu0
    %v2778 = vadd.f32 %v2599, %v2777
    %v2779 = vpop.f32.mrb[0].mxu0
    %v2780 = vand.u32 %v603, 4294901760
    %v2781 = vsub.f32 %v603, %v2780
    %v2782 = vand.u32 %v2781, 4294901760
    %2783 = vmatprep.mubr.f32.mxu0 %v2782
    %v2784 = vand.u32 %v602, 4294901760
    %v2785 = vsub.f32 %v602, %v2784
    %v2786 = vand.u32 %v2785, 4294901760
    %2787 = vmatmul.mubr.f32.gmra.mrb[0].mxu0 %v2786
    %v2788 = vpop.f32.mrb[0].mxu0
    %v2789 = vadd.f32 %v2608, %v2788
    %v2790 = vpop.f32.mrb[0].mxu0
    %v2791 = vand.u32 %v607, 4294901760
    %v2792 = vsub.f32 %v607, %v2791
    %v2793 = vand.u32 %v2792, 4294901760
    %2794 = vmatprep.mubr.f32.mxu0 %v2793
    %v2795 = vand.u32 %v606, 4294901760
    %v2796 = vsub.f32 %v606, %v2795
    %v2797 = vand.u32 %v2796, 4294901760
    %2798 = vmatmul.mubr.f32.gmra.mrb[0].mxu0 %v2797
    %v2799 = vpop.f32.mrb[0].mxu0
    %v2800 = vadd.f32 %v2617, %v2799
    %v2801 = vpop.f32.mrb[0].mxu0
    %v2802 = vand.u32 %v611, 4294901760
    %v2803 = vsub.f32 %v611, %v2802
    %v2804 = vand.u32 %v2803, 4294901760
    %2805 = vmatprep.mubr.f32.mxu0 %v2804
    %v2806 = vand.u32 %v610, 4294901760
    %v2807 = vsub.f32 %v610, %v2806
    %v2808 = vand.u32 %v2807, 4294901760
    %2809 = vmatmul.mubr.f32.gmra.mrb[0].mxu0 %v2808
    %v2810 = vpop.f32.mrb[0].mxu0
    %v2811 = vadd.f32 %v2626, %v2810
    %v2812 = vpop.f32.mrb[0].mxu0
    %2813 = vdwg.mxu0
    %2814 = vmatprep.subr.mxu0 0.0
    %v2815 = vand.u32 %v644, 4294901760
    %v2816 = vsub.f32 %v644, %v2815
    %v2817 = vand.u32 %v2816, 4294901760
    %2818 = vmatpush1.msra.mxu0 %v2817
    %2819 = vmatprep.subr.mxu0 0.0
    %v2820 = vand.u32 %v645, 4294901760
    %v2821 = vsub.f32 %v645, %v2820
    %v2822 = vand.u32 %v2821, 4294901760
    %2823 = vmatpush1.msra.mxu0 %v2822
    %2824 = vmatprep.subr.mxu0 0.0
    %v2825 = vand.u32 %v646, 4294901760
    %v2826 = vsub.f32 %v646, %v2825
    %v2827 = vand.u32 %v2826, 4294901760
    %2828 = vmatpush1.msra.mxu0 %v2827
    %2829 = vmatprep.subr.mxu0 0.0
    %v2830 = vand.u32 %v647, 4294901760
    %v2831 = vsub.f32 %v647, %v2830
    %v2832 = vand.u32 %v2831, 4294901760
    %2833 = vmatpush1.msra.mxu0 %v2832
    %2834 = vmatprep.subr.mxu0 0.0
    %v2835 = vand.u32 %v648, 4294901760
    %v2836 = vsub.f32 %v648, %v2835
    %v2837 = vand.u32 %v2836, 4294901760
    %2838 = vmatpush1.msra.mxu0 %v2837
    %2839 = vmatprep.subr.mxu0 0.0
    %v2840 = vand.u32 %v649, 4294901760
    %v2841 = vsub.f32 %v649, %v2840
    %v2842 = vand.u32 %v2841, 4294901760
    %2843 = vmatpush1.msra.mxu0 %v2842
    %2844 = vmatprep.subr.mxu0 0.0
    %v2845 = vand.u32 %v650, 4294901760
    %v2846 = vsub.f32 %v650, %v2845
    %v2847 = vand.u32 %v2846, 4294901760
    %2848 = vmatpush1.msra.mxu0 %v2847
    %2849 = vmatprep.subr.mxu0 0.0
    %v2850 = vand.u32 %v651, 4294901760
    %v2851 = vsub.f32 %v651, %v2850
    %v2852 = vand.u32 %v2851, 4294901760
    %2853 = vmatpush1.msra.mxu0 %v2852
    %2854 = vmatprep.subr.mxu0 0.0
    %v2855 = vand.u32 %v652, 4294901760
    %v2856 = vsub.f32 %v652, %v2855
    %v2857 = vand.u32 %v2856, 4294901760
    %2858 = vmatpush1.msra.mxu0 %v2857
    %2859 = vmatprep.subr.mxu0 0.0
    %v2860 = vand.u32 %v653, 4294901760
    %v2861 = vsub.f32 %v653, %v2860
    %v2862 = vand.u32 %v2861, 4294901760
    %2863 = vmatpush1.msra.mxu0 %v2862
    %2864 = vmatprep.subr.mxu0 0.0
    %v2865 = vand.u32 %v654, 4294901760
    %v2866 = vsub.f32 %v654, %v2865
    %v2867 = vand.u32 %v2866, 4294901760
    %2868 = vmatpush1.msra.mxu0 %v2867
    %2869 = vmatprep.subr.mxu0 0.0
    %v2870 = vand.u32 %v655, 4294901760
    %v2871 = vsub.f32 %v655, %v2870
    %v2872 = vand.u32 %v2871, 4294901760
    %2873 = vmatpush1.msra.mxu0 %v2872
    %2874 = vmatprep.subr.mxu0 0.0
    %v2875 = vand.u32 %v656, 4294901760
    %v2876 = vsub.f32 %v656, %v2875
    %v2877 = vand.u32 %v2876, 4294901760
    %2878 = vmatpush1.msra.mxu0 %v2877
    %2879 = vmatprep.subr.mxu0 0.0
    %v2880 = vand.u32 %v657, 4294901760
    %v2881 = vsub.f32 %v657, %v2880
    %v2882 = vand.u32 %v2881, 4294901760
    %2883 = vmatpush1.msra.mxu0 %v2882
    %2884 = vmatprep.subr.mxu0 0.0
    %v2885 = vand.u32 %v658, 4294901760
    %v2886 = vsub.f32 %v658, %v2885
    %v2887 = vand.u32 %v2886, 4294901760
    %2888 = vmatpush1.msra.mxu0 %v2887
    %2889 = vmatprep.subr.mxu0 0.0
    %v2890 = vand.u32 %v659, 4294901760
    %v2891 = vsub.f32 %v659, %v2890
    %v2892 = vand.u32 %v2891, 4294901760
    %2893 = vmatpush1.msra.mxu0 %v2892
    %2894 = vmatprep.subr.mxu0 0.0
    %v2895 = vand.u32 %v660, 4294901760
    %v2896 = vsub.f32 %v660, %v2895
    %v2897 = vand.u32 %v2896, 4294901760
    %2898 = vmatpush1.msra.mxu0 %v2897
    %2899 = vmatprep.subr.mxu0 0.0
    %v2900 = vand.u32 %v661, 4294901760
    %v2901 = vsub.f32 %v661, %v2900
    %v2902 = vand.u32 %v2901, 4294901760
    %2903 = vmatpush1.msra.mxu0 %v2902
    %2904 = vmatprep.subr.mxu0 0.0
    %v2905 = vand.u32 %v662, 4294901760
    %v2906 = vsub.f32 %v662, %v2905
    %v2907 = vand.u32 %v2906, 4294901760
    %2908 = vmatpush1.msra.mxu0 %v2907
    %2909 = vmatprep.subr.mxu0 0.0
    %v2910 = vand.u32 %v663, 4294901760
    %v2911 = vsub.f32 %v663, %v2910
    %v2912 = vand.u32 %v2911, 4294901760
    %2913 = vmatpush1.msra.mxu0 %v2912
    %2914 = vmatprep.subr.mxu0 0.0
    %v2915 = vand.u32 %v664, 4294901760
    %v2916 = vsub.f32 %v664, %v2915
    %v2917 = vand.u32 %v2916, 4294901760
    %2918 = vmatpush1.msra.mxu0 %v2917
    %2919 = vmatprep.subr.mxu0 0.0
    %v2920 = vand.u32 %v665, 4294901760
    %v2921 = vsub.f32 %v665, %v2920
    %v2922 = vand.u32 %v2921, 4294901760
    %2923 = vmatpush1.msra.mxu0 %v2922
    %2924 = vmatprep.subr.mxu0 0.0
    %v2925 = vand.u32 %v666, 4294901760
    %v2926 = vsub.f32 %v666, %v2925
    %v2927 = vand.u32 %v2926, 4294901760
    %2928 = vmatpush1.msra.mxu0 %v2927
    %2929 = vmatprep.subr.mxu0 0.0
    %v2930 = vand.u32 %v667, 4294901760
    %v2931 = vsub.f32 %v667, %v2930
    %v2932 = vand.u32 %v2931, 4294901760
    %2933 = vmatpush1.msra.mxu0 %v2932
    %2934 = vmatprep.subr.mxu0 0.0
    %v2935 = vand.u32 %v668, 4294901760
    %v2936 = vsub.f32 %v668, %v2935
    %v2937 = vand.u32 %v2936, 4294901760
    %2938 = vmatpush1.msra.mxu0 %v2937
    %2939 = vmatprep.subr.mxu0 0.0
    %v2940 = vand.u32 %v669, 4294901760
    %v2941 = vsub.f32 %v669, %v2940
    %v2942 = vand.u32 %v2941, 4294901760
    %2943 = vmatpush1.msra.mxu0 %v2942
    %2944 = vmatprep.subr.mxu0 0.0
    %v2945 = vand.u32 %v670, 4294901760
    %v2946 = vsub.f32 %v670, %v2945
    %v2947 = vand.u32 %v2946, 4294901760
    %2948 = vmatpush1.msra.mxu0 %v2947
    %2949 = vmatprep.subr.mxu0 0.0
    %v2950 = vand.u32 %v671, 4294901760
    %v2951 = vsub.f32 %v671, %v2950
    %v2952 = vand.u32 %v2951, 4294901760
    %2953 = vmatpush1.msra.mxu0 %v2952
    %2954 = vmatprep.subr.mxu0 0.0
    %v2955 = vand.u32 %v672, 4294901760
    %v2956 = vsub.f32 %v672, %v2955
    %v2957 = vand.u32 %v2956, 4294901760
    %2958 = vmatpush1.msra.mxu0 %v2957
    %2959 = vmatprep.subr.mxu0 0.0
    %v2960 = vand.u32 %v673, 4294901760
    %v2961 = vsub.f32 %v673, %v2960
    %v2962 = vand.u32 %v2961, 4294901760
    %2963 = vmatpush1.msra.mxu0 %v2962
    %2964 = vmatprep.subr.mxu0 0.0
    %v2965 = vand.u32 %v674, 4294901760
    %v2966 = vsub.f32 %v674, %v2965
    %v2967 = vand.u32 %v2966, 4294901760
    %2968 = vmatpush1.msra.mxu0 %v2967
    %2969 = vmatprep.subr.mxu0 0.0
    %v2970 = vand.u32 %v675, 4294901760
    %v2971 = vsub.f32 %v675, %v2970
    %v2972 = vand.u32 %v2971, 4294901760
    %2973 = vmatpush1.msra.mxu0 %v2972
    %v2974 = vand.u32 %v583, 4294901760
    %2975 = vmatprep.mubr.f32.mxu0 %v2974
    %v2976 = vand.u32 %v582, 4294901760
    %2977 = vmatmul.mubr.f32.gmra.mrb[0].mxu0 %v2976
    %v2978 = vpop.f32.mrb[0].mxu0
    %v2979 = vadd.f32 %v2734, %v2978
    %v2980 = vpop.f32.mrb[0].mxu0
    %v2981 = vand.u32 %v587, 4294901760
    %2982 = vmatprep.mubr.f32.mxu0 %v2981
    %v2983 = vand.u32 %v586, 4294901760
    %2984 = vmatmul.mubr.f32.gmra.mrb[0].mxu0 %v2983
    %v2985 = vpop.f32.mrb[0].mxu0
    %v2986 = vadd.f32 %v2745, %v2985
    %v2987 = vpop.f32.mrb[0].mxu0
    %v2988 = vand.u32 %v591, 4294901760
    %2989 = vmatprep.mubr.f32.mxu0 %v2988
    %v2990 = vand.u32 %v590, 4294901760
    %2991 = vmatmul.mubr.f32.gmra.mrb[0].mxu0 %v2990
    %v2992 = vpop.f32.mrb[0].mxu0
    %v2993 = vadd.f32 %v2756, %v2992
    %v2994 = vpop.f32.mrb[0].mxu0
    %v2995 = vand.u32 %v595, 4294901760
    %2996 = vmatprep.mubr.f32.mxu0 %v2995
    %v2997 = vand.u32 %v594, 4294901760
    %2998 = vmatmul.mubr.f32.gmra.mrb[0].mxu0 %v2997
    %v2999 = vpop.f32.mrb[0].mxu0
    %v3000 = vadd.f32 %v2767, %v2999
    %v3001 = vpop.f32.mrb[0].mxu0
    %v3002 = vand.u32 %v599, 4294901760
    %3003 = vmatprep.mubr.f32.mxu0 %v3002
    %v3004 = vand.u32 %v598, 4294901760
    %3005 = vmatmul.mubr.f32.gmra.mrb[0].mxu0 %v3004
    %v3006 = vpop.f32.mrb[0].mxu0
    %v3007 = vadd.f32 %v2778, %v3006
    %v3008 = vpop.f32.mrb[0].mxu0
    %v3009 = vand.u32 %v603, 4294901760
    %3010 = vmatprep.mubr.f32.mxu0 %v3009
    %v3011 = vand.u32 %v602, 4294901760
    %3012 = vmatmul.mubr.f32.gmra.mrb[0].mxu0 %v3011
    %v3013 = vpop.f32.mrb[0].mxu0
    %v3014 = vadd.f32 %v2789, %v3013
    %v3015 = vpop.f32.mrb[0].mxu0
    %v3016 = vand.u32 %v607, 4294901760
    %3017 = vmatprep.mubr.f32.mxu0 %v3016
    %v3018 = vand.u32 %v606, 4294901760
    %3019 = vmatmul.mubr.f32.gmra.mrb[0].mxu0 %v3018
    %v3020 = vpop.f32.mrb[0].mxu0
    %v3021 = vadd.f32 %v2800, %v3020
    %v3022 = vpop.f32.mrb[0].mxu0
    %v3023 = vand.u32 %v611, 4294901760
    %3024 = vmatprep.mubr.f32.mxu0 %v3023
    %v3025 = vand.u32 %v610, 4294901760
    %3026 = vmatmul.mubr.f32.gmra.mrb[0].mxu0 %v3025
    %v3027 = vpop.f32.mrb[0].mxu0
    %v3028 = vadd.f32 %v2811, %v3027
    %v3029 = vpop.f32.mrb[0].mxu0
    %3030 = vdwg.mxu0
    %3031 = vmatprep.subr.mxu0 0.0
    %v3032 = vand.u32 %v644, 4294901760
    %3033 = vmatpush1.msra.mxu0 %v3032
    %3034 = vmatprep.subr.mxu0 0.0
    %v3035 = vand.u32 %v645, 4294901760
    %3036 = vmatpush1.msra.mxu0 %v3035
    %3037 = vmatprep.subr.mxu0 0.0
    %v3038 = vand.u32 %v646, 4294901760
    %3039 = vmatpush1.msra.mxu0 %v3038
    %3040 = vmatprep.subr.mxu0 0.0
    %v3041 = vand.u32 %v647, 4294901760
    %3042 = vmatpush1.msra.mxu0 %v3041
    %3043 = vmatprep.subr.mxu0 0.0
    %v3044 = vand.u32 %v648, 4294901760
    %3045 = vmatpush1.msra.mxu0 %v3044
    %3046 = vmatprep.subr.mxu0 0.0
    %v3047 = vand.u32 %v649, 4294901760
    %3048 = vmatpush1.msra.mxu0 %v3047
    %3049 = vmatprep.subr.mxu0 0.0
    %v3050 = vand.u32 %v650, 4294901760
    %3051 = vmatpush1.msra.mxu0 %v3050
    %3052 = vmatprep.subr.mxu0 0.0
    %v3053 = vand.u32 %v651, 4294901760
    %3054 = vmatpush1.msra.mxu0 %v3053
    %3055 = vmatprep.subr.mxu0 0.0
    %v3056 = vand.u32 %v652, 4294901760
    %3057 = vmatpush1.msra.mxu0 %v3056
    %3058 = vmatprep.subr.mxu0 0.0
    %v3059 = vand.u32 %v653, 4294901760
    %3060 = vmatpush1.msra.mxu0 %v3059
    %3061 = vmatprep.subr.mxu0 0.0
    %v3062 = vand.u32 %v654, 4294901760
    %3063 = vmatpush1.msra.mxu0 %v3062
    %3064 = vmatprep.subr.mxu0 0.0
    %v3065 = vand.u32 %v655, 4294901760
    %3066 = vmatpush1.msra.mxu0 %v3065
    %3067 = vmatprep.subr.mxu0 0.0
    %v3068 = vand.u32 %v656, 4294901760
    %3069 = vmatpush1.msra.mxu0 %v3068
    %3070 = vmatprep.subr.mxu0 0.0
    %v3071 = vand.u32 %v657, 4294901760
    %3072 = vmatpush1.msra.mxu0 %v3071
    %3073 = vmatprep.subr.mxu0 0.0
    %v3074 = vand.u32 %v658, 4294901760
    %3075 = vmatpush1.msra.mxu0 %v3074
    %3076 = vmatprep.subr.mxu0 0.0
    %v3077 = vand.u32 %v659, 4294901760
    %3078 = vmatpush1.msra.mxu0 %v3077
    %3079 = vmatprep.subr.mxu0 0.0
    %v3080 = vand.u32 %v660, 4294901760
    %3081 = vmatpush1.msra.mxu0 %v3080
    %3082 = vmatprep.subr.mxu0 0.0
    %v3083 = vand.u32 %v661, 4294901760
    %3084 = vmatpush1.msra.mxu0 %v3083
    %3085 = vmatprep.subr.mxu0 0.0
    %v3086 = vand.u32 %v662, 4294901760
    %3087 = vmatpush1.msra.mxu0 %v3086
    %3088 = vmatprep.subr.mxu0 0.0
    %v3089 = vand.u32 %v663, 4294901760
    %3090 = vmatpush1.msra.mxu0 %v3089
    %3091 = vmatprep.subr.mxu0 0.0
    %v3092 = vand.u32 %v664, 4294901760
    %3093 = vmatpush1.msra.mxu0 %v3092
    %3094 = vmatprep.subr.mxu0 0.0
    %v3095 = vand.u32 %v665, 4294901760
    %3096 = vmatpush1.msra.mxu0 %v3095
    %3097 = vmatprep.subr.mxu0 0.0
    %v3098 = vand.u32 %v666, 4294901760
    %3099 = vmatpush1.msra.mxu0 %v3098
    %3100 = vmatprep.subr.mxu0 0.0
    %v3101 = vand.u32 %v667, 4294901760
    %3102 = vmatpush1.msra.mxu0 %v3101
    %3103 = vmatprep.subr.mxu0 0.0
    %v3104 = vand.u32 %v668, 4294901760
    %3105 = vmatpush1.msra.mxu0 %v3104
    %3106 = vmatprep.subr.mxu0 0.0
    %v3107 = vand.u32 %v669, 4294901760
    %3108 = vmatpush1.msra.mxu0 %v3107
    %3109 = vmatprep.subr.mxu0 0.0
    %v3110 = vand.u32 %v670, 4294901760
    %3111 = vmatpush1.msra.mxu0 %v3110
    %3112 = vmatprep.subr.mxu0 0.0
    %v3113 = vand.u32 %v671, 4294901760
    %3114 = vmatpush1.msra.mxu0 %v3113
    %3115 = vmatprep.subr.mxu0 0.0
    %v3116 = vand.u32 %v672, 4294901760
    %3117 = vmatpush1.msra.mxu0 %v3116
    %3118 = vmatprep.subr.mxu0 0.0
    %v3119 = vand.u32 %v673, 4294901760
    %3120 = vmatpush1.msra.mxu0 %v3119
    %3121 = vmatprep.subr.mxu0 0.0
    %v3122 = vand.u32 %v674, 4294901760
    %3123 = vmatpush1.msra.mxu0 %v3122
    %3124 = vmatprep.subr.mxu0 0.0
    %v3125 = vand.u32 %v675, 4294901760
    %3126 = vmatpush1.msra.mxu0 %v3125
    %v3127 = vand.u32 %v583, 4294901760
    %3128 = vmatprep.mubr.f32.mxu0 %v3127
    %v3129 = vand.u32 %v582, 4294901760
    %3130 = vmatmul.mubr.f32.gmra.mrb[0].mxu0 %v3129
    %v3131 = vpop.f32.mrb[0].mxu0
    %v3132 = vadd.f32 %v2979, %v3131
    %v3133 = vpop.f32.mrb[0].mxu0
    %v3134 = vand.u32 %v587, 4294901760
    %3135 = vmatprep.mubr.f32.mxu0 %v3134
    %v3136 = vand.u32 %v586, 4294901760
    %3137 = vmatmul.mubr.f32.gmra.mrb[0].mxu0 %v3136
    %v3138 = vpop.f32.mrb[0].mxu0
    %v3139 = vadd.f32 %v2986, %v3138
    %v3140 = vpop.f32.mrb[0].mxu0
    %v3141 = vand.u32 %v591, 4294901760
    %3142 = vmatprep.mubr.f32.mxu0 %v3141
    %v3143 = vand.u32 %v590, 4294901760
    %3144 = vmatmul.mubr.f32.gmra.mrb[0].mxu0 %v3143
    %v3145 = vpop.f32.mrb[0].mxu0
    %v3146 = vadd.f32 %v2993, %v3145
    %v3147 = vpop.f32.mrb[0].mxu0
    %v3148 = vand.u32 %v595, 4294901760
    %3149 = vmatprep.mubr.f32.mxu0 %v3148
    %v3150 = vand.u32 %v594, 4294901760
    %3151 = vmatmul.mubr.f32.gmra.mrb[0].mxu0 %v3150
    %v3152 = vpop.f32.mrb[0].mxu0
    %v3153 = vadd.f32 %v3000, %v3152
    %v3154 = vpop.f32.mrb[0].mxu0
    %v3155 = vand.u32 %v599, 4294901760
    %3156 = vmatprep.mubr.f32.mxu0 %v3155
    %v3157 = vand.u32 %v598, 4294901760
    %3158 = vmatmul.mubr.f32.gmra.mrb[0].mxu0 %v3157
    %v3159 = vpop.f32.mrb[0].mxu0
    %v3160 = vadd.f32 %v3007, %v3159
    %v3161 = vpop.f32.mrb[0].mxu0
    %v3162 = vand.u32 %v603, 4294901760
    %3163 = vmatprep.mubr.f32.mxu0 %v3162
    %v3164 = vand.u32 %v602, 4294901760
    %3165 = vmatmul.mubr.f32.gmra.mrb[0].mxu0 %v3164
    %v3166 = vpop.f32.mrb[0].mxu0
    %v3167 = vadd.f32 %v3014, %v3166
    %v3168 = vpop.f32.mrb[0].mxu0
    %v3169 = vand.u32 %v607, 4294901760
    %3170 = vmatprep.mubr.f32.mxu0 %v3169
    %v3171 = vand.u32 %v606, 4294901760
    %3172 = vmatmul.mubr.f32.gmra.mrb[0].mxu0 %v3171
    %v3173 = vpop.f32.mrb[0].mxu0
    %v3174 = vadd.f32 %v3021, %v3173
    %v3175 = vpop.f32.mrb[0].mxu0
    %v3176 = vand.u32 %v611, 4294901760
    %3177 = vmatprep.mubr.f32.mxu0 %v3176
    %v3178 = vand.u32 %v610, 4294901760
    %3179 = vmatmul.mubr.f32.gmra.mrb[0].mxu0 %v3178
    %v3180 = vpop.f32.mrb[0].mxu0
    %v3181 = vadd.f32 %v3028, %v3180
    %v3182 = vpop.f32.mrb[0].mxu0
    %3183 = vdwg.mxu0
    %v3184 = vrcp.pop %v3132
    %v3185 = vrcp.pop %v3139
    %v3186 = vrcp.pop %v3146
    %v3187 = vrcp.pop %v3153
    %v3188 = vrcp.pop %v3160
    %v3189 = vrcp.pop %v3167
    %v3190 = vrcp.pop %v3174
    %v3191 = vrcp.pop %v3181
    %v3192 = vld [vmem:[%s3] sm:$0xff]
    %v3193 = vld [vmem:[%s3 + $0x8] sm:$0xff]
    %v3194 = vld [vmem:[%s3 + $0x10] sm:$0xff]
    %v3195 = vld [vmem:[%s3 + $0x18] sm:$0xff]
    %v3196 = vld [vmem:[%s3 + $0x20] sm:$0xff]
    %v3197 = vld [vmem:[%s3 + $0x28] sm:$0xff]
    %v3198 = vld [vmem:[%s3 + $0x30] sm:$0xff]
    %v3199 = vld [vmem:[%s3 + $0x38] sm:$0xff]
    %v3200 = vld [vmem:[%s3 + $0x40] sm:$0xff]
    %v3201 = vld [vmem:[%s3 + $0x48] sm:$0xff]
    %v3202 = vld [vmem:[%s3 + $0x50] sm:$0xff]
    %v3203 = vld [vmem:[%s3 + $0x58] sm:$0xff]
    %v3204 = vld [vmem:[%s3 + $0x60] sm:$0xff]
    %v3205 = vld [vmem:[%s3 + $0x68] sm:$0xff]
    %v3206 = vld [vmem:[%s3 + $0x70] sm:$0xff]
    %v3207 = vld [vmem:[%s3 + $0x78] sm:$0xff]
    %v3209 = vsel %vm85, %v3184, 0
    %v3212 = vsel %vm85, %v3185, 0
    %v3215 = vsel %vm85, %v3186, 0
    %v3218 = vsel %vm85, %v3187, 0
    %v3221 = vsel %vm85, %v3188, 0
    %v3224 = vsel %vm85, %v3189, 0
    %v3227 = vsel %vm85, %v3190, 0
    %v3230 = vsel %vm85, %v3191, 0
    %v3232 = vand.u32 %v3193, 4294901760
    %3233 = vmatprep.subr.mxu0 %v3232
    %v3234 = vand.u32 %v3192, 4294901760
    %3235 = vmatpush1.msra.mxu0 %v3234
    %v3236 = vand.u32 %v3197, 4294901760
    %3237 = vmatprep.subr.mxu0 %v3236
    %v3238 = vand.u32 %v3196, 4294901760
    %3239 = vmatpush1.msra.mxu0 %v3238
    %v3240 = vand.u32 %v3201, 4294901760
    %3241 = vmatprep.subr.mxu0 %v3240
    %v3242 = vand.u32 %v3200, 4294901760
    %3243 = vmatpush1.msra.mxu0 %v3242
    %v3244 = vand.u32 %v3205, 4294901760
    %3245 = vmatprep.subr.mxu0 %v3244
    %v3246 = vand.u32 %v3204, 4294901760
    %3247 = vmatpush1.msra.mxu0 %v3246
    %3248 = vmatprep.subr.mxu0 0.0
    %3249 = vmatpush1.msra.mxu0 0.0
    %3250 = vmatprep.subr.mxu0 0.0
    %3251 = vmatpush1.msra.mxu0 0.0
    %3252 = vmatprep.subr.mxu0 0.0
    %3253 = vmatpush1.msra.mxu0 0.0
    %3254 = vmatprep.subr.mxu0 0.0
    %3255 = vmatpush1.msra.mxu0 0.0
    %3256 = vmatprep.subr.mxu0 0.0
    %3257 = vmatpush1.msra.mxu0 0.0
    %3258 = vmatprep.subr.mxu0 0.0
    %3259 = vmatpush1.msra.mxu0 0.0
    %3260 = vmatprep.subr.mxu0 0.0
    %3261 = vmatpush1.msra.mxu0 0.0
    %3262 = vmatprep.subr.mxu0 0.0
    %3263 = vmatpush1.msra.mxu0 0.0
    %3264 = vmatprep.subr.mxu0 0.0
    %3265 = vmatpush1.msra.mxu0 0.0
    %3266 = vmatprep.subr.mxu0 0.0
    %3267 = vmatpush1.msra.mxu0 0.0
    %3268 = vmatprep.subr.mxu0 0.0
    %3269 = vmatpush1.msra.mxu0 0.0
    %3270 = vmatprep.subr.mxu0 0.0
    %3271 = vmatpush1.msra.mxu0 0.0
    %3272 = vmatprep.subr.mxu0 0.0
    %3273 = vmatpush1.msra.mxu0 0.0
    %3274 = vmatprep.subr.mxu0 0.0
    %3275 = vmatpush1.msra.mxu0 0.0
    %3276 = vmatprep.subr.mxu0 0.0
    %3277 = vmatpush1.msra.mxu0 0.0
    %3278 = vmatprep.subr.mxu0 0.0
    %3279 = vmatpush1.msra.mxu0 0.0
    %3280 = vmatprep.subr.mxu0 0.0
    %3281 = vmatpush1.msra.mxu0 0.0
    %3282 = vmatprep.subr.mxu0 0.0
    %3283 = vmatpush1.msra.mxu0 0.0
    %3284 = vmatprep.subr.mxu0 0.0
    %3285 = vmatpush1.msra.mxu0 0.0
    %3286 = vmatprep.subr.mxu0 0.0
    %3287 = vmatpush1.msra.mxu0 0.0
    %3288 = vmatprep.subr.mxu0 0.0
    %3289 = vmatpush1.msra.mxu0 0.0
    %3290 = vmatprep.subr.mxu0 0.0
    %3291 = vmatpush1.msra.mxu0 0.0
    %3292 = vmatprep.subr.mxu0 0.0
    %3293 = vmatpush1.msra.mxu0 0.0
    %3294 = vmatprep.subr.mxu0 0.0
    %3295 = vmatpush1.msra.mxu0 0.0
    %3296 = vmatprep.subr.mxu0 0.0
    %3297 = vmatpush1.msra.mxu0 0.0
    %3298 = vmatprep.subr.mxu0 0.0
    %3299 = vmatpush1.msra.mxu0 0.0
    %3300 = vmatprep.subr.mxu0 0.0
    %3301 = vmatpush1.msra.mxu0 0.0
    %3302 = vmatprep.subr.mxu0 0.0
    %3303 = vmatpush1.msra.mxu0 0.0
    %3304 = vmatprep.mubr.f32.mxu0 0.0
    %v3305 = vand.u32 %v3209, 4294901760
    %v3306 = vsub.f32 %v3209, %v3305
    %v3307 = vand.u32 %v3306, 4294901760
    %v3308 = vsub.f32 %v3306, %v3307
    %v3309 = vand.u32 %v3308, 4294901760
    %3310 = vmatmul.mubr.f32.gmra.mrb[0].mxu0 %v3309
    %v3311 = vpop.f32.mrb[0].mxu0
    %v3312 = vadd.f32 0.0, %v3311
    %v3313 = vpop.f32.mrb[0].mxu0
    %v3314 = vadd.f32 0.0, %v3313
    %3315 = vmatprep.mubr.f32.mxu0 0.0
    %v3316 = vand.u32 %v3212, 4294901760
    %v3317 = vsub.f32 %v3212, %v3316
    %v3318 = vand.u32 %v3317, 4294901760
    %v3319 = vsub.f32 %v3317, %v3318
    %v3320 = vand.u32 %v3319, 4294901760
    %3321 = vmatmul.mubr.f32.gmra.mrb[0].mxu0 %v3320
    %v3322 = vpop.f32.mrb[0].mxu0
    %v3323 = vadd.f32 0.0, %v3322
    %v3324 = vpop.f32.mrb[0].mxu0
    %v3325 = vadd.f32 0.0, %v3324
    %3326 = vmatprep.mubr.f32.mxu0 0.0
    %v3327 = vand.u32 %v3215, 4294901760
    %v3328 = vsub.f32 %v3215, %v3327
    %v3329 = vand.u32 %v3328, 4294901760
    %v3330 = vsub.f32 %v3328, %v3329
    %v3331 = vand.u32 %v3330, 4294901760
    %3332 = vmatmul.mubr.f32.gmra.mrb[0].mxu0 %v3331
    %v3333 = vpop.f32.mrb[0].mxu0
    %v3334 = vadd.f32 0.0, %v3333
    %v3335 = vpop.f32.mrb[0].mxu0
    %v3336 = vadd.f32 0.0, %v3335
    %3337 = vmatprep.mubr.f32.mxu0 0.0
    %v3338 = vand.u32 %v3218, 4294901760
    %v3339 = vsub.f32 %v3218, %v3338
    %v3340 = vand.u32 %v3339, 4294901760
    %v3341 = vsub.f32 %v3339, %v3340
    %v3342 = vand.u32 %v3341, 4294901760
    %3343 = vmatmul.mubr.f32.gmra.mrb[0].mxu0 %v3342
    %v3344 = vpop.f32.mrb[0].mxu0
    %v3345 = vadd.f32 0.0, %v3344
    %v3346 = vpop.f32.mrb[0].mxu0
    %v3347 = vadd.f32 0.0, %v3346
    %3348 = vmatprep.mubr.f32.mxu0 0.0
    %v3349 = vand.u32 %v3221, 4294901760
    %v3350 = vsub.f32 %v3221, %v3349
    %v3351 = vand.u32 %v3350, 4294901760
    %v3352 = vsub.f32 %v3350, %v3351
    %v3353 = vand.u32 %v3352, 4294901760
    %3354 = vmatmul.mubr.f32.gmra.mrb[0].mxu0 %v3353
    %v3355 = vpop.f32.mrb[0].mxu0
    %v3356 = vadd.f32 0.0, %v3355
    %v3357 = vpop.f32.mrb[0].mxu0
    %v3358 = vadd.f32 0.0, %v3357
    %3359 = vmatprep.mubr.f32.mxu0 0.0
    %v3360 = vand.u32 %v3224, 4294901760
    %v3361 = vsub.f32 %v3224, %v3360
    %v3362 = vand.u32 %v3361, 4294901760
    %v3363 = vsub.f32 %v3361, %v3362
    %v3364 = vand.u32 %v3363, 4294901760
    %3365 = vmatmul.mubr.f32.gmra.mrb[0].mxu0 %v3364
    %v3366 = vpop.f32.mrb[0].mxu0
    %v3367 = vadd.f32 0.0, %v3366
    %v3368 = vpop.f32.mrb[0].mxu0
    %v3369 = vadd.f32 0.0, %v3368
    %3370 = vmatprep.mubr.f32.mxu0 0.0
    %v3371 = vand.u32 %v3227, 4294901760
    %v3372 = vsub.f32 %v3227, %v3371
    %v3373 = vand.u32 %v3372, 4294901760
    %v3374 = vsub.f32 %v3372, %v3373
    %v3375 = vand.u32 %v3374, 4294901760
    %3376 = vmatmul.mubr.f32.gmra.mrb[0].mxu0 %v3375
    %v3377 = vpop.f32.mrb[0].mxu0
    %v3378 = vadd.f32 0.0, %v3377
    %v3379 = vpop.f32.mrb[0].mxu0
    %v3380 = vadd.f32 0.0, %v3379
    %3381 = vmatprep.mubr.f32.mxu0 0.0
    %v3382 = vand.u32 %v3230, 4294901760
    %v3383 = vsub.f32 %v3230, %v3382
    %v3384 = vand.u32 %v3383, 4294901760
    %v3385 = vsub.f32 %v3383, %v3384
    %v3386 = vand.u32 %v3385, 4294901760
    %3387 = vmatmul.mubr.f32.gmra.mrb[0].mxu0 %v3386
    %v3388 = vpop.f32.mrb[0].mxu0
    %v3389 = vadd.f32 0.0, %v3388
    %v3390 = vpop.f32.mrb[0].mxu0
    %v3391 = vadd.f32 0.0, %v3390
    %3392 = vdwg.mxu0
    %v3393 = vand.u32 %v3193, 4294901760
    %v3394 = vsub.f32 %v3193, %v3393
    %v3395 = vand.u32 %v3394, 4294901760
    %v3396 = vsub.f32 %v3394, %v3395
    %v3397 = vand.u32 %v3396, 4294901760
    %3398 = vmatprep.subr.mxu0 %v3397
    %v3399 = vand.u32 %v3192, 4294901760
    %v3400 = vsub.f32 %v3192, %v3399
    %v3401 = vand.u32 %v3400, 4294901760
    %v3402 = vsub.f32 %v3400, %v3401
    %v3403 = vand.u32 %v3402, 4294901760
    %3404 = vmatpush1.msra.mxu0 %v3403
    %v3405 = vand.u32 %v3197, 4294901760
    %v3406 = vsub.f32 %v3197, %v3405
    %v3407 = vand.u32 %v3406, 4294901760
    %v3408 = vsub.f32 %v3406, %v3407
    %v3409 = vand.u32 %v3408, 4294901760
    %3410 = vmatprep.subr.mxu0 %v3409
    %v3411 = vand.u32 %v3196, 4294901760
    %v3412 = vsub.f32 %v3196, %v3411
    %v3413 = vand.u32 %v3412, 4294901760
    %v3414 = vsub.f32 %v3412, %v3413
    %v3415 = vand.u32 %v3414, 4294901760
    %3416 = vmatpush1.msra.mxu0 %v3415
    %v3417 = vand.u32 %v3201, 4294901760
    %v3418 = vsub.f32 %v3201, %v3417
    %v3419 = vand.u32 %v3418, 4294901760
    %v3420 = vsub.f32 %v3418, %v3419
    %v3421 = vand.u32 %v3420, 4294901760
    %3422 = vmatprep.subr.mxu0 %v3421
    %v3423 = vand.u32 %v3200, 4294901760
    %v3424 = vsub.f32 %v3200, %v3423
    %v3425 = vand.u32 %v3424, 4294901760
    %v3426 = vsub.f32 %v3424, %v3425
    %v3427 = vand.u32 %v3426, 4294901760
    %3428 = vmatpush1.msra.mxu0 %v3427
    %v3429 = vand.u32 %v3205, 4294901760
    %v3430 = vsub.f32 %v3205, %v3429
    %v3431 = vand.u32 %v3430, 4294901760
    %v3432 = vsub.f32 %v3430, %v3431
    %v3433 = vand.u32 %v3432, 4294901760
    %3434 = vmatprep.subr.mxu0 %v3433
    %v3435 = vand.u32 %v3204, 4294901760
    %v3436 = vsub.f32 %v3204, %v3435
    %v3437 = vand.u32 %v3436, 4294901760
    %v3438 = vsub.f32 %v3436, %v3437
    %v3439 = vand.u32 %v3438, 4294901760
    %3440 = vmatpush1.msra.mxu0 %v3439
    %3441 = vmatprep.subr.mxu0 0.0
    %3442 = vmatpush1.msra.mxu0 0.0
    %3443 = vmatprep.subr.mxu0 0.0
    %3444 = vmatpush1.msra.mxu0 0.0
    %3445 = vmatprep.subr.mxu0 0.0
    %3446 = vmatpush1.msra.mxu0 0.0
    %3447 = vmatprep.subr.mxu0 0.0
    %3448 = vmatpush1.msra.mxu0 0.0
    %3449 = vmatprep.subr.mxu0 0.0
    %3450 = vmatpush1.msra.mxu0 0.0
    %3451 = vmatprep.subr.mxu0 0.0
    %3452 = vmatpush1.msra.mxu0 0.0
    %3453 = vmatprep.subr.mxu0 0.0
    %3454 = vmatpush1.msra.mxu0 0.0
    %3455 = vmatprep.subr.mxu0 0.0
    %3456 = vmatpush1.msra.mxu0 0.0
    %3457 = vmatprep.subr.mxu0 0.0
    %3458 = vmatpush1.msra.mxu0 0.0
    %3459 = vmatprep.subr.mxu0 0.0
    %3460 = vmatpush1.msra.mxu0 0.0
    %3461 = vmatprep.subr.mxu0 0.0
    %3462 = vmatpush1.msra.mxu0 0.0
    %3463 = vmatprep.subr.mxu0 0.0
    %3464 = vmatpush1.msra.mxu0 0.0
    %3465 = vmatprep.subr.mxu0 0.0
    %3466 = vmatpush1.msra.mxu0 0.0
    %3467 = vmatprep.subr.mxu0 0.0
    %3468 = vmatpush1.msra.mxu0 0.0
    %3469 = vmatprep.subr.mxu0 0.0
    %3470 = vmatpush1.msra.mxu0 0.0
    %3471 = vmatprep.subr.mxu0 0.0
    %3472 = vmatpush1.msra.mxu0 0.0
    %3473 = vmatprep.subr.mxu0 0.0
    %3474 = vmatpush1.msra.mxu0 0.0
    %3475 = vmatprep.subr.mxu0 0.0
    %3476 = vmatpush1.msra.mxu0 0.0
    %3477 = vmatprep.subr.mxu0 0.0
    %3478 = vmatpush1.msra.mxu0 0.0
    %3479 = vmatprep.subr.mxu0 0.0
    %3480 = vmatpush1.msra.mxu0 0.0
    %3481 = vmatprep.subr.mxu0 0.0
    %3482 = vmatpush1.msra.mxu0 0.0
    %3483 = vmatprep.subr.mxu0 0.0
    %3484 = vmatpush1.msra.mxu0 0.0
    %3485 = vmatprep.subr.mxu0 0.0
    %3486 = vmatpush1.msra.mxu0 0.0
    %3487 = vmatprep.subr.mxu0 0.0
    %3488 = vmatpush1.msra.mxu0 0.0
    %3489 = vmatprep.subr.mxu0 0.0
    %3490 = vmatpush1.msra.mxu0 0.0
    %3491 = vmatprep.subr.mxu0 0.0
    %3492 = vmatpush1.msra.mxu0 0.0
    %3493 = vmatprep.subr.mxu0 0.0
    %3494 = vmatpush1.msra.mxu0 0.0
    %3495 = vmatprep.subr.mxu0 0.0
    %3496 = vmatpush1.msra.mxu0 0.0
    %3497 = vmatprep.mubr.f32.mxu0 0.0
    %v3498 = vand.u32 %v3209, 4294901760
    %3499 = vmatmul.mubr.f32.gmra.mrb[0].mxu0 %v3498
    %v3500 = vpop.f32.mrb[0].mxu0
    %v3501 = vadd.f32 %v3312, %v3500
    %v3502 = vpop.f32.mrb[0].mxu0
    %v3503 = vadd.f32 %v3314, %v3502
    %3504 = vmatprep.mubr.f32.mxu0 0.0
    %v3505 = vand.u32 %v3212, 4294901760
    %3506 = vmatmul.mubr.f32.gmra.mrb[0].mxu0 %v3505
    %v3507 = vpop.f32.mrb[0].mxu0
    %v3508 = vadd.f32 %v3323, %v3507
    %v3509 = vpop.f32.mrb[0].mxu0
    %v3510 = vadd.f32 %v3325, %v3509
    %3511 = vmatprep.mubr.f32.mxu0 0.0
    %v3512 = vand.u32 %v3215, 4294901760
    %3513 = vmatmul.mubr.f32.gmra.mrb[0].mxu0 %v3512
    %v3514 = vpop.f32.mrb[0].mxu0
    %v3515 = vadd.f32 %v3334, %v3514
    %v3516 = vpop.f32.mrb[0].mxu0
    %v3517 = vadd.f32 %v3336, %v3516
    %3518 = vmatprep.mubr.f32.mxu0 0.0
    %v3519 = vand.u32 %v3218, 4294901760
    %3520 = vmatmul.mubr.f32.gmra.mrb[0].mxu0 %v3519
    %v3521 = vpop.f32.mrb[0].mxu0
    %v3522 = vadd.f32 %v3345, %v3521
    %v3523 = vpop.f32.mrb[0].mxu0
    %v3524 = vadd.f32 %v3347, %v3523
    %3525 = vmatprep.mubr.f32.mxu0 0.0
    %v3526 = vand.u32 %v3221, 4294901760
    %3527 = vmatmul.mubr.f32.gmra.mrb[0].mxu0 %v3526
    %v3528 = vpop.f32.mrb[0].mxu0
    %v3529 = vadd.f32 %v3356, %v3528
    %v3530 = vpop.f32.mrb[0].mxu0
    %v3531 = vadd.f32 %v3358, %v3530
    %3532 = vmatprep.mubr.f32.mxu0 0.0
    %v3533 = vand.u32 %v3224, 4294901760
    %3534 = vmatmul.mubr.f32.gmra.mrb[0].mxu0 %v3533
    %v3535 = vpop.f32.mrb[0].mxu0
    %v3536 = vadd.f32 %v3367, %v3535
    %v3537 = vpop.f32.mrb[0].mxu0
    %v3538 = vadd.f32 %v3369, %v3537
    %3539 = vmatprep.mubr.f32.mxu0 0.0
    %v3540 = vand.u32 %v3227, 4294901760
    %3541 = vmatmul.mubr.f32.gmra.mrb[0].mxu0 %v3540
    %v3542 = vpop.f32.mrb[0].mxu0
    %v3543 = vadd.f32 %v3378, %v3542
    %v3544 = vpop.f32.mrb[0].mxu0
    %v3545 = vadd.f32 %v3380, %v3544
    %3546 = vmatprep.mubr.f32.mxu0 0.0
    %v3547 = vand.u32 %v3230, 4294901760
    %3548 = vmatmul.mubr.f32.gmra.mrb[0].mxu0 %v3547
    %v3549 = vpop.f32.mrb[0].mxu0
    %v3550 = vadd.f32 %v3389, %v3549
    %v3551 = vpop.f32.mrb[0].mxu0
    %v3552 = vadd.f32 %v3391, %v3551
    %3553 = vdwg.mxu0
    %v3554 = vand.u32 %v3193, 4294901760
    %v3555 = vsub.f32 %v3193, %v3554
    %3556 = vmatprep.subr.mxu0 %v3555
    %v3557 = vand.u32 %v3192, 4294901760
    %v3558 = vsub.f32 %v3192, %v3557
    %3559 = vmatpush1.msra.mxu0 %v3558
    %v3560 = vand.u32 %v3197, 4294901760
    %v3561 = vsub.f32 %v3197, %v3560
    %3562 = vmatprep.subr.mxu0 %v3561
    %v3563 = vand.u32 %v3196, 4294901760
    %v3564 = vsub.f32 %v3196, %v3563
    %3565 = vmatpush1.msra.mxu0 %v3564
    %v3566 = vand.u32 %v3201, 4294901760
    %v3567 = vsub.f32 %v3201, %v3566
    %3568 = vmatprep.subr.mxu0 %v3567
    %v3569 = vand.u32 %v3200, 4294901760
    %v3570 = vsub.f32 %v3200, %v3569
    %3571 = vmatpush1.msra.mxu0 %v3570
    %v3572 = vand.u32 %v3205, 4294901760
    %v3573 = vsub.f32 %v3205, %v3572
    %3574 = vmatprep.subr.mxu0 %v3573
    %v3575 = vand.u32 %v3204, 4294901760
    %v3576 = vsub.f32 %v3204, %v3575
    %3577 = vmatpush1.msra.mxu0 %v3576
    %3578 = vmatprep.subr.mxu0 0.0
    %3579 = vmatpush1.msra.mxu0 0.0
    %3580 = vmatprep.subr.mxu0 0.0
    %3581 = vmatpush1.msra.mxu0 0.0
    %3582 = vmatprep.subr.mxu0 0.0
    %3583 = vmatpush1.msra.mxu0 0.0
    %3584 = vmatprep.subr.mxu0 0.0
    %3585 = vmatpush1.msra.mxu0 0.0
    %3586 = vmatprep.subr.mxu0 0.0
    %3587 = vmatpush1.msra.mxu0 0.0
    %3588 = vmatprep.subr.mxu0 0.0
    %3589 = vmatpush1.msra.mxu0 0.0
    %3590 = vmatprep.subr.mxu0 0.0
    %3591 = vmatpush1.msra.mxu0 0.0
    %3592 = vmatprep.subr.mxu0 0.0
    %3593 = vmatpush1.msra.mxu0 0.0
    %3594 = vmatprep.subr.mxu0 0.0
    %3595 = vmatpush1.msra.mxu0 0.0
    %3596 = vmatprep.subr.mxu0 0.0
    %3597 = vmatpush1.msra.mxu0 0.0
    %3598 = vmatprep.subr.mxu0 0.0
    %3599 = vmatpush1.msra.mxu0 0.0
    %3600 = vmatprep.subr.mxu0 0.0
    %3601 = vmatpush1.msra.mxu0 0.0
    %3602 = vmatprep.subr.mxu0 0.0
    %3603 = vmatpush1.msra.mxu0 0.0
    %3604 = vmatprep.subr.mxu0 0.0
    %3605 = vmatpush1.msra.mxu0 0.0
    %3606 = vmatprep.subr.mxu0 0.0
    %3607 = vmatpush1.msra.mxu0 0.0
    %3608 = vmatprep.subr.mxu0 0.0
    %3609 = vmatpush1.msra.mxu0 0.0
    %3610 = vmatprep.subr.mxu0 0.0
    %3611 = vmatpush1.msra.mxu0 0.0
    %3612 = vmatprep.subr.mxu0 0.0
    %3613 = vmatpush1.msra.mxu0 0.0
    %3614 = vmatprep.subr.mxu0 0.0
    %3615 = vmatpush1.msra.mxu0 0.0
    %3616 = vmatprep.subr.mxu0 0.0
    %3617 = vmatpush1.msra.mxu0 0.0
    %3618 = vmatprep.subr.mxu0 0.0
    %3619 = vmatpush1.msra.mxu0 0.0
    %3620 = vmatprep.subr.mxu0 0.0
    %3621 = vmatpush1.msra.mxu0 0.0
    %3622 = vmatprep.subr.mxu0 0.0
    %3623 = vmatpush1.msra.mxu0 0.0
    %3624 = vmatprep.subr.mxu0 0.0
    %3625 = vmatpush1.msra.mxu0 0.0
    %3626 = vmatprep.subr.mxu0 0.0
    %3627 = vmatpush1.msra.mxu0 0.0
    %3628 = vmatprep.subr.mxu0 0.0
    %3629 = vmatpush1.msra.mxu0 0.0
    %3630 = vmatprep.subr.mxu0 0.0
    %3631 = vmatpush1.msra.mxu0 0.0
    %3632 = vmatprep.subr.mxu0 0.0
    %3633 = vmatpush1.msra.mxu0 0.0
    %3634 = vmatprep.mubr.f32.mxu0 0.0
    %v3635 = vand.u32 %v3209, 4294901760
    %v3636 = vsub.f32 %v3209, %v3635
    %3637 = vmatmul.mubr.f32.gmra.mrb[0].mxu0 %v3636
    %v3638 = vpop.f32.mrb[0].mxu0
    %v3639 = vadd.f32 %v3501, %v3638
    %v3640 = vpop.f32.mrb[0].mxu0
    %v3641 = vadd.f32 %v3503, %v3640
    %3642 = vmatprep.mubr.f32.mxu0 0.0
    %v3643 = vand.u32 %v3212, 4294901760
    %v3644 = vsub.f32 %v3212, %v3643
    %3645 = vmatmul.mubr.f32.gmra.mrb[0].mxu0 %v3644
    %v3646 = vpop.f32.mrb[0].mxu0
    %v3647 = vadd.f32 %v3508, %v3646
    %v3648 = vpop.f32.mrb[0].mxu0
    %v3649 = vadd.f32 %v3510, %v3648
    %3650 = vmatprep.mubr.f32.mxu0 0.0
    %v3651 = vand.u32 %v3215, 4294901760
    %v3652 = vsub.f32 %v3215, %v3651
    %3653 = vmatmul.mubr.f32.gmra.mrb[0].mxu0 %v3652
    %v3654 = vpop.f32.mrb[0].mxu0
    %v3655 = vadd.f32 %v3515, %v3654
    %v3656 = vpop.f32.mrb[0].mxu0
    %v3657 = vadd.f32 %v3517, %v3656
    %3658 = vmatprep.mubr.f32.mxu0 0.0
    %v3659 = vand.u32 %v3218, 4294901760
    %v3660 = vsub.f32 %v3218, %v3659
    %3661 = vmatmul.mubr.f32.gmra.mrb[0].mxu0 %v3660
    %v3662 = vpop.f32.mrb[0].mxu0
    %v3663 = vadd.f32 %v3522, %v3662
    %v3664 = vpop.f32.mrb[0].mxu0
    %v3665 = vadd.f32 %v3524, %v3664
    %3666 = vmatprep.mubr.f32.mxu0 0.0
    %v3667 = vand.u32 %v3221, 4294901760
    %v3668 = vsub.f32 %v3221, %v3667
    %3669 = vmatmul.mubr.f32.gmra.mrb[0].mxu0 %v3668
    %v3670 = vpop.f32.mrb[0].mxu0
    %v3671 = vadd.f32 %v3529, %v3670
    %v3672 = vpop.f32.mrb[0].mxu0
    %v3673 = vadd.f32 %v3531, %v3672
    %3674 = vmatprep.mubr.f32.mxu0 0.0
    %v3675 = vand.u32 %v3224, 4294901760
    %v3676 = vsub.f32 %v3224, %v3675
    %3677 = vmatmul.mubr.f32.gmra.mrb[0].mxu0 %v3676
    %v3678 = vpop.f32.mrb[0].mxu0
    %v3679 = vadd.f32 %v3536, %v3678
    %v3680 = vpop.f32.mrb[0].mxu0
    %v3681 = vadd.f32 %v3538, %v3680
    %3682 = vmatprep.mubr.f32.mxu0 0.0
    %v3683 = vand.u32 %v3227, 4294901760
    %v3684 = vsub.f32 %v3227, %v3683
    %3685 = vmatmul.mubr.f32.gmra.mrb[0].mxu0 %v3684
    %v3686 = vpop.f32.mrb[0].mxu0
    %v3687 = vadd.f32 %v3543, %v3686
    %v3688 = vpop.f32.mrb[0].mxu0
    %v3689 = vadd.f32 %v3545, %v3688
    %3690 = vmatprep.mubr.f32.mxu0 0.0
    %v3691 = vand.u32 %v3230, 4294901760
    %v3692 = vsub.f32 %v3230, %v3691
    %3693 = vmatmul.mubr.f32.gmra.mrb[0].mxu0 %v3692
    %v3694 = vpop.f32.mrb[0].mxu0
    %v3695 = vadd.f32 %v3550, %v3694
    %v3696 = vpop.f32.mrb[0].mxu0
    %v3697 = vadd.f32 %v3552, %v3696
    %3698 = vdwg.mxu0
    %v3699 = vand.u32 %v3193, 4294901760
    %3700 = vmatprep.subr.mxu0 %v3699
    %v3701 = vand.u32 %v3192, 4294901760
    %3702 = vmatpush1.msra.mxu0 %v3701
    %v3703 = vand.u32 %v3197, 4294901760
    %3704 = vmatprep.subr.mxu0 %v3703
    %v3705 = vand.u32 %v3196, 4294901760
    %3706 = vmatpush1.msra.mxu0 %v3705
    %v3707 = vand.u32 %v3201, 4294901760
    %3708 = vmatprep.subr.mxu0 %v3707
    %v3709 = vand.u32 %v3200, 4294901760
    %3710 = vmatpush1.msra.mxu0 %v3709
    %v3711 = vand.u32 %v3205, 4294901760
    %3712 = vmatprep.subr.mxu0 %v3711
    %v3713 = vand.u32 %v3204, 4294901760
    %3714 = vmatpush1.msra.mxu0 %v3713
    %3715 = vmatprep.subr.mxu0 0.0
    %3716 = vmatpush1.msra.mxu0 0.0
    %3717 = vmatprep.subr.mxu0 0.0
    %3718 = vmatpush1.msra.mxu0 0.0
    %3719 = vmatprep.subr.mxu0 0.0
    %3720 = vmatpush1.msra.mxu0 0.0
    %3721 = vmatprep.subr.mxu0 0.0
    %3722 = vmatpush1.msra.mxu0 0.0
    %3723 = vmatprep.subr.mxu0 0.0
    %3724 = vmatpush1.msra.mxu0 0.0
    %3725 = vmatprep.subr.mxu0 0.0
    %3726 = vmatpush1.msra.mxu0 0.0
    %3727 = vmatprep.subr.mxu0 0.0
    %3728 = vmatpush1.msra.mxu0 0.0
    %3729 = vmatprep.subr.mxu0 0.0
    %3730 = vmatpush1.msra.mxu0 0.0
    %3731 = vmatprep.subr.mxu0 0.0
    %3732 = vmatpush1.msra.mxu0 0.0
    %3733 = vmatprep.subr.mxu0 0.0
    %3734 = vmatpush1.msra.mxu0 0.0
    %3735 = vmatprep.subr.mxu0 0.0
    %3736 = vmatpush1.msra.mxu0 0.0
    %3737 = vmatprep.subr.mxu0 0.0
    %3738 = vmatpush1.msra.mxu0 0.0
    %3739 = vmatprep.subr.mxu0 0.0
    %3740 = vmatpush1.msra.mxu0 0.0
    %3741 = vmatprep.subr.mxu0 0.0
    %3742 = vmatpush1.msra.mxu0 0.0
    %3743 = vmatprep.subr.mxu0 0.0
    %3744 = vmatpush1.msra.mxu0 0.0
    %3745 = vmatprep.subr.mxu0 0.0
    %3746 = vmatpush1.msra.mxu0 0.0
    %3747 = vmatprep.subr.mxu0 0.0
    %3748 = vmatpush1.msra.mxu0 0.0
    %3749 = vmatprep.subr.mxu0 0.0
    %3750 = vmatpush1.msra.mxu0 0.0
    %3751 = vmatprep.subr.mxu0 0.0
    %3752 = vmatpush1.msra.mxu0 0.0
    %3753 = vmatprep.subr.mxu0 0.0
    %3754 = vmatpush1.msra.mxu0 0.0
    %3755 = vmatprep.subr.mxu0 0.0
    %3756 = vmatpush1.msra.mxu0 0.0
    %3757 = vmatprep.subr.mxu0 0.0
    %3758 = vmatpush1.msra.mxu0 0.0
    %3759 = vmatprep.subr.mxu0 0.0
    %3760 = vmatpush1.msra.mxu0 0.0
    %3761 = vmatprep.subr.mxu0 0.0
    %3762 = vmatpush1.msra.mxu0 0.0
    %3763 = vmatprep.subr.mxu0 0.0
    %3764 = vmatpush1.msra.mxu0 0.0
    %3765 = vmatprep.subr.mxu0 0.0
    %3766 = vmatpush1.msra.mxu0 0.0
    %3767 = vmatprep.subr.mxu0 0.0
    %3768 = vmatpush1.msra.mxu0 0.0
    %3769 = vmatprep.subr.mxu0 0.0
    %3770 = vmatpush1.msra.mxu0 0.0
    %3771 = vmatprep.mubr.f32.mxu0 0.0
    %v3772 = vand.u32 %v3209, 4294901760
    %v3773 = vsub.f32 %v3209, %v3772
    %v3774 = vand.u32 %v3773, 4294901760
    %3775 = vmatmul.mubr.f32.gmra.mrb[0].mxu0 %v3774
    %v3776 = vpop.f32.mrb[0].mxu0
    %v3777 = vadd.f32 %v3639, %v3776
    %v3778 = vpop.f32.mrb[0].mxu0
    %v3779 = vadd.f32 %v3641, %v3778
    %3780 = vmatprep.mubr.f32.mxu0 0.0
    %v3781 = vand.u32 %v3212, 4294901760
    %v3782 = vsub.f32 %v3212, %v3781
    %v3783 = vand.u32 %v3782, 4294901760
    %3784 = vmatmul.mubr.f32.gmra.mrb[0].mxu0 %v3783
    %v3785 = vpop.f32.mrb[0].mxu0
    %v3786 = vadd.f32 %v3647, %v3785
    %v3787 = vpop.f32.mrb[0].mxu0
    %v3788 = vadd.f32 %v3649, %v3787
    %3789 = vmatprep.mubr.f32.mxu0 0.0
    %v3790 = vand.u32 %v3215, 4294901760
    %v3791 = vsub.f32 %v3215, %v3790
    %v3792 = vand.u32 %v3791, 4294901760
    %3793 = vmatmul.mubr.f32.gmra.mrb[0].mxu0 %v3792
    %v3794 = vpop.f32.mrb[0].mxu0
    %v3795 = vadd.f32 %v3655, %v3794
    %v3796 = vpop.f32.mrb[0].mxu0
    %v3797 = vadd.f32 %v3657, %v3796
    %3798 = vmatprep.mubr.f32.mxu0 0.0
    %v3799 = vand.u32 %v3218, 4294901760
    %v3800 = vsub.f32 %v3218, %v3799
    %v3801 = vand.u32 %v3800, 4294901760
    %3802 = vmatmul.mubr.f32.gmra.mrb[0].mxu0 %v3801
    %v3803 = vpop.f32.mrb[0].mxu0
    %v3804 = vadd.f32 %v3663, %v3803
    %v3805 = vpop.f32.mrb[0].mxu0
    %v3806 = vadd.f32 %v3665, %v3805
    %3807 = vmatprep.mubr.f32.mxu0 0.0
    %v3808 = vand.u32 %v3221, 4294901760
    %v3809 = vsub.f32 %v3221, %v3808
    %v3810 = vand.u32 %v3809, 4294901760
    %3811 = vmatmul.mubr.f32.gmra.mrb[0].mxu0 %v3810
    %v3812 = vpop.f32.mrb[0].mxu0
    %v3813 = vadd.f32 %v3671, %v3812
    %v3814 = vpop.f32.mrb[0].mxu0
    %v3815 = vadd.f32 %v3673, %v3814
    %3816 = vmatprep.mubr.f32.mxu0 0.0
    %v3817 = vand.u32 %v3224, 4294901760
    %v3818 = vsub.f32 %v3224, %v3817
    %v3819 = vand.u32 %v3818, 4294901760
    %3820 = vmatmul.mubr.f32.gmra.mrb[0].mxu0 %v3819
    %v3821 = vpop.f32.mrb[0].mxu0
    %v3822 = vadd.f32 %v3679, %v3821
    %v3823 = vpop.f32.mrb[0].mxu0
    %v3824 = vadd.f32 %v3681, %v3823
    %3825 = vmatprep.mubr.f32.mxu0 0.0
    %v3826 = vand.u32 %v3227, 4294901760
    %v3827 = vsub.f32 %v3227, %v3826
    %v3828 = vand.u32 %v3827, 4294901760
    %3829 = vmatmul.mubr.f32.gmra.mrb[0].mxu0 %v3828
    %v3830 = vpop.f32.mrb[0].mxu0
    %v3831 = vadd.f32 %v3687, %v3830
    %v3832 = vpop.f32.mrb[0].mxu0
    %v3833 = vadd.f32 %v3689, %v3832
    %3834 = vmatprep.mubr.f32.mxu0 0.0
    %v3835 = vand.u32 %v3230, 4294901760
    %v3836 = vsub.f32 %v3230, %v3835
    %v3837 = vand.u32 %v3836, 4294901760
    %3838 = vmatmul.mubr.f32.gmra.mrb[0].mxu0 %v3837
    %v3839 = vpop.f32.mrb[0].mxu0
    %v3840 = vadd.f32 %v3695, %v3839
    %v3841 = vpop.f32.mrb[0].mxu0
    %v3842 = vadd.f32 %v3697, %v3841
    %3843 = vdwg.mxu0
    %v3844 = vand.u32 %v3193, 4294901760
    %v3845 = vsub.f32 %v3193, %v3844
    %v3846 = vand.u32 %v3845, 4294901760
    %3847 = vmatprep.subr.mxu0 %v3846
    %v3848 = vand.u32 %v3192, 4294901760
    %v3849 = vsub.f32 %v3192, %v3848
    %v3850 = vand.u32 %v3849, 4294901760
    %3851 = vmatpush1.msra.mxu0 %v3850
    %v3852 = vand.u32 %v3197, 4294901760
    %v3853 = vsub.f32 %v3197, %v3852
    %v3854 = vand.u32 %v3853, 4294901760
    %3855 = vmatprep.subr.mxu0 %v3854
    %v3856 = vand.u32 %v3196, 4294901760
    %v3857 = vsub.f32 %v3196, %v3856
    %v3858 = vand.u32 %v3857, 4294901760
    %3859 = vmatpush1.msra.mxu0 %v3858
    %v3860 = vand.u32 %v3201, 4294901760
    %v3861 = vsub.f32 %v3201, %v3860
    %v3862 = vand.u32 %v3861, 4294901760
    %3863 = vmatprep.subr.mxu0 %v3862
    %v3864 = vand.u32 %v3200, 4294901760
    %v3865 = vsub.f32 %v3200, %v3864
    %v3866 = vand.u32 %v3865, 4294901760
    %3867 = vmatpush1.msra.mxu0 %v3866
    %v3868 = vand.u32 %v3205, 4294901760
    %v3869 = vsub.f32 %v3205, %v3868
    %v3870 = vand.u32 %v3869, 4294901760
    %3871 = vmatprep.subr.mxu0 %v3870
    %v3872 = vand.u32 %v3204, 4294901760
    %v3873 = vsub.f32 %v3204, %v3872
    %v3874 = vand.u32 %v3873, 4294901760
    %3875 = vmatpush1.msra.mxu0 %v3874
    %3876 = vmatprep.subr.mxu0 0.0
    %3877 = vmatpush1.msra.mxu0 0.0
    %3878 = vmatprep.subr.mxu0 0.0
    %3879 = vmatpush1.msra.mxu0 0.0
    %3880 = vmatprep.subr.mxu0 0.0
    %3881 = vmatpush1.msra.mxu0 0.0
    %3882 = vmatprep.subr.mxu0 0.0
    %3883 = vmatpush1.msra.mxu0 0.0
    %3884 = vmatprep.subr.mxu0 0.0
    %3885 = vmatpush1.msra.mxu0 0.0
    %3886 = vmatprep.subr.mxu0 0.0
    %3887 = vmatpush1.msra.mxu0 0.0
    %3888 = vmatprep.subr.mxu0 0.0
    %3889 = vmatpush1.msra.mxu0 0.0
    %3890 = vmatprep.subr.mxu0 0.0
    %3891 = vmatpush1.msra.mxu0 0.0
    %3892 = vmatprep.subr.mxu0 0.0
    %3893 = vmatpush1.msra.mxu0 0.0
    %3894 = vmatprep.subr.mxu0 0.0
    %3895 = vmatpush1.msra.mxu0 0.0
    %3896 = vmatprep.subr.mxu0 0.0
    %3897 = vmatpush1.msra.mxu0 0.0
    %3898 = vmatprep.subr.mxu0 0.0
    %3899 = vmatpush1.msra.mxu0 0.0
    %3900 = vmatprep.subr.mxu0 0.0
    %3901 = vmatpush1.msra.mxu0 0.0
    %3902 = vmatprep.subr.mxu0 0.0
    %3903 = vmatpush1.msra.mxu0 0.0
    %3904 = vmatprep.subr.mxu0 0.0
    %3905 = vmatpush1.msra.mxu0 0.0
    %3906 = vmatprep.subr.mxu0 0.0
    %3907 = vmatpush1.msra.mxu0 0.0
    %3908 = vmatprep.subr.mxu0 0.0
    %3909 = vmatpush1.msra.mxu0 0.0
    %3910 = vmatprep.subr.mxu0 0.0
    %3911 = vmatpush1.msra.mxu0 0.0
    %3912 = vmatprep.subr.mxu0 0.0
    %3913 = vmatpush1.msra.mxu0 0.0
    %3914 = vmatprep.subr.mxu0 0.0
    %3915 = vmatpush1.msra.mxu0 0.0
    %3916 = vmatprep.subr.mxu0 0.0
    %3917 = vmatpush1.msra.mxu0 0.0
    %3918 = vmatprep.subr.mxu0 0.0
    %3919 = vmatpush1.msra.mxu0 0.0
    %3920 = vmatprep.subr.mxu0 0.0
    %3921 = vmatpush1.msra.mxu0 0.0
    %3922 = vmatprep.subr.mxu0 0.0
    %3923 = vmatpush1.msra.mxu0 0.0
    %3924 = vmatprep.subr.mxu0 0.0
    %3925 = vmatpush1.msra.mxu0 0.0
    %3926 = vmatprep.subr.mxu0 0.0
    %3927 = vmatpush1.msra.mxu0 0.0
    %3928 = vmatprep.subr.mxu0 0.0
    %3929 = vmatpush1.msra.mxu0 0.0
    %3930 = vmatprep.subr.mxu0 0.0
    %3931 = vmatpush1.msra.mxu0 0.0
    %3932 = vmatprep.mubr.f32.mxu0 0.0
    %v3933 = vand.u32 %v3209, 4294901760
    %3934 = vmatmul.mubr.f32.gmra.mrb[0].mxu0 %v3933
    %v3935 = vpop.f32.mrb[0].mxu0
    %v3936 = vadd.f32 %v3777, %v3935
    %v3937 = vpop.f32.mrb[0].mxu0
    %v3938 = vadd.f32 %v3779, %v3937
    %3939 = vmatprep.mubr.f32.mxu0 0.0
    %v3940 = vand.u32 %v3212, 4294901760
    %3941 = vmatmul.mubr.f32.gmra.mrb[0].mxu0 %v3940
    %v3942 = vpop.f32.mrb[0].mxu0
    %v3943 = vadd.f32 %v3786, %v3942
    %v3944 = vpop.f32.mrb[0].mxu0
    %v3945 = vadd.f32 %v3788, %v3944
    %3946 = vmatprep.mubr.f32.mxu0 0.0
    %v3947 = vand.u32 %v3215, 4294901760
    %3948 = vmatmul.mubr.f32.gmra.mrb[0].mxu0 %v3947
    %v3949 = vpop.f32.mrb[0].mxu0
    %v3950 = vadd.f32 %v3795, %v3949
    %v3951 = vpop.f32.mrb[0].mxu0
    %v3952 = vadd.f32 %v3797, %v3951
    %3953 = vmatprep.mubr.f32.mxu0 0.0
    %v3954 = vand.u32 %v3218, 4294901760
    %3955 = vmatmul.mubr.f32.gmra.mrb[0].mxu0 %v3954
    %v3956 = vpop.f32.mrb[0].mxu0
    %v3957 = vadd.f32 %v3804, %v3956
    %v3958 = vpop.f32.mrb[0].mxu0
    %v3959 = vadd.f32 %v3806, %v3958
    %3960 = vmatprep.mubr.f32.mxu0 0.0
    %v3961 = vand.u32 %v3221, 4294901760
    %3962 = vmatmul.mubr.f32.gmra.mrb[0].mxu0 %v3961
    %v3963 = vpop.f32.mrb[0].mxu0
    %v3964 = vadd.f32 %v3813, %v3963
    %v3965 = vpop.f32.mrb[0].mxu0
    %v3966 = vadd.f32 %v3815, %v3965
    %3967 = vmatprep.mubr.f32.mxu0 0.0
    %v3968 = vand.u32 %v3224, 4294901760
    %3969 = vmatmul.mubr.f32.gmra.mrb[0].mxu0 %v3968
    %v3970 = vpop.f32.mrb[0].mxu0
    %v3971 = vadd.f32 %v3822, %v3970
    %v3972 = vpop.f32.mrb[0].mxu0
    %v3973 = vadd.f32 %v3824, %v3972
    %3974 = vmatprep.mubr.f32.mxu0 0.0
    %v3975 = vand.u32 %v3227, 4294901760
    %3976 = vmatmul.mubr.f32.gmra.mrb[0].mxu0 %v3975
    %v3977 = vpop.f32.mrb[0].mxu0
    %v3978 = vadd.f32 %v3831, %v3977
    %v3979 = vpop.f32.mrb[0].mxu0
    %v3980 = vadd.f32 %v3833, %v3979
    %3981 = vmatprep.mubr.f32.mxu0 0.0
    %v3982 = vand.u32 %v3230, 4294901760
    %3983 = vmatmul.mubr.f32.gmra.mrb[0].mxu0 %v3982
    %v3984 = vpop.f32.mrb[0].mxu0
    %v3985 = vadd.f32 %v3840, %v3984
    %v3986 = vpop.f32.mrb[0].mxu0
    %v3987 = vadd.f32 %v3842, %v3986
    %3988 = vdwg.mxu0
    %v3989 = vand.u32 %v3193, 4294901760
    %3990 = vmatprep.subr.mxu0 %v3989
    %v3991 = vand.u32 %v3192, 4294901760
    %3992 = vmatpush1.msra.mxu0 %v3991
    %v3993 = vand.u32 %v3197, 4294901760
    %3994 = vmatprep.subr.mxu0 %v3993
    %v3995 = vand.u32 %v3196, 4294901760
    %3996 = vmatpush1.msra.mxu0 %v3995
    %v3997 = vand.u32 %v3201, 4294901760
    %3998 = vmatprep.subr.mxu0 %v3997
    %v3999 = vand.u32 %v3200, 4294901760
    %4000 = vmatpush1.msra.mxu0 %v3999
    %v4001 = vand.u32 %v3205, 4294901760
    %4002 = vmatprep.subr.mxu0 %v4001
    %v4003 = vand.u32 %v3204, 4294901760
    %4004 = vmatpush1.msra.mxu0 %v4003
    %4005 = vmatprep.subr.mxu0 0.0
    %4006 = vmatpush1.msra.mxu0 0.0
    %4007 = vmatprep.subr.mxu0 0.0
    %4008 = vmatpush1.msra.mxu0 0.0
    %4009 = vmatprep.subr.mxu0 0.0
    %4010 = vmatpush1.msra.mxu0 0.0
    %4011 = vmatprep.subr.mxu0 0.0
    %4012 = vmatpush1.msra.mxu0 0.0
    %4013 = vmatprep.subr.mxu0 0.0
    %4014 = vmatpush1.msra.mxu0 0.0
    %4015 = vmatprep.subr.mxu0 0.0
    %4016 = vmatpush1.msra.mxu0 0.0
    %4017 = vmatprep.subr.mxu0 0.0
    %4018 = vmatpush1.msra.mxu0 0.0
    %4019 = vmatprep.subr.mxu0 0.0
    %4020 = vmatpush1.msra.mxu0 0.0
    %4021 = vmatprep.subr.mxu0 0.0
    %4022 = vmatpush1.msra.mxu0 0.0
    %4023 = vmatprep.subr.mxu0 0.0
    %4024 = vmatpush1.msra.mxu0 0.0
    %4025 = vmatprep.subr.mxu0 0.0
    %4026 = vmatpush1.msra.mxu0 0.0
    %4027 = vmatprep.subr.mxu0 0.0
    %4028 = vmatpush1.msra.mxu0 0.0
    %4029 = vmatprep.subr.mxu0 0.0
    %4030 = vmatpush1.msra.mxu0 0.0
    %4031 = vmatprep.subr.mxu0 0.0
    %4032 = vmatpush1.msra.mxu0 0.0
    %4033 = vmatprep.subr.mxu0 0.0
    %4034 = vmatpush1.msra.mxu0 0.0
    %4035 = vmatprep.subr.mxu0 0.0
    %4036 = vmatpush1.msra.mxu0 0.0
    %4037 = vmatprep.subr.mxu0 0.0
    %4038 = vmatpush1.msra.mxu0 0.0
    %4039 = vmatprep.subr.mxu0 0.0
    %4040 = vmatpush1.msra.mxu0 0.0
    %4041 = vmatprep.subr.mxu0 0.0
    %4042 = vmatpush1.msra.mxu0 0.0
    %4043 = vmatprep.subr.mxu0 0.0
    %4044 = vmatpush1.msra.mxu0 0.0
    %4045 = vmatprep.subr.mxu0 0.0
    %4046 = vmatpush1.msra.mxu0 0.0
    %4047 = vmatprep.subr.mxu0 0.0
    %4048 = vmatpush1.msra.mxu0 0.0
    %4049 = vmatprep.subr.mxu0 0.0
    %4050 = vmatpush1.msra.mxu0 0.0
    %4051 = vmatprep.subr.mxu0 0.0
    %4052 = vmatpush1.msra.mxu0 0.0
    %4053 = vmatprep.subr.mxu0 0.0
    %4054 = vmatpush1.msra.mxu0 0.0
    %4055 = vmatprep.subr.mxu0 0.0
    %4056 = vmatpush1.msra.mxu0 0.0
    %4057 = vmatprep.subr.mxu0 0.0
    %4058 = vmatpush1.msra.mxu0 0.0
    %4059 = vmatprep.subr.mxu0 0.0
    %4060 = vmatpush1.msra.mxu0 0.0
    %4061 = vmatprep.mubr.f32.mxu0 0.0
    %v4062 = vand.u32 %v3209, 4294901760
    %4063 = vmatmul.mubr.f32.gmra.mrb[0].mxu0 %v4062
    %v4064 = vpop.f32.mrb[0].mxu0
    %v4065 = vadd.f32 %v3936, %v4064
    %v4066 = vpop.f32.mrb[0].mxu0
    %v4067 = vadd.f32 %v3938, %v4066
    %4068 = vmatprep.mubr.f32.mxu0 0.0
    %v4069 = vand.u32 %v3212, 4294901760
    %4070 = vmatmul.mubr.f32.gmra.mrb[0].mxu0 %v4069
    %v4071 = vpop.f32.mrb[0].mxu0
    %v4072 = vadd.f32 %v3943, %v4071
    %v4073 = vpop.f32.mrb[0].mxu0
    %v4074 = vadd.f32 %v3945, %v4073
    %4075 = vmatprep.mubr.f32.mxu0 0.0
    %v4076 = vand.u32 %v3215, 4294901760
    %4077 = vmatmul.mubr.f32.gmra.mrb[0].mxu0 %v4076
    %v4078 = vpop.f32.mrb[0].mxu0
    %v4079 = vadd.f32 %v3950, %v4078
    %v4080 = vpop.f32.mrb[0].mxu0
    %v4081 = vadd.f32 %v3952, %v4080
    %4082 = vmatprep.mubr.f32.mxu0 0.0
    %v4083 = vand.u32 %v3218, 4294901760
    %4084 = vmatmul.mubr.f32.gmra.mrb[0].mxu0 %v4083
    %v4085 = vpop.f32.mrb[0].mxu0
    %v4086 = vadd.f32 %v3957, %v4085
    %v4087 = vpop.f32.mrb[0].mxu0
    %v4088 = vadd.f32 %v3959, %v4087
    %4089 = vmatprep.mubr.f32.mxu0 0.0
    %v4090 = vand.u32 %v3221, 4294901760
    %4091 = vmatmul.mubr.f32.gmra.mrb[0].mxu0 %v4090
    %v4092 = vpop.f32.mrb[0].mxu0
    %v4093 = vadd.f32 %v3964, %v4092
    %v4094 = vpop.f32.mrb[0].mxu0
    %v4095 = vadd.f32 %v3966, %v4094
    %4096 = vmatprep.mubr.f32.mxu0 0.0
    %v4097 = vand.u32 %v3224, 4294901760
    %4098 = vmatmul.mubr.f32.gmra.mrb[0].mxu0 %v4097
    %v4099 = vpop.f32.mrb[0].mxu0
    %v4100 = vadd.f32 %v3971, %v4099
    %v4101 = vpop.f32.mrb[0].mxu0
    %v4102 = vadd.f32 %v3973, %v4101
    %4103 = vmatprep.mubr.f32.mxu0 0.0
    %v4104 = vand.u32 %v3227, 4294901760
    %4105 = vmatmul.mubr.f32.gmra.mrb[0].mxu0 %v4104
    %v4106 = vpop.f32.mrb[0].mxu0
    %v4107 = vadd.f32 %v3978, %v4106
    %v4108 = vpop.f32.mrb[0].mxu0
    %v4109 = vadd.f32 %v3980, %v4108
    %4110 = vmatprep.mubr.f32.mxu0 0.0
    %v4111 = vand.u32 %v3230, 4294901760
    %4112 = vmatmul.mubr.f32.gmra.mrb[0].mxu0 %v4111
    %v4113 = vpop.f32.mrb[0].mxu0
    %v4114 = vadd.f32 %v3985, %v4113
    %v4115 = vpop.f32.mrb[0].mxu0
    %v4116 = vadd.f32 %v3987, %v4115
    %4117 = vdwg.mxu0
    %v4118 = vand.u32 %v3195, 4294901760
    %4119 = vmatprep.subr.mxu0 %v4118
    %v4120 = vand.u32 %v3194, 4294901760
    %4121 = vmatpush1.msra.mxu0 %v4120
    %v4122 = vand.u32 %v3199, 4294901760
    %4123 = vmatprep.subr.mxu0 %v4122
    %v4124 = vand.u32 %v3198, 4294901760
    %4125 = vmatpush1.msra.mxu0 %v4124
    %v4126 = vand.u32 %v3203, 4294901760
    %4127 = vmatprep.subr.mxu0 %v4126
    %v4128 = vand.u32 %v3202, 4294901760
    %4129 = vmatpush1.msra.mxu0 %v4128
    %v4130 = vand.u32 %v3207, 4294901760
    %4131 = vmatprep.subr.mxu0 %v4130
    %v4132 = vand.u32 %v3206, 4294901760
    %4133 = vmatpush1.msra.mxu0 %v4132
    %4134 = vmatprep.subr.mxu0 0.0
    %4135 = vmatpush1.msra.mxu0 0.0
    %4136 = vmatprep.subr.mxu0 0.0
    %4137 = vmatpush1.msra.mxu0 0.0
    %4138 = vmatprep.subr.mxu0 0.0
    %4139 = vmatpush1.msra.mxu0 0.0
    %4140 = vmatprep.subr.mxu0 0.0
    %4141 = vmatpush1.msra.mxu0 0.0
    %4142 = vmatprep.subr.mxu0 0.0
    %4143 = vmatpush1.msra.mxu0 0.0
    %4144 = vmatprep.subr.mxu0 0.0
    %4145 = vmatpush1.msra.mxu0 0.0
    %4146 = vmatprep.subr.mxu0 0.0
    %4147 = vmatpush1.msra.mxu0 0.0
    %4148 = vmatprep.subr.mxu0 0.0
    %4149 = vmatpush1.msra.mxu0 0.0
    %4150 = vmatprep.subr.mxu0 0.0
    %4151 = vmatpush1.msra.mxu0 0.0
    %4152 = vmatprep.subr.mxu0 0.0
    %4153 = vmatpush1.msra.mxu0 0.0
    %4154 = vmatprep.subr.mxu0 0.0
    %4155 = vmatpush1.msra.mxu0 0.0
    %4156 = vmatprep.subr.mxu0 0.0
    %4157 = vmatpush1.msra.mxu0 0.0
    %4158 = vmatprep.subr.mxu0 0.0
    %4159 = vmatpush1.msra.mxu0 0.0
    %4160 = vmatprep.subr.mxu0 0.0
    %4161 = vmatpush1.msra.mxu0 0.0
    %4162 = vmatprep.subr.mxu0 0.0
    %4163 = vmatpush1.msra.mxu0 0.0
    %4164 = vmatprep.subr.mxu0 0.0
    %4165 = vmatpush1.msra.mxu0 0.0
    %4166 = vmatprep.subr.mxu0 0.0
    %4167 = vmatpush1.msra.mxu0 0.0
    %4168 = vmatprep.subr.mxu0 0.0
    %4169 = vmatpush1.msra.mxu0 0.0
    %4170 = vmatprep.subr.mxu0 0.0
    %4171 = vmatpush1.msra.mxu0 0.0
    %4172 = vmatprep.subr.mxu0 0.0
    %4173 = vmatpush1.msra.mxu0 0.0
    %4174 = vmatprep.subr.mxu0 0.0
    %4175 = vmatpush1.msra.mxu0 0.0
    %4176 = vmatprep.subr.mxu0 0.0
    %4177 = vmatpush1.msra.mxu0 0.0
    %4178 = vmatprep.subr.mxu0 0.0
    %4179 = vmatpush1.msra.mxu0 0.0
    %4180 = vmatprep.subr.mxu0 0.0
    %4181 = vmatpush1.msra.mxu0 0.0
    %4182 = vmatprep.subr.mxu0 0.0
    %4183 = vmatpush1.msra.mxu0 0.0
    %4184 = vmatprep.subr.mxu0 0.0
    %4185 = vmatpush1.msra.mxu0 0.0
    %4186 = vmatprep.subr.mxu0 0.0
    %4187 = vmatpush1.msra.mxu0 0.0
    %4188 = vmatprep.subr.mxu0 0.0
    %4189 = vmatpush1.msra.mxu0 0.0
    %4190 = vmatprep.mubr.f32.mxu0 0.0
    %v4191 = vand.u32 %v3209, 4294901760
    %v4192 = vsub.f32 %v3209, %v4191
    %v4193 = vand.u32 %v4192, 4294901760
    %v4194 = vsub.f32 %v4192, %v4193
    %v4195 = vand.u32 %v4194, 4294901760
    %4196 = vmatmul.mubr.f32.gmra.mrb[0].mxu0 %v4195
    %v4197 = vpop.f32.mrb[0].mxu0
    %v4198 = vadd.f32 0.0, %v4197
    %v4199 = vpop.f32.mrb[0].mxu0
    %v4200 = vadd.f32 0.0, %v4199
    %4201 = vmatprep.mubr.f32.mxu0 0.0
    %v4202 = vand.u32 %v3212, 4294901760
    %v4203 = vsub.f32 %v3212, %v4202
    %v4204 = vand.u32 %v4203, 4294901760
    %v4205 = vsub.f32 %v4203, %v4204
    %v4206 = vand.u32 %v4205, 4294901760
    %4207 = vmatmul.mubr.f32.gmra.mrb[0].mxu0 %v4206
    %v4208 = vpop.f32.mrb[0].mxu0
    %v4209 = vadd.f32 0.0, %v4208
    %v4210 = vpop.f32.mrb[0].mxu0
    %v4211 = vadd.f32 0.0, %v4210
    %4212 = vmatprep.mubr.f32.mxu0 0.0
    %v4213 = vand.u32 %v3215, 4294901760
    %v4214 = vsub.f32 %v3215, %v4213
    %v4215 = vand.u32 %v4214, 4294901760
    %v4216 = vsub.f32 %v4214, %v4215
    %v4217 = vand.u32 %v4216, 4294901760
    %4218 = vmatmul.mubr.f32.gmra.mrb[0].mxu0 %v4217
    %v4219 = vpop.f32.mrb[0].mxu0
    %v4220 = vadd.f32 0.0, %v4219
    %v4221 = vpop.f32.mrb[0].mxu0
    %v4222 = vadd.f32 0.0, %v4221
    %4223 = vmatprep.mubr.f32.mxu0 0.0
    %v4224 = vand.u32 %v3218, 4294901760
    %v4225 = vsub.f32 %v3218, %v4224
    %v4226 = vand.u32 %v4225, 4294901760
    %v4227 = vsub.f32 %v4225, %v4226
    %v4228 = vand.u32 %v4227, 4294901760
    %4229 = vmatmul.mubr.f32.gmra.mrb[0].mxu0 %v4228
    %v4230 = vpop.f32.mrb[0].mxu0
    %v4231 = vadd.f32 0.0, %v4230
    %v4232 = vpop.f32.mrb[0].mxu0
    %v4233 = vadd.f32 0.0, %v4232
    %4234 = vmatprep.mubr.f32.mxu0 0.0
    %v4235 = vand.u32 %v3221, 4294901760
    %v4236 = vsub.f32 %v3221, %v4235
    %v4237 = vand.u32 %v4236, 4294901760
    %v4238 = vsub.f32 %v4236, %v4237
    %v4239 = vand.u32 %v4238, 4294901760
    %4240 = vmatmul.mubr.f32.gmra.mrb[0].mxu0 %v4239
    %v4241 = vpop.f32.mrb[0].mxu0
    %v4242 = vadd.f32 0.0, %v4241
    %v4243 = vpop.f32.mrb[0].mxu0
    %v4244 = vadd.f32 0.0, %v4243
    %4245 = vmatprep.mubr.f32.mxu0 0.0
    %v4246 = vand.u32 %v3224, 4294901760
    %v4247 = vsub.f32 %v3224, %v4246
    %v4248 = vand.u32 %v4247, 4294901760
    %v4249 = vsub.f32 %v4247, %v4248
    %v4250 = vand.u32 %v4249, 4294901760
    %4251 = vmatmul.mubr.f32.gmra.mrb[0].mxu0 %v4250
    %v4252 = vpop.f32.mrb[0].mxu0
    %v4253 = vadd.f32 0.0, %v4252
    %v4254 = vpop.f32.mrb[0].mxu0
    %v4255 = vadd.f32 0.0, %v4254
    %4256 = vmatprep.mubr.f32.mxu0 0.0
    %v4257 = vand.u32 %v3227, 4294901760
    %v4258 = vsub.f32 %v3227, %v4257
    %v4259 = vand.u32 %v4258, 4294901760
    %v4260 = vsub.f32 %v4258, %v4259
    %v4261 = vand.u32 %v4260, 4294901760
    %4262 = vmatmul.mubr.f32.gmra.mrb[0].mxu0 %v4261
    %v4263 = vpop.f32.mrb[0].mxu0
    %v4264 = vadd.f32 0.0, %v4263
    %v4265 = vpop.f32.mrb[0].mxu0
    %v4266 = vadd.f32 0.0, %v4265
    %4267 = vmatprep.mubr.f32.mxu0 0.0
    %v4268 = vand.u32 %v3230, 4294901760
    %v4269 = vsub.f32 %v3230, %v4268
    %v4270 = vand.u32 %v4269, 4294901760
    %v4271 = vsub.f32 %v4269, %v4270
    %v4272 = vand.u32 %v4271, 4294901760
    %4273 = vmatmul.mubr.f32.gmra.mrb[0].mxu0 %v4272
    %v4274 = vpop.f32.mrb[0].mxu0
    %v4275 = vadd.f32 0.0, %v4274
    %v4276 = vpop.f32.mrb[0].mxu0
    %v4277 = vadd.f32 0.0, %v4276
    %4278 = vdwg.mxu0
    %v4279 = vand.u32 %v3195, 4294901760
    %v4280 = vsub.f32 %v3195, %v4279
    %v4281 = vand.u32 %v4280, 4294901760
    %v4282 = vsub.f32 %v4280, %v4281
    %v4283 = vand.u32 %v4282, 4294901760
    %4284 = vmatprep.subr.mxu0 %v4283
    %v4285 = vand.u32 %v3194, 4294901760
    %v4286 = vsub.f32 %v3194, %v4285
    %v4287 = vand.u32 %v4286, 4294901760
    %v4288 = vsub.f32 %v4286, %v4287
    %v4289 = vand.u32 %v4288, 4294901760
    %4290 = vmatpush1.msra.mxu0 %v4289
    %v4291 = vand.u32 %v3199, 4294901760
    %v4292 = vsub.f32 %v3199, %v4291
    %v4293 = vand.u32 %v4292, 4294901760
    %v4294 = vsub.f32 %v4292, %v4293
    %v4295 = vand.u32 %v4294, 4294901760
    %4296 = vmatprep.subr.mxu0 %v4295
    %v4297 = vand.u32 %v3198, 4294901760
    %v4298 = vsub.f32 %v3198, %v4297
    %v4299 = vand.u32 %v4298, 4294901760
    %v4300 = vsub.f32 %v4298, %v4299
    %v4301 = vand.u32 %v4300, 4294901760
    %4302 = vmatpush1.msra.mxu0 %v4301
    %v4303 = vand.u32 %v3203, 4294901760
    %v4304 = vsub.f32 %v3203, %v4303
    %v4305 = vand.u32 %v4304, 4294901760
    %v4306 = vsub.f32 %v4304, %v4305
    %v4307 = vand.u32 %v4306, 4294901760
    %4308 = vmatprep.subr.mxu0 %v4307
    %v4309 = vand.u32 %v3202, 4294901760
    %v4310 = vsub.f32 %v3202, %v4309
    %v4311 = vand.u32 %v4310, 4294901760
    %v4312 = vsub.f32 %v4310, %v4311
    %v4313 = vand.u32 %v4312, 4294901760
    %4314 = vmatpush1.msra.mxu0 %v4313
    %v4315 = vand.u32 %v3207, 4294901760
    %v4316 = vsub.f32 %v3207, %v4315
    %v4317 = vand.u32 %v4316, 4294901760
    %v4318 = vsub.f32 %v4316, %v4317
    %v4319 = vand.u32 %v4318, 4294901760
    %4320 = vmatprep.subr.mxu0 %v4319
    %v4321 = vand.u32 %v3206, 4294901760
    %v4322 = vsub.f32 %v3206, %v4321
    %v4323 = vand.u32 %v4322, 4294901760
    %v4324 = vsub.f32 %v4322, %v4323
    %v4325 = vand.u32 %v4324, 4294901760
    %4326 = vmatpush1.msra.mxu0 %v4325
    %4327 = vmatprep.subr.mxu0 0.0
    %4328 = vmatpush1.msra.mxu0 0.0
    %4329 = vmatprep.subr.mxu0 0.0
    %4330 = vmatpush1.msra.mxu0 0.0
    %4331 = vmatprep.subr.mxu0 0.0
    %4332 = vmatpush1.msra.mxu0 0.0
    %4333 = vmatprep.subr.mxu0 0.0
    %4334 = vmatpush1.msra.mxu0 0.0
    %4335 = vmatprep.subr.mxu0 0.0
    %4336 = vmatpush1.msra.mxu0 0.0
    %4337 = vmatprep.subr.mxu0 0.0
    %4338 = vmatpush1.msra.mxu0 0.0
    %4339 = vmatprep.subr.mxu0 0.0
    %4340 = vmatpush1.msra.mxu0 0.0
    %4341 = vmatprep.subr.mxu0 0.0
    %4342 = vmatpush1.msra.mxu0 0.0
    %4343 = vmatprep.subr.mxu0 0.0
    %4344 = vmatpush1.msra.mxu0 0.0
    %4345 = vmatprep.subr.mxu0 0.0
    %4346 = vmatpush1.msra.mxu0 0.0
    %4347 = vmatprep.subr.mxu0 0.0
    %4348 = vmatpush1.msra.mxu0 0.0
    %4349 = vmatprep.subr.mxu0 0.0
    %4350 = vmatpush1.msra.mxu0 0.0
    %4351 = vmatprep.subr.mxu0 0.0
    %4352 = vmatpush1.msra.mxu0 0.0
    %4353 = vmatprep.subr.mxu0 0.0
    %4354 = vmatpush1.msra.mxu0 0.0
    %4355 = vmatprep.subr.mxu0 0.0
    %4356 = vmatpush1.msra.mxu0 0.0
    %4357 = vmatprep.subr.mxu0 0.0
    %4358 = vmatpush1.msra.mxu0 0.0
    %4359 = vmatprep.subr.mxu0 0.0
    %4360 = vmatpush1.msra.mxu0 0.0
    %4361 = vmatprep.subr.mxu0 0.0
    %4362 = vmatpush1.msra.mxu0 0.0
    %4363 = vmatprep.subr.mxu0 0.0
    %4364 = vmatpush1.msra.mxu0 0.0
    %4365 = vmatprep.subr.mxu0 0.0
    %4366 = vmatpush1.msra.mxu0 0.0
    %4367 = vmatprep.subr.mxu0 0.0
    %4368 = vmatpush1.msra.mxu0 0.0
    %4369 = vmatprep.subr.mxu0 0.0
    %4370 = vmatpush1.msra.mxu0 0.0
    %4371 = vmatprep.subr.mxu0 0.0
    %4372 = vmatpush1.msra.mxu0 0.0
    %4373 = vmatprep.subr.mxu0 0.0
    %4374 = vmatpush1.msra.mxu0 0.0
    %4375 = vmatprep.subr.mxu0 0.0
    %4376 = vmatpush1.msra.mxu0 0.0
    %4377 = vmatprep.subr.mxu0 0.0
    %4378 = vmatpush1.msra.mxu0 0.0
    %4379 = vmatprep.subr.mxu0 0.0
    %4380 = vmatpush1.msra.mxu0 0.0
    %4381 = vmatprep.subr.mxu0 0.0
    %4382 = vmatpush1.msra.mxu0 0.0
    %4383 = vmatprep.mubr.f32.mxu0 0.0
    %v4384 = vand.u32 %v3209, 4294901760
    %4385 = vmatmul.mubr.f32.gmra.mrb[0].mxu0 %v4384
    %v4386 = vpop.f32.mrb[0].mxu0
    %v4387 = vadd.f32 %v4198, %v4386
    %v4388 = vpop.f32.mrb[0].mxu0
    %v4389 = vadd.f32 %v4200, %v4388
    %4390 = vmatprep.mubr.f32.mxu0 0.0
    %v4391 = vand.u32 %v3212, 4294901760
    %4392 = vmatmul.mubr.f32.gmra.mrb[0].mxu0 %v4391
    %v4393 = vpop.f32.mrb[0].mxu0
    %v4394 = vadd.f32 %v4209, %v4393
    %v4395 = vpop.f32.mrb[0].mxu0
    %v4396 = vadd.f32 %v4211, %v4395
    %4397 = vmatprep.mubr.f32.mxu0 0.0
    %v4398 = vand.u32 %v3215, 4294901760
    %4399 = vmatmul.mubr.f32.gmra.mrb[0].mxu0 %v4398
    %v4400 = vpop.f32.mrb[0].mxu0
    %v4401 = vadd.f32 %v4220, %v4400
    %v4402 = vpop.f32.mrb[0].mxu0
    %v4403 = vadd.f32 %v4222, %v4402
    %4404 = vmatprep.mubr.f32.mxu0 0.0
    %v4405 = vand.u32 %v3218, 4294901760
    %4406 = vmatmul.mubr.f32.gmra.mrb[0].mxu0 %v4405
    %v4407 = vpop.f32.mrb[0].mxu0
    %v4408 = vadd.f32 %v4231, %v4407
    %v4409 = vpop.f32.mrb[0].mxu0
    %v4410 = vadd.f32 %v4233, %v4409
    %4411 = vmatprep.mubr.f32.mxu0 0.0
    %v4412 = vand.u32 %v3221, 4294901760
    %4413 = vmatmul.mubr.f32.gmra.mrb[0].mxu0 %v4412
    %v4414 = vpop.f32.mrb[0].mxu0
    %v4415 = vadd.f32 %v4242, %v4414
    %v4416 = vpop.f32.mrb[0].mxu0
    %v4417 = vadd.f32 %v4244, %v4416
    %4418 = vmatprep.mubr.f32.mxu0 0.0
    %v4419 = vand.u32 %v3224, 4294901760
    %4420 = vmatmul.mubr.f32.gmra.mrb[0].mxu0 %v4419
    %v4421 = vpop.f32.mrb[0].mxu0
    %v4422 = vadd.f32 %v4253, %v4421
    %v4423 = vpop.f32.mrb[0].mxu0
    %v4424 = vadd.f32 %v4255, %v4423
    %4425 = vmatprep.mubr.f32.mxu0 0.0
    %v4426 = vand.u32 %v3227, 4294901760
    %4427 = vmatmul.mubr.f32.gmra.mrb[0].mxu0 %v4426
    %v4428 = vpop.f32.mrb[0].mxu0
    %v4429 = vadd.f32 %v4264, %v4428
    %v4430 = vpop.f32.mrb[0].mxu0
    %v4431 = vadd.f32 %v4266, %v4430
    %4432 = vmatprep.mubr.f32.mxu0 0.0
    %v4433 = vand.u32 %v3230, 4294901760
    %4434 = vmatmul.mubr.f32.gmra.mrb[0].mxu0 %v4433
    %v4435 = vpop.f32.mrb[0].mxu0
    %v4436 = vadd.f32 %v4275, %v4435
    %v4437 = vpop.f32.mrb[0].mxu0
    %v4438 = vadd.f32 %v4277, %v4437
    %4439 = vdwg.mxu0
    %v4440 = vand.u32 %v3195, 4294901760
    %v4441 = vsub.f32 %v3195, %v4440
    %4442 = vmatprep.subr.mxu0 %v4441
    %v4443 = vand.u32 %v3194, 4294901760
    %v4444 = vsub.f32 %v3194, %v4443
    %4445 = vmatpush1.msra.mxu0 %v4444
    %v4446 = vand.u32 %v3199, 4294901760
    %v4447 = vsub.f32 %v3199, %v4446
    %4448 = vmatprep.subr.mxu0 %v4447
    %v4449 = vand.u32 %v3198, 4294901760
    %v4450 = vsub.f32 %v3198, %v4449
    %4451 = vmatpush1.msra.mxu0 %v4450
    %v4452 = vand.u32 %v3203, 4294901760
    %v4453 = vsub.f32 %v3203, %v4452
    %4454 = vmatprep.subr.mxu0 %v4453
    %v4455 = vand.u32 %v3202, 4294901760
    %v4456 = vsub.f32 %v3202, %v4455
    %4457 = vmatpush1.msra.mxu0 %v4456
    %v4458 = vand.u32 %v3207, 4294901760
    %v4459 = vsub.f32 %v3207, %v4458
    %4460 = vmatprep.subr.mxu0 %v4459
    %v4461 = vand.u32 %v3206, 4294901760
    %v4462 = vsub.f32 %v3206, %v4461
    %4463 = vmatpush1.msra.mxu0 %v4462
    %4464 = vmatprep.subr.mxu0 0.0
    %4465 = vmatpush1.msra.mxu0 0.0
    %4466 = vmatprep.subr.mxu0 0.0
    %4467 = vmatpush1.msra.mxu0 0.0
    %4468 = vmatprep.subr.mxu0 0.0
    %4469 = vmatpush1.msra.mxu0 0.0
    %4470 = vmatprep.subr.mxu0 0.0
    %4471 = vmatpush1.msra.mxu0 0.0
    %4472 = vmatprep.subr.mxu0 0.0
    %4473 = vmatpush1.msra.mxu0 0.0
    %4474 = vmatprep.subr.mxu0 0.0
    %4475 = vmatpush1.msra.mxu0 0.0
    %4476 = vmatprep.subr.mxu0 0.0
    %4477 = vmatpush1.msra.mxu0 0.0
    %4478 = vmatprep.subr.mxu0 0.0
    %4479 = vmatpush1.msra.mxu0 0.0
    %4480 = vmatprep.subr.mxu0 0.0
    %4481 = vmatpush1.msra.mxu0 0.0
    %4482 = vmatprep.subr.mxu0 0.0
    %4483 = vmatpush1.msra.mxu0 0.0
    %4484 = vmatprep.subr.mxu0 0.0
    %4485 = vmatpush1.msra.mxu0 0.0
    %4486 = vmatprep.subr.mxu0 0.0
    %4487 = vmatpush1.msra.mxu0 0.0
    %4488 = vmatprep.subr.mxu0 0.0
    %4489 = vmatpush1.msra.mxu0 0.0
    %4490 = vmatprep.subr.mxu0 0.0
    %4491 = vmatpush1.msra.mxu0 0.0
    %4492 = vmatprep.subr.mxu0 0.0
    %4493 = vmatpush1.msra.mxu0 0.0
    %4494 = vmatprep.subr.mxu0 0.0
    %4495 = vmatpush1.msra.mxu0 0.0
    %4496 = vmatprep.subr.mxu0 0.0
    %4497 = vmatpush1.msra.mxu0 0.0
    %4498 = vmatprep.subr.mxu0 0.0
    %4499 = vmatpush1.msra.mxu0 0.0
    %4500 = vmatprep.subr.mxu0 0.0
    %4501 = vmatpush1.msra.mxu0 0.0
    %4502 = vmatprep.subr.mxu0 0.0
    %4503 = vmatpush1.msra.mxu0 0.0
    %4504 = vmatprep.subr.mxu0 0.0
    %4505 = vmatpush1.msra.mxu0 0.0
    %4506 = vmatprep.subr.mxu0 0.0
    %4507 = vmatpush1.msra.mxu0 0.0
    %4508 = vmatprep.subr.mxu0 0.0
    %4509 = vmatpush1.msra.mxu0 0.0
    %4510 = vmatprep.subr.mxu0 0.0
    %4511 = vmatpush1.msra.mxu0 0.0
    %4512 = vmatprep.subr.mxu0 0.0
    %4513 = vmatpush1.msra.mxu0 0.0
    %4514 = vmatprep.subr.mxu0 0.0
    %4515 = vmatpush1.msra.mxu0 0.0
    %4516 = vmatprep.subr.mxu0 0.0
    %4517 = vmatpush1.msra.mxu0 0.0
    %4518 = vmatprep.subr.mxu0 0.0
    %4519 = vmatpush1.msra.mxu0 0.0
    %4520 = vmatprep.mubr.f32.mxu0 0.0
    %v4521 = vand.u32 %v3209, 4294901760
    %v4522 = vsub.f32 %v3209, %v4521
    %4523 = vmatmul.mubr.f32.gmra.mrb[0].mxu0 %v4522
    %v4524 = vpop.f32.mrb[0].mxu0
    %v4525 = vadd.f32 %v4387, %v4524
    %v4526 = vpop.f32.mrb[0].mxu0
    %v4527 = vadd.f32 %v4389, %v4526
    %4528 = vmatprep.mubr.f32.mxu0 0.0
    %v4529 = vand.u32 %v3212, 4294901760
    %v4530 = vsub.f32 %v3212, %v4529
    %4531 = vmatmul.mubr.f32.gmra.mrb[0].mxu0 %v4530
    %v4532 = vpop.f32.mrb[0].mxu0
    %v4533 = vadd.f32 %v4394, %v4532
    %v4534 = vpop.f32.mrb[0].mxu0
    %v4535 = vadd.f32 %v4396, %v4534
    %4536 = vmatprep.mubr.f32.mxu0 0.0
    %v4537 = vand.u32 %v3215, 4294901760
    %v4538 = vsub.f32 %v3215, %v4537
    %4539 = vmatmul.mubr.f32.gmra.mrb[0].mxu0 %v4538
    %v4540 = vpop.f32.mrb[0].mxu0
    %v4541 = vadd.f32 %v4401, %v4540
    %v4542 = vpop.f32.mrb[0].mxu0
    %v4543 = vadd.f32 %v4403, %v4542
    %4544 = vmatprep.mubr.f32.mxu0 0.0
    %v4545 = vand.u32 %v3218, 4294901760
    %v4546 = vsub.f32 %v3218, %v4545
    %4547 = vmatmul.mubr.f32.gmra.mrb[0].mxu0 %v4546
    %v4548 = vpop.f32.mrb[0].mxu0
    %v4549 = vadd.f32 %v4408, %v4548
    %v4550 = vpop.f32.mrb[0].mxu0
    %v4551 = vadd.f32 %v4410, %v4550
    %4552 = vmatprep.mubr.f32.mxu0 0.0
    %v4553 = vand.u32 %v3221, 4294901760
    %v4554 = vsub.f32 %v3221, %v4553
    %4555 = vmatmul.mubr.f32.gmra.mrb[0].mxu0 %v4554
    %v4556 = vpop.f32.mrb[0].mxu0
    %v4557 = vadd.f32 %v4415, %v4556
    %v4558 = vpop.f32.mrb[0].mxu0
    %v4559 = vadd.f32 %v4417, %v4558
    %4560 = vmatprep.mubr.f32.mxu0 0.0
    %v4561 = vand.u32 %v3224, 4294901760
    %v4562 = vsub.f32 %v3224, %v4561
    %4563 = vmatmul.mubr.f32.gmra.mrb[0].mxu0 %v4562
    %v4564 = vpop.f32.mrb[0].mxu0
    %v4565 = vadd.f32 %v4422, %v4564
    %v4566 = vpop.f32.mrb[0].mxu0
    %v4567 = vadd.f32 %v4424, %v4566
    %4568 = vmatprep.mubr.f32.mxu0 0.0
    %v4569 = vand.u32 %v3227, 4294901760
    %v4570 = vsub.f32 %v3227, %v4569
    %4571 = vmatmul.mubr.f32.gmra.mrb[0].mxu0 %v4570
    %v4572 = vpop.f32.mrb[0].mxu0
    %v4573 = vadd.f32 %v4429, %v4572
    %v4574 = vpop.f32.mrb[0].mxu0
    %v4575 = vadd.f32 %v4431, %v4574
    %4576 = vmatprep.mubr.f32.mxu0 0.0
    %v4577 = vand.u32 %v3230, 4294901760
    %v4578 = vsub.f32 %v3230, %v4577
    %4579 = vmatmul.mubr.f32.gmra.mrb[0].mxu0 %v4578
    %v4580 = vpop.f32.mrb[0].mxu0
    %v4581 = vadd.f32 %v4436, %v4580
    %v4582 = vpop.f32.mrb[0].mxu0
    %v4583 = vadd.f32 %v4438, %v4582
    %4584 = vdwg.mxu0
    %v4585 = vand.u32 %v3195, 4294901760
    %4586 = vmatprep.subr.mxu0 %v4585
    %v4587 = vand.u32 %v3194, 4294901760
    %4588 = vmatpush1.msra.mxu0 %v4587
    %v4589 = vand.u32 %v3199, 4294901760
    %4590 = vmatprep.subr.mxu0 %v4589
    %v4591 = vand.u32 %v3198, 4294901760
    %4592 = vmatpush1.msra.mxu0 %v4591
    %v4593 = vand.u32 %v3203, 4294901760
    %4594 = vmatprep.subr.mxu0 %v4593
    %v4595 = vand.u32 %v3202, 4294901760
    %4596 = vmatpush1.msra.mxu0 %v4595
    %v4597 = vand.u32 %v3207, 4294901760
    %4598 = vmatprep.subr.mxu0 %v4597
    %v4599 = vand.u32 %v3206, 4294901760
    %4600 = vmatpush1.msra.mxu0 %v4599
    %4601 = vmatprep.subr.mxu0 0.0
    %4602 = vmatpush1.msra.mxu0 0.0
    %4603 = vmatprep.subr.mxu0 0.0
    %4604 = vmatpush1.msra.mxu0 0.0
    %4605 = vmatprep.subr.mxu0 0.0
    %4606 = vmatpush1.msra.mxu0 0.0
    %4607 = vmatprep.subr.mxu0 0.0
    %4608 = vmatpush1.msra.mxu0 0.0
    %4609 = vmatprep.subr.mxu0 0.0
    %4610 = vmatpush1.msra.mxu0 0.0
    %4611 = vmatprep.subr.mxu0 0.0
    %4612 = vmatpush1.msra.mxu0 0.0
    %4613 = vmatprep.subr.mxu0 0.0
    %4614 = vmatpush1.msra.mxu0 0.0
    %4615 = vmatprep.subr.mxu0 0.0
    %4616 = vmatpush1.msra.mxu0 0.0
    %4617 = vmatprep.subr.mxu0 0.0
    %4618 = vmatpush1.msra.mxu0 0.0
    %4619 = vmatprep.subr.mxu0 0.0
    %4620 = vmatpush1.msra.mxu0 0.0
    %4621 = vmatprep.subr.mxu0 0.0
    %4622 = vmatpush1.msra.mxu0 0.0
    %4623 = vmatprep.subr.mxu0 0.0
    %4624 = vmatpush1.msra.mxu0 0.0
    %4625 = vmatprep.subr.mxu0 0.0
    %4626 = vmatpush1.msra.mxu0 0.0
    %4627 = vmatprep.subr.mxu0 0.0
    %4628 = vmatpush1.msra.mxu0 0.0
    %4629 = vmatprep.subr.mxu0 0.0
    %4630 = vmatpush1.msra.mxu0 0.0
    %4631 = vmatprep.subr.mxu0 0.0
    %4632 = vmatpush1.msra.mxu0 0.0
    %4633 = vmatprep.subr.mxu0 0.0
    %4634 = vmatpush1.msra.mxu0 0.0
    %4635 = vmatprep.subr.mxu0 0.0
    %4636 = vmatpush1.msra.mxu0 0.0
    %4637 = vmatprep.subr.mxu0 0.0
    %4638 = vmatpush1.msra.mxu0 0.0
    %4639 = vmatprep.subr.mxu0 0.0
    %4640 = vmatpush1.msra.mxu0 0.0
    %4641 = vmatprep.subr.mxu0 0.0
    %4642 = vmatpush1.msra.mxu0 0.0
    %4643 = vmatprep.subr.mxu0 0.0
    %4644 = vmatpush1.msra.mxu0 0.0
    %4645 = vmatprep.subr.mxu0 0.0
    %4646 = vmatpush1.msra.mxu0 0.0
    %4647 = vmatprep.subr.mxu0 0.0
    %4648 = vmatpush1.msra.mxu0 0.0
    %4649 = vmatprep.subr.mxu0 0.0
    %4650 = vmatpush1.msra.mxu0 0.0
    %4651 = vmatprep.subr.mxu0 0.0
    %4652 = vmatpush1.msra.mxu0 0.0
    %4653 = vmatprep.subr.mxu0 0.0
    %4654 = vmatpush1.msra.mxu0 0.0
    %4655 = vmatprep.subr.mxu0 0.0
    %4656 = vmatpush1.msra.mxu0 0.0
    %4657 = vmatprep.mubr.f32.mxu0 0.0
    %v4658 = vand.u32 %v3209, 4294901760
    %v4659 = vsub.f32 %v3209, %v4658
    %v4660 = vand.u32 %v4659, 4294901760
    %4661 = vmatmul.mubr.f32.gmra.mrb[0].mxu0 %v4660
    %v4662 = vpop.f32.mrb[0].mxu0
    %v4663 = vadd.f32 %v4525, %v4662
    %v4664 = vpop.f32.mrb[0].mxu0
    %v4665 = vadd.f32 %v4527, %v4664
    %4666 = vmatprep.mubr.f32.mxu0 0.0
    %v4667 = vand.u32 %v3212, 4294901760
    %v4668 = vsub.f32 %v3212, %v4667
    %v4669 = vand.u32 %v4668, 4294901760
    %4670 = vmatmul.mubr.f32.gmra.mrb[0].mxu0 %v4669
    %v4671 = vpop.f32.mrb[0].mxu0
    %v4672 = vadd.f32 %v4533, %v4671
    %v4673 = vpop.f32.mrb[0].mxu0
    %v4674 = vadd.f32 %v4535, %v4673
    %4675 = vmatprep.mubr.f32.mxu0 0.0
    %v4676 = vand.u32 %v3215, 4294901760
    %v4677 = vsub.f32 %v3215, %v4676
    %v4678 = vand.u32 %v4677, 4294901760
    %4679 = vmatmul.mubr.f32.gmra.mrb[0].mxu0 %v4678
    %v4680 = vpop.f32.mrb[0].mxu0
    %v4681 = vadd.f32 %v4541, %v4680
    %v4682 = vpop.f32.mrb[0].mxu0
    %v4683 = vadd.f32 %v4543, %v4682
    %4684 = vmatprep.mubr.f32.mxu0 0.0
    %v4685 = vand.u32 %v3218, 4294901760
    %v4686 = vsub.f32 %v3218, %v4685
    %v4687 = vand.u32 %v4686, 4294901760
    %4688 = vmatmul.mubr.f32.gmra.mrb[0].mxu0 %v4687
    %v4689 = vpop.f32.mrb[0].mxu0
    %v4690 = vadd.f32 %v4549, %v4689
    %v4691 = vpop.f32.mrb[0].mxu0
    %v4692 = vadd.f32 %v4551, %v4691
    %4693 = vmatprep.mubr.f32.mxu0 0.0
    %v4694 = vand.u32 %v3221, 4294901760
    %v4695 = vsub.f32 %v3221, %v4694
    %v4696 = vand.u32 %v4695, 4294901760
    %4697 = vmatmul.mubr.f32.gmra.mrb[0].mxu0 %v4696
    %v4698 = vpop.f32.mrb[0].mxu0
    %v4699 = vadd.f32 %v4557, %v4698
    %v4700 = vpop.f32.mrb[0].mxu0
    %v4701 = vadd.f32 %v4559, %v4700
    %4702 = vmatprep.mubr.f32.mxu0 0.0
    %v4703 = vand.u32 %v3224, 4294901760
    %v4704 = vsub.f32 %v3224, %v4703
    %v4705 = vand.u32 %v4704, 4294901760
    %4706 = vmatmul.mubr.f32.gmra.mrb[0].mxu0 %v4705
    %v4707 = vpop.f32.mrb[0].mxu0
    %v4708 = vadd.f32 %v4565, %v4707
    %v4709 = vpop.f32.mrb[0].mxu0
    %v4710 = vadd.f32 %v4567, %v4709
    %4711 = vmatprep.mubr.f32.mxu0 0.0
    %v4712 = vand.u32 %v3227, 4294901760
    %v4713 = vsub.f32 %v3227, %v4712
    %v4714 = vand.u32 %v4713, 4294901760
    %4715 = vmatmul.mubr.f32.gmra.mrb[0].mxu0 %v4714
    %v4716 = vpop.f32.mrb[0].mxu0
    %v4717 = vadd.f32 %v4573, %v4716
    %v4718 = vpop.f32.mrb[0].mxu0
    %v4719 = vadd.f32 %v4575, %v4718
    %4720 = vmatprep.mubr.f32.mxu0 0.0
    %v4721 = vand.u32 %v3230, 4294901760
    %v4722 = vsub.f32 %v3230, %v4721
    %v4723 = vand.u32 %v4722, 4294901760
    %4724 = vmatmul.mubr.f32.gmra.mrb[0].mxu0 %v4723
    %v4725 = vpop.f32.mrb[0].mxu0
    %v4726 = vadd.f32 %v4581, %v4725
    %v4727 = vpop.f32.mrb[0].mxu0
    %v4728 = vadd.f32 %v4583, %v4727
    %4729 = vdwg.mxu0
    %v4730 = vand.u32 %v3195, 4294901760
    %v4731 = vsub.f32 %v3195, %v4730
    %v4732 = vand.u32 %v4731, 4294901760
    %4733 = vmatprep.subr.mxu0 %v4732
    %v4734 = vand.u32 %v3194, 4294901760
    %v4735 = vsub.f32 %v3194, %v4734
    %v4736 = vand.u32 %v4735, 4294901760
    %4737 = vmatpush1.msra.mxu0 %v4736
    %v4738 = vand.u32 %v3199, 4294901760
    %v4739 = vsub.f32 %v3199, %v4738
    %v4740 = vand.u32 %v4739, 4294901760
    %4741 = vmatprep.subr.mxu0 %v4740
    %v4742 = vand.u32 %v3198, 4294901760
    %v4743 = vsub.f32 %v3198, %v4742
    %v4744 = vand.u32 %v4743, 4294901760
    %4745 = vmatpush1.msra.mxu0 %v4744
    %v4746 = vand.u32 %v3203, 4294901760
    %v4747 = vsub.f32 %v3203, %v4746
    %v4748 = vand.u32 %v4747, 4294901760
    %4749 = vmatprep.subr.mxu0 %v4748
    %v4750 = vand.u32 %v3202, 4294901760
    %v4751 = vsub.f32 %v3202, %v4750
    %v4752 = vand.u32 %v4751, 4294901760
    %4753 = vmatpush1.msra.mxu0 %v4752
    %v4754 = vand.u32 %v3207, 4294901760
    %v4755 = vsub.f32 %v3207, %v4754
    %v4756 = vand.u32 %v4755, 4294901760
    %4757 = vmatprep.subr.mxu0 %v4756
    %v4758 = vand.u32 %v3206, 4294901760
    %v4759 = vsub.f32 %v3206, %v4758
    %v4760 = vand.u32 %v4759, 4294901760
    %4761 = vmatpush1.msra.mxu0 %v4760
    %4762 = vmatprep.subr.mxu0 0.0
    %4763 = vmatpush1.msra.mxu0 0.0
    %4764 = vmatprep.subr.mxu0 0.0
    %4765 = vmatpush1.msra.mxu0 0.0
    %4766 = vmatprep.subr.mxu0 0.0
    %4767 = vmatpush1.msra.mxu0 0.0
    %4768 = vmatprep.subr.mxu0 0.0
    %4769 = vmatpush1.msra.mxu0 0.0
    %4770 = vmatprep.subr.mxu0 0.0
    %4771 = vmatpush1.msra.mxu0 0.0
    %4772 = vmatprep.subr.mxu0 0.0
    %4773 = vmatpush1.msra.mxu0 0.0
    %4774 = vmatprep.subr.mxu0 0.0
    %4775 = vmatpush1.msra.mxu0 0.0
    %4776 = vmatprep.subr.mxu0 0.0
    %4777 = vmatpush1.msra.mxu0 0.0
    %4778 = vmatprep.subr.mxu0 0.0
    %4779 = vmatpush1.msra.mxu0 0.0
    %4780 = vmatprep.subr.mxu0 0.0
    %4781 = vmatpush1.msra.mxu0 0.0
    %4782 = vmatprep.subr.mxu0 0.0
    %4783 = vmatpush1.msra.mxu0 0.0
    %4784 = vmatprep.subr.mxu0 0.0
    %4785 = vmatpush1.msra.mxu0 0.0
    %4786 = vmatprep.subr.mxu0 0.0
    %4787 = vmatpush1.msra.mxu0 0.0
    %4788 = vmatprep.subr.mxu0 0.0
    %4789 = vmatpush1.msra.mxu0 0.0
    %4790 = vmatprep.subr.mxu0 0.0
    %4791 = vmatpush1.msra.mxu0 0.0
    %4792 = vmatprep.subr.mxu0 0.0
    %4793 = vmatpush1.msra.mxu0 0.0
    %4794 = vmatprep.subr.mxu0 0.0
    %4795 = vmatpush1.msra.mxu0 0.0
    %4796 = vmatprep.subr.mxu0 0.0
    %4797 = vmatpush1.msra.mxu0 0.0
    %4798 = vmatprep.subr.mxu0 0.0
    %4799 = vmatpush1.msra.mxu0 0.0
    %4800 = vmatprep.subr.mxu0 0.0
    %4801 = vmatpush1.msra.mxu0 0.0
    %4802 = vmatprep.subr.mxu0 0.0
    %4803 = vmatpush1.msra.mxu0 0.0
    %4804 = vmatprep.subr.mxu0 0.0
    %4805 = vmatpush1.msra.mxu0 0.0
    %4806 = vmatprep.subr.mxu0 0.0
    %4807 = vmatpush1.msra.mxu0 0.0
    %4808 = vmatprep.subr.mxu0 0.0
    %4809 = vmatpush1.msra.mxu0 0.0
    %4810 = vmatprep.subr.mxu0 0.0
    %4811 = vmatpush1.msra.mxu0 0.0
    %4812 = vmatprep.subr.mxu0 0.0
    %4813 = vmatpush1.msra.mxu0 0.0
    %4814 = vmatprep.subr.mxu0 0.0
    %4815 = vmatpush1.msra.mxu0 0.0
    %4816 = vmatprep.subr.mxu0 0.0
    %4817 = vmatpush1.msra.mxu0 0.0
    %4818 = vmatprep.mubr.f32.mxu0 0.0
    %v4819 = vand.u32 %v3209, 4294901760
    %4820 = vmatmul.mubr.f32.gmra.mrb[0].mxu0 %v4819
    %v4821 = vpop.f32.mrb[0].mxu0
    %v4822 = vadd.f32 %v4663, %v4821
    %v4823 = vpop.f32.mrb[0].mxu0
    %v4824 = vadd.f32 %v4665, %v4823
    %4825 = vmatprep.mubr.f32.mxu0 0.0
    %v4826 = vand.u32 %v3212, 4294901760
    %4827 = vmatmul.mubr.f32.gmra.mrb[0].mxu0 %v4826
    %v4828 = vpop.f32.mrb[0].mxu0
    %v4829 = vadd.f32 %v4672, %v4828
    %v4830 = vpop.f32.mrb[0].mxu0
    %v4831 = vadd.f32 %v4674, %v4830
    %4832 = vmatprep.mubr.f32.mxu0 0.0
    %v4833 = vand.u32 %v3215, 4294901760
    %4834 = vmatmul.mubr.f32.gmra.mrb[0].mxu0 %v4833
    %v4835 = vpop.f32.mrb[0].mxu0
    %v4836 = vadd.f32 %v4681, %v4835
    %v4837 = vpop.f32.mrb[0].mxu0
    %v4838 = vadd.f32 %v4683, %v4837
    %4839 = vmatprep.mubr.f32.mxu0 0.0
    %v4840 = vand.u32 %v3218, 4294901760
    %4841 = vmatmul.mubr.f32.gmra.mrb[0].mxu0 %v4840
    %v4842 = vpop.f32.mrb[0].mxu0
    %v4843 = vadd.f32 %v4690, %v4842
    %v4844 = vpop.f32.mrb[0].mxu0
    %v4845 = vadd.f32 %v4692, %v4844
    %4846 = vmatprep.mubr.f32.mxu0 0.0
    %v4847 = vand.u32 %v3221, 4294901760
    %4848 = vmatmul.mubr.f32.gmra.mrb[0].mxu0 %v4847
    %v4849 = vpop.f32.mrb[0].mxu0
    %v4850 = vadd.f32 %v4699, %v4849
    %v4851 = vpop.f32.mrb[0].mxu0
    %v4852 = vadd.f32 %v4701, %v4851
    %4853 = vmatprep.mubr.f32.mxu0 0.0
    %v4854 = vand.u32 %v3224, 4294901760
    %4855 = vmatmul.mubr.f32.gmra.mrb[0].mxu0 %v4854
    %v4856 = vpop.f32.mrb[0].mxu0
    %v4857 = vadd.f32 %v4708, %v4856
    %v4858 = vpop.f32.mrb[0].mxu0
    %v4859 = vadd.f32 %v4710, %v4858
    %4860 = vmatprep.mubr.f32.mxu0 0.0
    %v4861 = vand.u32 %v3227, 4294901760
    %4862 = vmatmul.mubr.f32.gmra.mrb[0].mxu0 %v4861
    %v4863 = vpop.f32.mrb[0].mxu0
    %v4864 = vadd.f32 %v4717, %v4863
    %v4865 = vpop.f32.mrb[0].mxu0
    %v4866 = vadd.f32 %v4719, %v4865
    %4867 = vmatprep.mubr.f32.mxu0 0.0
    %v4868 = vand.u32 %v3230, 4294901760
    %4869 = vmatmul.mubr.f32.gmra.mrb[0].mxu0 %v4868
    %v4870 = vpop.f32.mrb[0].mxu0
    %v4871 = vadd.f32 %v4726, %v4870
    %v4872 = vpop.f32.mrb[0].mxu0
    %v4873 = vadd.f32 %v4728, %v4872
    %4874 = vdwg.mxu0
    %v4875 = vand.u32 %v3195, 4294901760
    %4876 = vmatprep.subr.mxu0 %v4875
    %v4877 = vand.u32 %v3194, 4294901760
    %4878 = vmatpush1.msra.mxu0 %v4877
    %v4879 = vand.u32 %v3199, 4294901760
    %4880 = vmatprep.subr.mxu0 %v4879
    %v4881 = vand.u32 %v3198, 4294901760
    %4882 = vmatpush1.msra.mxu0 %v4881
    %v4883 = vand.u32 %v3203, 4294901760
    %4884 = vmatprep.subr.mxu0 %v4883
    %v4885 = vand.u32 %v3202, 4294901760
    %4886 = vmatpush1.msra.mxu0 %v4885
    %v4887 = vand.u32 %v3207, 4294901760
    %4888 = vmatprep.subr.mxu0 %v4887
    %v4889 = vand.u32 %v3206, 4294901760
    %4890 = vmatpush1.msra.mxu0 %v4889
    %4891 = vmatprep.subr.mxu0 0.0
    %4892 = vmatpush1.msra.mxu0 0.0
    %4893 = vmatprep.subr.mxu0 0.0
    %4894 = vmatpush1.msra.mxu0 0.0
    %4895 = vmatprep.subr.mxu0 0.0
    %4896 = vmatpush1.msra.mxu0 0.0
    %4897 = vmatprep.subr.mxu0 0.0
    %4898 = vmatpush1.msra.mxu0 0.0
    %4899 = vmatprep.subr.mxu0 0.0
    %4900 = vmatpush1.msra.mxu0 0.0
    %4901 = vmatprep.subr.mxu0 0.0
    %4902 = vmatpush1.msra.mxu0 0.0
    %4903 = vmatprep.subr.mxu0 0.0
    %4904 = vmatpush1.msra.mxu0 0.0
    %4905 = vmatprep.subr.mxu0 0.0
    %4906 = vmatpush1.msra.mxu0 0.0
    %4907 = vmatprep.subr.mxu0 0.0
    %4908 = vmatpush1.msra.mxu0 0.0
    %4909 = vmatprep.subr.mxu0 0.0
    %4910 = vmatpush1.msra.mxu0 0.0
    %4911 = vmatprep.subr.mxu0 0.0
    %4912 = vmatpush1.msra.mxu0 0.0
    %4913 = vmatprep.subr.mxu0 0.0
    %4914 = vmatpush1.msra.mxu0 0.0
    %4915 = vmatprep.subr.mxu0 0.0
    %4916 = vmatpush1.msra.mxu0 0.0
    %4917 = vmatprep.subr.mxu0 0.0
    %4918 = vmatpush1.msra.mxu0 0.0
    %4919 = vmatprep.subr.mxu0 0.0
    %4920 = vmatpush1.msra.mxu0 0.0
    %4921 = vmatprep.subr.mxu0 0.0
    %4922 = vmatpush1.msra.mxu0 0.0
    %4923 = vmatprep.subr.mxu0 0.0
    %4924 = vmatpush1.msra.mxu0 0.0
    %4925 = vmatprep.subr.mxu0 0.0
    %4926 = vmatpush1.msra.mxu0 0.0
    %4927 = vmatprep.subr.mxu0 0.0
    %4928 = vmatpush1.msra.mxu0 0.0
    %4929 = vmatprep.subr.mxu0 0.0
    %4930 = vmatpush1.msra.mxu0 0.0
    %4931 = vmatprep.subr.mxu0 0.0
    %4932 = vmatpush1.msra.mxu0 0.0
    %4933 = vmatprep.subr.mxu0 0.0
    %4934 = vmatpush1.msra.mxu0 0.0
    %4935 = vmatprep.subr.mxu0 0.0
    %4936 = vmatpush1.msra.mxu0 0.0
    %4937 = vmatprep.subr.mxu0 0.0
    %4938 = vmatpush1.msra.mxu0 0.0
    %4939 = vmatprep.subr.mxu0 0.0
    %4940 = vmatpush1.msra.mxu0 0.0
    %4941 = vmatprep.subr.mxu0 0.0
    %4942 = vmatpush1.msra.mxu0 0.0
    %4943 = vmatprep.subr.mxu0 0.0
    %4944 = vmatpush1.msra.mxu0 0.0
    %4945 = vmatprep.subr.mxu0 0.0
    %4946 = vmatpush1.msra.mxu0 0.0
    %4947 = vmatprep.mubr.f32.mxu0 0.0
    %v4948 = vand.u32 %v3209, 4294901760
    %4949 = vmatmul.mubr.f32.gmra.mrb[0].mxu0 %v4948
    %v4950 = vpop.f32.mrb[0].mxu0
    %v4951 = vadd.f32 %v4822, %v4950
    %v4952 = vpop.f32.mrb[0].mxu0
    %v4953 = vadd.f32 %v4824, %v4952
    %4954 = vmatprep.mubr.f32.mxu0 0.0
    %v4955 = vand.u32 %v3212, 4294901760
    %4956 = vmatmul.mubr.f32.gmra.mrb[0].mxu0 %v4955
    %v4957 = vpop.f32.mrb[0].mxu0
    %v4958 = vadd.f32 %v4829, %v4957
    %v4959 = vpop.f32.mrb[0].mxu0
    %v4960 = vadd.f32 %v4831, %v4959
    %4961 = vmatprep.mubr.f32.mxu0 0.0
    %v4962 = vand.u32 %v3215, 4294901760
    %4963 = vmatmul.mubr.f32.gmra.mrb[0].mxu0 %v4962
    %v4964 = vpop.f32.mrb[0].mxu0
    %v4965 = vadd.f32 %v4836, %v4964
    %v4966 = vpop.f32.mrb[0].mxu0
    %v4967 = vadd.f32 %v4838, %v4966
    %4968 = vmatprep.mubr.f32.mxu0 0.0
    %v4969 = vand.u32 %v3218, 4294901760
    %4970 = vmatmul.mubr.f32.gmra.mrb[0].mxu0 %v4969
    %v4971 = vpop.f32.mrb[0].mxu0
    %v4972 = vadd.f32 %v4843, %v4971
    %v4973 = vpop.f32.mrb[0].mxu0
    %v4974 = vadd.f32 %v4845, %v4973
    %4975 = vmatprep.mubr.f32.mxu0 0.0
    %v4976 = vand.u32 %v3221, 4294901760
    %4977 = vmatmul.mubr.f32.gmra.mrb[0].mxu0 %v4976
    %v4978 = vpop.f32.mrb[0].mxu0
    %v4979 = vadd.f32 %v4850, %v4978
    %v4980 = vpop.f32.mrb[0].mxu0
    %v4981 = vadd.f32 %v4852, %v4980
    %4982 = vmatprep.mubr.f32.mxu0 0.0
    %v4983 = vand.u32 %v3224, 4294901760
    %4984 = vmatmul.mubr.f32.gmra.mrb[0].mxu0 %v4983
    %v4985 = vpop.f32.mrb[0].mxu0
    %v4986 = vadd.f32 %v4857, %v4985
    %v4987 = vpop.f32.mrb[0].mxu0
    %v4988 = vadd.f32 %v4859, %v4987
    %4989 = vmatprep.mubr.f32.mxu0 0.0
    %v4990 = vand.u32 %v3227, 4294901760
    %4991 = vmatmul.mubr.f32.gmra.mrb[0].mxu0 %v4990
    %v4992 = vpop.f32.mrb[0].mxu0
    %v4993 = vadd.f32 %v4864, %v4992
    %v4994 = vpop.f32.mrb[0].mxu0
    %v4995 = vadd.f32 %v4866, %v4994
    %4996 = vmatprep.mubr.f32.mxu0 0.0
    %v4997 = vand.u32 %v3230, 4294901760
    %4998 = vmatmul.mubr.f32.gmra.mrb[0].mxu0 %v4997
    %v4999 = vpop.f32.mrb[0].mxu0
    %v5000 = vadd.f32 %v4871, %v4999
    %v5001 = vpop.f32.mrb[0].mxu0
    %v5002 = vadd.f32 %v4873, %v5001
    %5003 = vdwg.mxu0
    %v5004 = vmul.f32 %v580, %v4065
    %v5005 = vmul.f32 %v581, %v4067
    %v5006 = vmul.f32 %v582, %v4951
    %v5007 = vmul.f32 %v583, %v4953
    %v5008 = vmul.f32 %v584, %v4072
    %v5009 = vmul.f32 %v585, %v4074
    %v5010 = vmul.f32 %v586, %v4958
    %v5011 = vmul.f32 %v587, %v4960
    %v5012 = vmul.f32 %v588, %v4079
    %v5013 = vmul.f32 %v589, %v4081
    %v5014 = vmul.f32 %v590, %v4965
    %v5015 = vmul.f32 %v591, %v4967
    %v5016 = vmul.f32 %v592, %v4086
    %v5017 = vmul.f32 %v593, %v4088
    %v5018 = vmul.f32 %v594, %v4972
    %v5019 = vmul.f32 %v595, %v4974
    %v5020 = vmul.f32 %v596, %v4093
    %v5021 = vmul.f32 %v597, %v4095
    %v5022 = vmul.f32 %v598, %v4979
    %v5023 = vmul.f32 %v599, %v4981
    %v5024 = vmul.f32 %v600, %v4100
    %v5025 = vmul.f32 %v601, %v4102
    %v5026 = vmul.f32 %v602, %v4986
    %v5027 = vmul.f32 %v603, %v4988
    %v5028 = vmul.f32 %v604, %v4107
    %v5029 = vmul.f32 %v605, %v4109
    %v5030 = vmul.f32 %v606, %v4993
    %v5031 = vmul.f32 %v607, %v4995
    %v5032 = vmul.f32 %v608, %v4114
    %v5033 = vmul.f32 %v609, %v4116
    %v5034 = vmul.f32 %v610, %v5000
    %v5035 = vmul.f32 %v611, %v5002
    %v5036 = vpack.c.bf16 %v5008, %v5004
    %v5037 = vpack.c.bf16 %v5009, %v5005
    %v5038 = vpack.c.bf16 %v5010, %v5006
    %v5039 = vpack.c.bf16 %v5011, %v5007
    %v5040 = vpack.c.bf16 %v5016, %v5012
    %v5041 = vpack.c.bf16 %v5017, %v5013
    %v5042 = vpack.c.bf16 %v5018, %v5014
    %v5043 = vpack.c.bf16 %v5019, %v5015
    %v5044 = vpack.c.bf16 %v5024, %v5020
    %v5045 = vpack.c.bf16 %v5025, %v5021
    %v5046 = vpack.c.bf16 %v5026, %v5022
    %v5047 = vpack.c.bf16 %v5027, %v5023
    %v5048 = vpack.c.bf16 %v5032, %v5028
    %v5049 = vpack.c.bf16 %v5033, %v5029
    %v5050 = vpack.c.bf16 %v5034, %v5030
    %v5051 = vpack.c.bf16 %v5035, %v5031
    %v5052 = vld [vmem:[%s4] sm:$0xf]
    %v5053 = vld [vmem:[%s4 + $0x4] sm:$0xf]
    %v5054 = vld [vmem:[%s4 + $0x8] sm:$0xf]
    %v5055 = vld [vmem:[%s4 + $0xc] sm:$0xf]
    %v5056 = vld [vmem:[%s4 + $0x10] sm:$0xf]
    %v5057 = vld [vmem:[%s4 + $0x14] sm:$0xf]
    %v5058 = vld [vmem:[%s4 + $0x18] sm:$0xf]
    %v5059 = vld [vmem:[%s4 + $0x1c] sm:$0xf]
    %v5060 = vld [vmem:[%s4 + $0x20] sm:$0xf]
    %v5061 = vld [vmem:[%s4 + $0x24] sm:$0xf]
    %v5062 = vld [vmem:[%s4 + $0x28] sm:$0xf]
    %v5063 = vld [vmem:[%s4 + $0x2c] sm:$0xf]
    %v5064 = vld [vmem:[%s4 + $0x30] sm:$0xf]
    %v5065 = vld [vmem:[%s4 + $0x34] sm:$0xf]
    %v5066 = vld [vmem:[%s4 + $0x38] sm:$0xf]
    %v5067 = vld [vmem:[%s4 + $0x3c] sm:$0xf]
    %v5068 = vld [vmem:[%s4 + $0x40] sm:$0xf]
    %v5069 = vld [vmem:[%s4 + $0x44] sm:$0xf]
    %v5070 = vld [vmem:[%s4 + $0x48] sm:$0xf]
    %v5071 = vld [vmem:[%s4 + $0x4c] sm:$0xf]
    %v5072 = vld [vmem:[%s4 + $0x50] sm:$0xf]
    %v5073 = vld [vmem:[%s4 + $0x54] sm:$0xf]
    %v5074 = vld [vmem:[%s4 + $0x58] sm:$0xf]
    %v5075 = vld [vmem:[%s4 + $0x5c] sm:$0xf]
    %v5076 = vld [vmem:[%s4 + $0x60] sm:$0xf]
    %v5077 = vld [vmem:[%s4 + $0x64] sm:$0xf]
    %v5078 = vld [vmem:[%s4 + $0x68] sm:$0xf]
    %v5079 = vld [vmem:[%s4 + $0x6c] sm:$0xf]
    %v5080 = vld [vmem:[%s4 + $0x70] sm:$0xf]
    %v5081 = vld [vmem:[%s4 + $0x74] sm:$0xf]
    %v5082 = vld [vmem:[%s4 + $0x78] sm:$0xf]
    %v5083 = vld [vmem:[%s4 + $0x7c] sm:$0xf]
    %v5084 = vld [vmem:[%s4 + $0x80] sm:$0xf]
    %v5085 = vld [vmem:[%s4 + $0x84] sm:$0xf]
    %v5086 = vld [vmem:[%s4 + $0x88] sm:$0xf]
    %v5087 = vld [vmem:[%s4 + $0x8c] sm:$0xf]
    %v5088 = vld [vmem:[%s4 + $0x90] sm:$0xf]
    %v5089 = vld [vmem:[%s4 + $0x94] sm:$0xf]
    %v5090 = vld [vmem:[%s4 + $0x98] sm:$0xf]
    %v5091 = vld [vmem:[%s4 + $0x9c] sm:$0xf]
    %v5092 = vld [vmem:[%s4 + $0xa0] sm:$0xf]
    %v5093 = vld [vmem:[%s4 + $0xa4] sm:$0xf]
    %v5094 = vld [vmem:[%s4 + $0xa8] sm:$0xf]
    %v5095 = vld [vmem:[%s4 + $0xac] sm:$0xf]
    %v5096 = vld [vmem:[%s4 + $0xb0] sm:$0xf]
    %v5097 = vld [vmem:[%s4 + $0xb4] sm:$0xf]
    %v5098 = vld [vmem:[%s4 + $0xb8] sm:$0xf]
    %v5099 = vld [vmem:[%s4 + $0xbc] sm:$0xf]
    %v5100 = vld [vmem:[%s4 + $0xc0] sm:$0xf]
    %v5101 = vld [vmem:[%s4 + $0xc4] sm:$0xf]
    %v5102 = vld [vmem:[%s4 + $0xc8] sm:$0xf]
    %v5103 = vld [vmem:[%s4 + $0xcc] sm:$0xf]
    %v5104 = vld [vmem:[%s4 + $0xd0] sm:$0xf]
    %v5105 = vld [vmem:[%s4 + $0xd4] sm:$0xf]
    %v5106 = vld [vmem:[%s4 + $0xd8] sm:$0xf]
    %v5107 = vld [vmem:[%s4 + $0xdc] sm:$0xf]
    %v5108 = vld [vmem:[%s4 + $0xe0] sm:$0xf]
    %v5109 = vld [vmem:[%s4 + $0xe4] sm:$0xf]
    %v5110 = vld [vmem:[%s4 + $0xe8] sm:$0xf]
    %v5111 = vld [vmem:[%s4 + $0xec] sm:$0xf]
    %v5112 = vld [vmem:[%s4 + $0xf0] sm:$0xf]
    %v5113 = vld [vmem:[%s4 + $0xf4] sm:$0xf]
    %v5114 = vld [vmem:[%s4 + $0xf8] sm:$0xf]
    %v5115 = vld [vmem:[%s4 + $0xfc] sm:$0xf]
    %v5116 = vld [vmem:[%s5] sm:$0x1]
    %v5118 = vlaneseq
    %v5119 = vshrl.u32 %v5118, 7
    %v5120 = vsub.s32 0, %v5119
    %v5121 = vrot.slane %v5116, %v5120
    %v5187 = vunpack.c.l.b16 %v5052
    %v5188 = vunpack.c.l.b16 %v5053
    %v5189 = vunpack.c.l.b16 %v5054
    %v5190 = vunpack.c.l.b16 %v5055
    %v5191 = vunpack.c.l.b16 %v5056
    %v5192 = vunpack.c.l.b16 %v5057
    %v5193 = vunpack.c.l.b16 %v5058
    %v5194 = vunpack.c.l.b16 %v5059
    %v5195 = vunpack.c.l.b16 %v5060
    %v5196 = vunpack.c.l.b16 %v5061
    %v5197 = vunpack.c.l.b16 %v5062
    %v5198 = vunpack.c.l.b16 %v5063
    %v5199 = vunpack.c.l.b16 %v5064
    %v5200 = vunpack.c.l.b16 %v5065
    %v5201 = vunpack.c.l.b16 %v5066
    %v5202 = vunpack.c.l.b16 %v5067
    %v5203 = vunpack.c.l.b16 %v5068
    %v5204 = vunpack.c.l.b16 %v5069
    %v5205 = vunpack.c.l.b16 %v5070
    %v5206 = vunpack.c.l.b16 %v5071
    %v5207 = vunpack.c.l.b16 %v5072
    %v5208 = vunpack.c.l.b16 %v5073
    %v5209 = vunpack.c.l.b16 %v5074
    %v5210 = vunpack.c.l.b16 %v5075
    %v5211 = vunpack.c.l.b16 %v5076
    %v5212 = vunpack.c.l.b16 %v5077
    %v5213 = vunpack.c.l.b16 %v5078
    %v5214 = vunpack.c.l.b16 %v5079
    %v5215 = vunpack.c.l.b16 %v5080
    %v5216 = vunpack.c.l.b16 %v5081
    %v5217 = vunpack.c.l.b16 %v5082
    %v5218 = vunpack.c.l.b16 %v5083
    %v5219 = vunpack.c.l.b16 %v5084
    %v5220 = vunpack.c.l.b16 %v5085
    %v5221 = vunpack.c.l.b16 %v5086
    %v5222 = vunpack.c.l.b16 %v5087
    %v5223 = vunpack.c.l.b16 %v5088
    %v5224 = vunpack.c.l.b16 %v5089
    %v5225 = vunpack.c.l.b16 %v5090
    %v5226 = vunpack.c.l.b16 %v5091
    %v5227 = vunpack.c.l.b16 %v5092
    %v5228 = vunpack.c.l.b16 %v5093
    %v5229 = vunpack.c.l.b16 %v5094
    %v5230 = vunpack.c.l.b16 %v5095
    %v5231 = vunpack.c.l.b16 %v5096
    %v5232 = vunpack.c.l.b16 %v5097
    %v5233 = vunpack.c.l.b16 %v5098
    %v5234 = vunpack.c.l.b16 %v5099
    %v5235 = vunpack.c.l.b16 %v5100
    %v5236 = vunpack.c.l.b16 %v5101
    %v5237 = vunpack.c.l.b16 %v5102
    %v5238 = vunpack.c.l.b16 %v5103
    %v5239 = vunpack.c.l.b16 %v5104
    %v5240 = vunpack.c.l.b16 %v5105
    %v5241 = vunpack.c.l.b16 %v5106
    %v5242 = vunpack.c.l.b16 %v5107
    %v5243 = vunpack.c.l.b16 %v5108
    %v5244 = vunpack.c.l.b16 %v5109
    %v5245 = vunpack.c.l.b16 %v5110
    %v5246 = vunpack.c.l.b16 %v5111
    %v5247 = vunpack.c.l.b16 %v5112
    %v5248 = vunpack.c.l.b16 %v5113
    %v5249 = vunpack.c.l.b16 %v5114
    %v5250 = vunpack.c.l.b16 %v5115
    %v5251 = vpack.c.b16 %v5188, %v5187
    %v5252 = vpack.c.b16 %v5190, %v5189
    %v5253 = vpack.c.b16 %v5192, %v5191
    %v5254 = vpack.c.b16 %v5194, %v5193
    %v5255 = vpack.c.b16 %v5196, %v5195
    %v5256 = vpack.c.b16 %v5198, %v5197
    %v5257 = vpack.c.b16 %v5200, %v5199
    %v5258 = vpack.c.b16 %v5202, %v5201
    %v5259 = vpack.c.b16 %v5204, %v5203
    %v5260 = vpack.c.b16 %v5206, %v5205
    %v5261 = vpack.c.b16 %v5208, %v5207
    %v5262 = vpack.c.b16 %v5210, %v5209
    %v5263 = vpack.c.b16 %v5212, %v5211
    %v5264 = vpack.c.b16 %v5214, %v5213
    %v5265 = vpack.c.b16 %v5216, %v5215
    %v5266 = vpack.c.b16 %v5218, %v5217
    %v5267 = vpack.c.b16 %v5220, %v5219
    %v5268 = vpack.c.b16 %v5222, %v5221
    %v5269 = vpack.c.b16 %v5224, %v5223
    %v5270 = vpack.c.b16 %v5226, %v5225
    %v5271 = vpack.c.b16 %v5228, %v5227
    %v5272 = vpack.c.b16 %v5230, %v5229
    %v5273 = vpack.c.b16 %v5232, %v5231
    %v5274 = vpack.c.b16 %v5234, %v5233
    %v5275 = vpack.c.b16 %v5236, %v5235
    %v5276 = vpack.c.b16 %v5238, %v5237
    %v5277 = vpack.c.b16 %v5240, %v5239
    %v5278 = vpack.c.b16 %v5242, %v5241
    %v5279 = vpack.c.b16 %v5244, %v5243
    %v5280 = vpack.c.b16 %v5246, %v5245
    %v5281 = vpack.c.b16 %v5248, %v5247
    %v5282 = vpack.c.b16 %v5250, %v5249
    %5315 = vmatprep.subr.bf16.mxu0 0
    %5316 = vmatpush1.bf16.msra.mxu0 %v5251
    %5317 = vmatprep.subr.bf16.mxu0 0
    %5318 = vmatpush1.bf16.msra.mxu0 %v5252
    %5319 = vmatprep.subr.bf16.mxu0 0
    %5320 = vmatpush1.bf16.msra.mxu0 %v5253
    %5321 = vmatprep.subr.bf16.mxu0 0
    %5322 = vmatpush1.bf16.msra.mxu0 %v5254
    %5323 = vmatprep.subr.bf16.mxu0 0
    %5324 = vmatpush1.bf16.msra.mxu0 %v5255
    %5325 = vmatprep.subr.bf16.mxu0 0
    %5326 = vmatpush1.bf16.msra.mxu0 %v5256
    %5327 = vmatprep.subr.bf16.mxu0 0
    %5328 = vmatpush1.bf16.msra.mxu0 %v5257
    %5329 = vmatprep.subr.bf16.mxu0 0
    %5330 = vmatpush1.bf16.msra.mxu0 %v5258
    %5331 = vmatprep.subr.bf16.mxu0 0
    %5332 = vmatpush1.bf16.msra.mxu0 %v5259
    %5333 = vmatprep.subr.bf16.mxu0 0
    %5334 = vmatpush1.bf16.msra.mxu0 %v5260
    %5335 = vmatprep.subr.bf16.mxu0 0
    %5336 = vmatpush1.bf16.msra.mxu0 %v5261
    %5337 = vmatprep.subr.bf16.mxu0 0
    %5338 = vmatpush1.bf16.msra.mxu0 %v5262
    %5339 = vmatprep.subr.bf16.mxu0 0
    %5340 = vmatpush1.bf16.msra.mxu0 %v5263
    %5341 = vmatprep.subr.bf16.mxu0 0
    %5342 = vmatpush1.bf16.msra.mxu0 %v5264
    %5343 = vmatprep.subr.bf16.mxu0 0
    %5344 = vmatpush1.bf16.msra.mxu0 %v5265
    %5345 = vmatprep.subr.bf16.mxu0 0
    %5346 = vmatpush1.bf16.msra.mxu0 %v5266
    %5347 = vmatprep.mubr.bf16.mxu0 %v5037
    %5348 = vmatmul.mubr.bf16.gmra.mrb[0].mxu0 %v5036
    %v5349 = vpop.f32.mrb[0].mxu0
    %v5350 = vadd.f32 %v5121, %v5349
    %v5351 = vpop.f32.mrb[0].mxu0
    %v5352 = vpop.f32.mrb[0].mxu0
    %v5353 = vadd.f32 %v5121, %v5352
    %v5354 = vpop.f32.mrb[0].mxu0
    %5355 = vmatprep.mubr.bf16.mxu0 %v5041
    %5356 = vmatmul.mubr.bf16.gmra.mrb[0].mxu0 %v5040
    %v5357 = vpop.f32.mrb[0].mxu0
    %v5358 = vadd.f32 %v5121, %v5357
    %v5359 = vpop.f32.mrb[0].mxu0
    %v5360 = vpop.f32.mrb[0].mxu0
    %v5361 = vadd.f32 %v5121, %v5360
    %v5362 = vpop.f32.mrb[0].mxu0
    %5363 = vmatprep.mubr.bf16.mxu0 %v5045
    %5364 = vmatmul.mubr.bf16.gmra.mrb[0].mxu0 %v5044
    %v5365 = vpop.f32.mrb[0].mxu0
    %v5366 = vadd.f32 %v5121, %v5365
    %v5367 = vpop.f32.mrb[0].mxu0
    %v5368 = vpop.f32.mrb[0].mxu0
    %v5369 = vadd.f32 %v5121, %v5368
    %v5370 = vpop.f32.mrb[0].mxu0
    %5371 = vmatprep.mubr.bf16.mxu0 %v5049
    %5372 = vmatmul.mubr.bf16.gmra.mrb[0].mxu0 %v5048
    %v5373 = vpop.f32.mrb[0].mxu0
    %v5374 = vadd.f32 %v5121, %v5373
    %v5375 = vpop.f32.mrb[0].mxu0
    %v5376 = vpop.f32.mrb[0].mxu0
    %v5377 = vadd.f32 %v5121, %v5376
    %v5378 = vpop.f32.mrb[0].mxu0
    %5379 = vdwg.mxu0
    %5380 = vmatprep.subr.bf16.mxu0 0
    %5381 = vmatpush1.bf16.msra.mxu0 %v5267
    %5382 = vmatprep.subr.bf16.mxu0 0
    %5383 = vmatpush1.bf16.msra.mxu0 %v5268
    %5384 = vmatprep.subr.bf16.mxu0 0
    %5385 = vmatpush1.bf16.msra.mxu0 %v5269
    %5386 = vmatprep.subr.bf16.mxu0 0
    %5387 = vmatpush1.bf16.msra.mxu0 %v5270
    %5388 = vmatprep.subr.bf16.mxu0 0
    %5389 = vmatpush1.bf16.msra.mxu0 %v5271
    %5390 = vmatprep.subr.bf16.mxu0 0
    %5391 = vmatpush1.bf16.msra.mxu0 %v5272
    %5392 = vmatprep.subr.bf16.mxu0 0
    %5393 = vmatpush1.bf16.msra.mxu0 %v5273
    %5394 = vmatprep.subr.bf16.mxu0 0
    %5395 = vmatpush1.bf16.msra.mxu0 %v5274
    %5396 = vmatprep.subr.bf16.mxu0 0
    %5397 = vmatpush1.bf16.msra.mxu0 %v5275
    %5398 = vmatprep.subr.bf16.mxu0 0
    %5399 = vmatpush1.bf16.msra.mxu0 %v5276
    %5400 = vmatprep.subr.bf16.mxu0 0
    %5401 = vmatpush1.bf16.msra.mxu0 %v5277
    %5402 = vmatprep.subr.bf16.mxu0 0
    %5403 = vmatpush1.bf16.msra.mxu0 %v5278
    %5404 = vmatprep.subr.bf16.mxu0 0
    %5405 = vmatpush1.bf16.msra.mxu0 %v5279
    %5406 = vmatprep.subr.bf16.mxu0 0
    %5407 = vmatpush1.bf16.msra.mxu0 %v5280
    %5408 = vmatprep.subr.bf16.mxu0 0
    %5409 = vmatpush1.bf16.msra.mxu0 %v5281
    %5410 = vmatprep.subr.bf16.mxu0 0
    %5411 = vmatpush1.bf16.msra.mxu0 %v5282
    %5412 = vmatprep.mubr.bf16.mxu0 %v5039
    %5413 = vmatmul.mubr.bf16.gmra.mrb[0].mxu0 %v5038
    %v5414 = vpop.f32.mrb[0].mxu0
    %v5415 = vadd.f32 %v5350, %v5414
    %v5416 = vpop.f32.mrb[0].mxu0
    %v5417 = vpop.f32.mrb[0].mxu0
    %v5418 = vadd.f32 %v5353, %v5417
    %v5419 = vpop.f32.mrb[0].mxu0
    %5420 = vmatprep.mubr.bf16.mxu0 %v5043
    %5421 = vmatmul.mubr.bf16.gmra.mrb[0].mxu0 %v5042
    %v5422 = vpop.f32.mrb[0].mxu0
    %v5423 = vadd.f32 %v5358, %v5422
    %v5424 = vpop.f32.mrb[0].mxu0
    %v5425 = vpop.f32.mrb[0].mxu0
    %v5426 = vadd.f32 %v5361, %v5425
    %v5427 = vpop.f32.mrb[0].mxu0
    %5428 = vmatprep.mubr.bf16.mxu0 %v5047
    %5429 = vmatmul.mubr.bf16.gmra.mrb[0].mxu0 %v5046
    %v5430 = vpop.f32.mrb[0].mxu0
    %v5431 = vadd.f32 %v5366, %v5430
    %v5432 = vpop.f32.mrb[0].mxu0
    %v5433 = vpop.f32.mrb[0].mxu0
    %v5434 = vadd.f32 %v5369, %v5433
    %v5435 = vpop.f32.mrb[0].mxu0
    %5436 = vmatprep.mubr.bf16.mxu0 %v5051
    %5437 = vmatmul.mubr.bf16.gmra.mrb[0].mxu0 %v5050
    %v5438 = vpop.f32.mrb[0].mxu0
    %v5439 = vadd.f32 %v5374, %v5438
    %v5440 = vpop.f32.mrb[0].mxu0
    %v5441 = vpop.f32.mrb[0].mxu0
    %v5442 = vadd.f32 %v5377, %v5441
    %v5443 = vpop.f32.mrb[0].mxu0
    %5444 = vdwg.mxu0
    %5445 = vst.msk [vmem:[#allocation2] sm:$0xff] %vm85, %v5415
    %5446 = vst.msk [vmem:[#allocation2 + $0x8] sm:$0xff] %vm85, %v5418
    %5447 = vst.msk [vmem:[#allocation2 + $0x10] sm:$0xff] %vm85, %v5423
    %5448 = vst.msk [vmem:[#allocation2 + $0x18] sm:$0xff] %vm85, %v5426
    %5449 = vst.msk [vmem:[#allocation2 + $0x20] sm:$0xff] %vm85, %v5431
    %5450 = vst.msk [vmem:[#allocation2 + $0x28] sm:$0xff] %vm85, %v5434
    %5451 = vst.msk [vmem:[#allocation2 + $0x30] sm:$0xff] %vm85, %v5439
    %5452 = vst.msk [vmem:[#allocation2 + $0x38] sm:$0xff] %vm85, %v5442
    // Predicated region
    $region26: #{tpu_custom_call.1} parent=1 // pred_check
      _
    $region27: #{tpu_custom_call.1} parent=1 // pred_check_branch
      %5454 = sbr.rel (0) target = $region29
    $region28: #{tpu_custom_call.1} parent=1 // pred_region
      %s5456 = ssub.s32 1024, 1024
      %5457 = vsyncadd [#allocation3], %s5456
      %s5458 = sshll.u32 [#allocation2], 4
      %s5459 = int_to_ptr.vmem [resolvable:$true] %s5458
      %5464 = dma.vmem_to_hbm [thread:$0]  %s5459, 1024, %s6, [#allocation3], 128, 128, 8
    $region29: #{tpu_custom_call.1} parent=1 // pred_fallthru
      _
    // Predicated region
    $region30: #{tpu_custom_call.1} parent=1 // pred_check
      _
    $region31: #{tpu_custom_call.1} parent=1 // pred_check_branch
      %5466 = sbr.rel (0) target = $region33
    $region32: #{tpu_custom_call.1} parent=1 // pred_region
      %5467 = dma.done [#allocation3], 1024
    $region33: #{tpu_custom_call.1} parent=1 // pred_fallthru
      _
    %5468 = vsyncpa [#allocation3], 1

</llo_original>
